<compile_context>
chip_gen: v6e
topology: v6e:2x2x1
jax: 0.10.0
libtpu: 0.0.40
codegen_flags: <defaults>
</compile_context>

<pallas_src>
import math
from functools import partial

import jax
import jax.numpy as jnp
from jax.experimental import pallas as pl
from jax.experimental.pallas import tpu as pltpu


# ---------------------------------------------------------------------------
# Interpolation helpers (plain JAX, evaluated at trace time inside jit).
# ---------------------------------------------------------------------------
def _interp_matrix(out_size, in_size):
    """1-D bilinear (align_corners=True) interpolation matrix (out_size, in_size)."""
    if out_size == 1:
        src = jnp.zeros((1,), jnp.float32)
    else:
        src = jnp.arange(out_size, dtype=jnp.float32) * ((in_size - 1) / (out_size - 1))
    lo = jnp.clip(jnp.floor(src).astype(jnp.int32), 0, in_size - 1)
    hi = jnp.minimum(lo + 1, in_size - 1)
    frac = src - lo.astype(jnp.float32)
    rows = jnp.arange(out_size)
    A = jnp.zeros((out_size, in_size), jnp.float32)
    A = A.at[rows, lo].add(1.0 - frac)
    A = A.at[rows, hi].add(frac)
    return A


def _shift_rows(M, d):
    """Row-shifted copy of M: result row i = M[i - d] (zero rows where OOB)."""
    if d == 0:
        return M
    z = jnp.zeros((abs(d), M.shape[1]), M.dtype)
    if d > 0:
        return jnp.concatenate([z, M[:-d]], axis=0)
    return jnp.concatenate([M[-d:], z], axis=0)


def _tap_resize_mats(H, W, Ho, Wo):
    """(H*W, 9*Ho*Wo).  Column block t = (ky, kx) is the operator mapping a
    flattened feature row (H*W,) to the align_corners-resized (Ho*Wo,) image of
    that feature shifted by (ky-1, kx-1) with zero padding, i.e. it fuses the
    3x3 tap extraction (incl. padding) with the bilinear resize."""
    AhT = _interp_matrix(Ho, H).T                      # (H, Ho)
    AwT = _interp_matrix(Wo, W).T                      # (W, Wo)
    mats = []
    for ky in range(3):
        for kx in range(3):
            Bh = _shift_rows(AhT, ky - 1)              # (H, Ho)
            Bw = _shift_rows(AwT, kx - 1)              # (W, Wo)
            mats.append(jnp.kron(Bh, Bw))              # (H*W, Ho*Wo)
    return jnp.concatenate(mats, axis=1)               # (H*W, 9*Ho*Wo)


# ---------------------------------------------------------------------------
# Fused Pallas kernel: ALL branches, one batch element per grid step.
# ---------------------------------------------------------------------------
def _make_kernel(num_branches, f_out, howo):
    def kernel(*refs):
        # refs layout: per branch [x, emb, w_taps, bs], then bias_total, out.
        #   x_ref   (1, C, H*W)        f32  NCHW feature map, spatial flattened on lanes
        #   emb_ref (1, C, 3)          f32  [:, :, 0]=gamma, 1=alpha, 2=beta
        #   w_ref   (9, Fo, C)         f32  conv3x3 weights per tap (ky*3+kx)
        #   bs_ref  (H*W, 9*Ho*Wo)     f32  fused shift+pad+resize operators
        #   bias_ref(Fo, 1)            f32  sum of per-branch conv biases
        #   out_ref (1, Fo, Ho*Wo)     f32  lane-dense output block
        bias_ref = refs[4 * num_branches]
        out_ref = refs[4 * num_branches + 1]

        acc = jnp.zeros((f_out, howo), jnp.float32)
        for b in range(num_branches):
            x_ref, emb_ref, w_ref, bs_ref = refs[4 * b:4 * b + 4]
            x = x_ref[0]                                        # (C, HW)
            c = x.shape[0]
            e = emb_ref[0]                                      # (C, 3)
            gamma = e[:, 0:1]
            alpha = e[:, 1:2]
            beta = e[:, 2:3]

            # ---- ConditionalInstanceNorm2dPlus (f32, VPU/XLU) ----------
            mu = jnp.mean(x, axis=1, keepdims=True)             # (C, 1) per-channel mean
            var = jnp.mean((x - mu) ** 2, axis=1, keepdims=True)  # biased variance
            h = (x - mu) * jax.lax.rsqrt(var + 1e-5)            # (C, HW)

            m = jnp.mean(mu, axis=0, keepdims=True)             # (1, 1) mean over channels
            v = jnp.sum((mu - m) ** 2, axis=0, keepdims=True) / (c - 1)   # unbiased
            means_n = (mu - m) * jax.lax.rsqrt(v + 1e-5)        # (C, 1)

            h = h + means_n * alpha
            h = gamma * h + beta                                # (C, HW)

            # ---- fused conv3x3 + zero-pad + bilinear resize (MXU) -------
            # g[:, t*HoWo:(t+1)*HoWo] = (tap-t shifted h, zero padded, resized)
            g = jnp.dot(h, bs_ref[...], preferred_element_type=jnp.float32)  # (C, 9*HoWo)
            for t in range(9):
                acc = acc + jnp.dot(w_ref[t], g[:, t * howo:(t + 1) * howo],
                                    preferred_element_type=jnp.float32)      # (Fo, HoWo)

        # Bias commutes with the resize (bilinear rows sum to 1), so the summed
        # per-branch biases are added once at the end.
        out_ref[0] = acc + bias_ref[...]
    return kernel


# ---------------------------------------------------------------------------
# Wrapper = CondMSFBlock.forward(xs, y, shape).  ONE pallas_call per forward.
# ---------------------------------------------------------------------------
@partial(jax.jit, static_argnums=(2,))
def cond_msf_block(xs, y, shape, params):
    N = xs[0].shape[0]
    Fo = params["w"][0].shape[-1]
    Ho, Wo = shape
    HoWo = Ho * Wo

    inputs, in_specs = [], []
    for i, x in enumerate(xs):
        C, H, W = x.shape[1], x.shape[2], x.shape[3]
        assert C >= 2, "cross-channel variance uses C - 1 (module assumes C >= 2)"
        HW = H * W
        x_flat = x.reshape(N, C, HW).astype(jnp.float32)        # free reshape of NCHW

        emb = params["embed"][i][y]                              # (N, 3C) gather
        emb3 = jnp.stack([emb[:, :C], emb[:, C:2 * C], emb[:, 2 * C:]], axis=-1)  # (N, C, 3)

        # HWIO (3,3,C,Fo) -> per-tap (9, Fo, C), tap index t = ky*3 + kx.
        w_taps = jnp.transpose(params["w"][i].reshape(9, C, Fo), (0, 2, 1))
        bs = _tap_resize_mats(H, W, Ho, Wo)                      # (HW, 9*HoWo)

        inputs += [x_flat, emb3, w_taps, bs]
        in_specs += [
            pl.BlockSpec((1, C, HW), lambda n: (n, 0, 0)),
            pl.BlockSpec((1, C, 3), lambda n: (n, 0, 0)),
            pl.BlockSpec((9, Fo, C), lambda n: (0, 0, 0)),       # resident (constant index)
            pl.BlockSpec((HW, 9 * HoWo), lambda n: (0, 0)),      # resident (constant index)
        ]

    bias_total = jnp.sum(jnp.stack(params["b"]), axis=0).reshape(Fo, 1)
    inputs.append(bias_total)
    in_specs.append(pl.BlockSpec((Fo, 1), lambda n: (0, 0)))

    out = pl.pallas_call(
        _make_kernel(len(xs), Fo, HoWo),
        out_shape=jax.ShapeDtypeStruct((N, Fo, HoWo), jnp.float32),
        grid=(N,),
        in_specs=in_specs,
        out_specs=pl.BlockSpec((1, Fo, HoWo), lambda n: (n, 0, 0)),
        compiler_params=pltpu.CompilerParams(
            dimension_semantics=("parallel",),
            vmem_limit_bytes=32 * 1024 * 1024),
    )(*inputs)

    return out.reshape(N, Fo, Ho, Wo)                            # free reshape back to NCHW


# ---------------------------------------------------------------------------
# Deterministic parameter init (mirrors nn.Conv2d default + embedding init).
# ---------------------------------------------------------------------------
def init_params(key, in_planes, features, num_classes):
    params = {"features": features, "w": [], "b": [], "embed": []}
    for c in in_planes:
        key, k1, k2, k3 = jax.random.split(key, 4)
        bound = 1.0 / math.sqrt(c * 9)
        params["w"].append(jax.random.uniform(k1, (3, 3, c, features),
                                              jnp.float32, -bound, bound))   # HWIO
        params["b"].append(jax.random.uniform(k2, (features,),
                                              jnp.float32, -bound, bound))
        emb_sb = 1.0 + 0.02 * jax.random.normal(k3, (num_classes, 2 * c), jnp.float32)
        params["embed"].append(
            jnp.concatenate([emb_sb, jnp.zeros((num_classes, c), jnp.float32)], axis=1))
    return params


# ---------------------------------------------------------------------------
# Pure-JAX f32 reference (module semantics) for a correctness check.
# ---------------------------------------------------------------------------
def _reference(xs, y, shape, params):
    N = xs[0].shape[0]
    Ho, Wo = shape
    Fo = params["features"]
    out = jnp.zeros((N, Fo, Ho, Wo), jnp.float32)
    for i, x in enumerate(xs):
        C = x.shape[1]
        emb = params["embed"][i][y]
        gamma, alpha, beta = emb[:, :C], emb[:, C:2 * C], emb[:, 2 * C:]
        mu = jnp.mean(x, axis=(2, 3))
        var = jnp.mean((x - mu[:, :, None, None]) ** 2, axis=(2, 3))
        h = (x - mu[:, :, None, None]) / jnp.sqrt(var[:, :, None, None] + 1e-5)
        m = jnp.mean(mu, axis=-1, keepdims=True)
        v = jnp.sum((mu - m) ** 2, axis=-1, keepdims=True) / (C - 1)
        mn = (mu - m) / jnp.sqrt(v + 1e-5)
        h = h + mn[:, :, None, None] * alpha[:, :, None, None]
        h = gamma[:, :, None, None] * h + beta[:, :, None, None]
        conv = jax.lax.conv_general_dilated(
            h, params["w"][i], window_strides=(1, 1), padding=((1, 1), (1, 1)),
            dimension_numbers=("NCHW", "HWIO", "NCHW"),
            precision=jax.lax.Precision.HIGHEST)
        conv = conv + params["b"][i][None, :, None, None]
        A_h = _interp_matrix(Ho, x.shape[2])
        A_w = _interp_matrix(Wo, x.shape[3])
        out = out + jnp.einsum("ph,nchw,qw->ncpq", A_h, conv, A_w,
                               precision=jax.lax.Precision.HIGHEST)
    return out


if __name__ == "__main__":
    key = jax.random.PRNGKey(0)
    in_planes = (4, 8)          # two branches with different channel counts
    features = 8
    num_classes = 10
    N = 2
    shape = (16, 16)            # target spatial shape

    kx0, kx1, ky_, kp = jax.random.split(key, 4)
    xs = [jax.random.normal(kx0, (N, 4, 16, 16), jnp.float32),
          jax.random.normal(kx1, (N, 8, 8, 8), jnp.float32)]
    y = jax.random.randint(ky_, (N,), 0, num_classes)
    params = init_params(kp, in_planes, features, num_classes)

    out = cond_msf_block(xs, y, shape, params)
    out = jax.block_until_ready(out)

    ref = _reference(xs, y, shape, params)
    assert out.shape == (N, features, shape[0], shape[1]), out.shape
    err = float(jnp.max(jnp.abs(out - ref)))
    # All operands are f32 now; tolerance leaves margin for MXU rounding-mode
    # differences but observed error is far smaller.
    assert err < 2e-2, f"max abs error too large: {err}"
    print("KERNEL_OK")
</pallas_src>

<mosaic_0001>
module attributes {stable_mosaic.version = 11 : i64} {
  func.func private @main(%arg0: i32) attributes {dimension_semantics = [#tpu.dimension_semantics<core_parallel>], iteration_bounds = array<i64: 2>, tpu.core_type = #tpu.core_type<sc_scalar_subcore>, window_params = []} {
    return
  }
}

module attributes {stable_mosaic.version = 11 : i64} {
  func.func private @main(%arg0: i32) attributes {dimension_semantics = [#tpu.dimension_semantics<core_parallel>], iteration_bounds = array<i64: 2>, tpu.core_type = #tpu.core_type<sc_scalar_subcore>, window_params = []} {
    return
  }
}

module attributes {stable_mosaic.version = 11 : i64} {
  func.func @kernel(%arg0: i32, %arg1: memref<1x4x256xf32, #tpu.memory_space<vmem>>, %arg2: memref<1x4x3xf32, #tpu.memory_space<vmem>>, %arg3: memref<9x8x4xf32, #tpu.memory_space<vmem>>, %arg4: memref<256x2304xf32, #tpu.memory_space<vmem>>, %arg5: memref<1x8x64xf32, #tpu.memory_space<vmem>>, %arg6: memref<1x8x3xf32, #tpu.memory_space<vmem>>, %arg7: memref<9x8x8xf32, #tpu.memory_space<vmem>>, %arg8: memref<64x2304xf32, #tpu.memory_space<vmem>>, %arg9: memref<8x1xf32, #tpu.memory_space<vmem>>, %arg10: memref<1x8x256xf32, #tpu.memory_space<vmem>>) attributes {dimension_semantics = [#tpu.dimension_semantics<parallel>], iteration_bounds = array<i64: 2>, scalar_prefetch = 0 : i64, scratch_operands = 0 : i64, tpu.core_type = #tpu.core_type<tc>, window_params = [{transform_indices = @transform_0, window_bounds = array<i64: 1, 4, 256>}, {transform_indices = @transform_1, window_bounds = array<i64: 1, 4, 3>}, {pipeline_mode = #tpu.pipeline_mode<synchronous>, transform_indices = @transform_2, window_bounds = array<i64: 9, 8, 4>}, {pipeline_mode = #tpu.pipeline_mode<synchronous>, transform_indices = @transform_3, window_bounds = array<i64: 256, 2304>}, {transform_indices = @transform_4, window_bounds = array<i64: 1, 8, 64>}, {transform_indices = @transform_5, window_bounds = array<i64: 1, 8, 3>}, {pipeline_mode = #tpu.pipeline_mode<synchronous>, transform_indices = @transform_6, window_bounds = array<i64: 9, 8, 8>}, {pipeline_mode = #tpu.pipeline_mode<synchronous>, transform_indices = @transform_7, window_bounds = array<i64: 64, 2304>}, {pipeline_mode = #tpu.pipeline_mode<synchronous>, transform_indices = @transform_8, window_bounds = array<i64: 8, 1>}, {transform_indices = @transform_9, window_bounds = array<i64: 1, 8, 256>}]} {
    %cst = arith.constant 0.000000e+00 : f32
    %0 = vector.broadcast %cst : f32 to vector<8x256xf32>
    %c0 = arith.constant 0 : index
    %c0_0 = arith.constant 0 : index
    %c0_1 = arith.constant 0 : index
    %1 = vector.load %arg1[%c0, %c0_0, %c0_1] : memref<1x4x256xf32, #tpu.memory_space<vmem>>, vector<1x4x256xf32>
    %2 = vector.shape_cast %1 : vector<1x4x256xf32> to vector<4x256xf32>
    %c0_2 = arith.constant 0 : index
    %c0_3 = arith.constant 0 : index
    %c0_4 = arith.constant 0 : index
    %3 = vector.load %arg2[%c0_2, %c0_3, %c0_4] : memref<1x4x3xf32, #tpu.memory_space<vmem>>, vector<1x4x3xf32>
    %4 = vector.shape_cast %3 : vector<1x4x3xf32> to vector<4x3xf32>
    %5 = vector.extract_strided_slice %4 {offsets = [0, 0], sizes = [4, 1], strides = [1, 1]} : vector<4x3xf32> to vector<4x1xf32>
    %6 = vector.extract_strided_slice %4 {offsets = [0, 1], sizes = [4, 1], strides = [1, 1]} : vector<4x3xf32> to vector<4x1xf32>
    %7 = vector.extract_strided_slice %4 {offsets = [0, 2], sizes = [4, 1], strides = [1, 1]} : vector<4x3xf32> to vector<4x1xf32>
    %cst_5 = arith.constant dense<0.000000e+00> : vector<4xf32>
    %8 = vector.multi_reduction <add>, %2, %cst_5 [1] : vector<4x256xf32> to vector<4xf32>
    %9 = vector.shape_cast %8 : vector<4xf32> to vector<4x1xf32>
    %cst_6 = arith.constant 2.560000e+02 : f32
    %10 = vector.broadcast %cst_6 : f32 to vector<4x1xf32>
    %11 = arith.divf %9, %10 : vector<4x1xf32>
    %12 = vector.broadcast %11 : vector<4x1xf32> to vector<4x256xf32>
    %13 = arith.subf %2, %12 : vector<4x256xf32>
    %14 = arith.mulf %13, %13 : vector<4x256xf32>
    %cst_7 = arith.constant dense<0.000000e+00> : vector<4xf32>
    %15 = vector.multi_reduction <add>, %14, %cst_7 [1] : vector<4x256xf32> to vector<4xf32>
    %16 = vector.shape_cast %15 : vector<4xf32> to vector<4x1xf32>
    %cst_8 = arith.constant 2.560000e+02 : f32
    %17 = vector.broadcast %cst_8 : f32 to vector<4x1xf32>
    %18 = arith.divf %16, %17 : vector<4x1xf32>
    %19 = vector.broadcast %11 : vector<4x1xf32> to vector<4x256xf32>
    %20 = arith.subf %2, %19 : vector<4x256xf32>
    %cst_9 = arith.constant 9.99999974E-6 : f32
    %21 = vector.broadcast %cst_9 : f32 to vector<4x1xf32>
    %22 = arith.addf %18, %21 : vector<4x1xf32>
    %23 = math.rsqrt %22 : vector<4x1xf32>
    %24 = vector.broadcast %23 : vector<4x1xf32> to vector<4x256xf32>
    %25 = arith.mulf %20, %24 : vector<4x256xf32>
    %cst_10 = arith.constant dense<0.000000e+00> : vector<1xf32>
    %26 = vector.multi_reduction <add>, %11, %cst_10 [0] : vector<4x1xf32> to vector<1xf32>
    %27 = vector.shape_cast %26 : vector<1xf32> to vector<1x1xf32>
    %cst_11 = arith.constant 4.000000e+00 : f32
    %28 = vector.broadcast %cst_11 : f32 to vector<1x1xf32>
    %29 = arith.divf %27, %28 : vector<1x1xf32>
    %30 = vector.broadcast %29 : vector<1x1xf32> to vector<4x1xf32>
    %31 = arith.subf %11, %30 : vector<4x1xf32>
    %32 = arith.mulf %31, %31 : vector<4x1xf32>
    %cst_12 = arith.constant dense<0.000000e+00> : vector<1xf32>
    %33 = vector.multi_reduction <add>, %32, %cst_12 [0] : vector<4x1xf32> to vector<1xf32>
    %34 = vector.shape_cast %33 : vector<1xf32> to vector<1x1xf32>
    %cst_13 = arith.constant 3.000000e+00 : f32
    %35 = vector.broadcast %cst_13 : f32 to vector<1x1xf32>
    %36 = arith.divf %34, %35 : vector<1x1xf32>
    %37 = vector.broadcast %29 : vector<1x1xf32> to vector<4x1xf32>
    %38 = arith.subf %11, %37 : vector<4x1xf32>
    %cst_14 = arith.constant 9.99999974E-6 : f32
    %39 = vector.broadcast %cst_14 : f32 to vector<1x1xf32>
    %40 = arith.addf %36, %39 : vector<1x1xf32>
    %41 = math.rsqrt %40 : vector<1x1xf32>
    %42 = vector.broadcast %41 : vector<1x1xf32> to vector<4x1xf32>
    %43 = arith.mulf %38, %42 : vector<4x1xf32>
    %44 = arith.mulf %43, %6 : vector<4x1xf32>
    %45 = vector.broadcast %44 : vector<4x1xf32> to vector<4x256xf32>
    %46 = arith.addf %25, %45 : vector<4x256xf32>
    %47 = vector.broadcast %5 : vector<4x1xf32> to vector<4x256xf32>
    %48 = arith.mulf %47, %46 : vector<4x256xf32>
    %49 = vector.broadcast %7 : vector<4x1xf32> to vector<4x256xf32>
    %50 = arith.addf %48, %49 : vector<4x256xf32>
    %c0_15 = arith.constant 0 : index
    %c0_16 = arith.constant 0 : index
    %51 = vector.load %arg4[%c0_15, %c0_16] : memref<256x2304xf32, #tpu.memory_space<vmem>>, vector<256x2304xf32>
    %cst_17 = arith.constant dense<0.000000e+00> : vector<4x2304xf32>
    %52 = tpu.matmul %50, %51, %cst_17 {dimension_numbers = #tpu.dot_dimension_numbers<[1], [0], [0], [1], [0, 0, 1, 1], [], []>} : vector<4x256xf32>, vector<256x2304xf32>, vector<4x2304xf32> -> vector<4x2304xf32>
    %c0_18 = arith.constant 0 : index
    %c0_19 = arith.constant 0 : index
    %c0_20 = arith.constant 0 : index
    %53 = vector.load %arg3[%c0_18, %c0_19, %c0_20] : memref<9x8x4xf32, #tpu.memory_space<vmem>>, vector<1x8x4xf32>
    %54 = vector.shape_cast %53 : vector<1x8x4xf32> to vector<8x4xf32>
    %55 = vector.extract_strided_slice %52 {offsets = [0, 0], sizes = [4, 256], strides = [1, 1]} : vector<4x2304xf32> to vector<4x256xf32>
    %cst_21 = arith.constant dense<0.000000e+00> : vector<8x256xf32>
    %56 = tpu.matmul %54, %55, %cst_21 {dimension_numbers = #tpu.dot_dimension_numbers<[1], [0], [0], [1], [0, 0, 1, 1], [], []>} : vector<8x4xf32>, vector<4x256xf32>, vector<8x256xf32> -> vector<8x256xf32>
    %57 = arith.addf %0, %56 : vector<8x256xf32>
    %c1 = arith.constant 1 : index
    %c0_22 = arith.constant 0 : index
    %c0_23 = arith.constant 0 : index
    %58 = vector.load %arg3[%c1, %c0_22, %c0_23] : memref<9x8x4xf32, #tpu.memory_space<vmem>>, vector<1x8x4xf32>
    %59 = vector.shape_cast %58 : vector<1x8x4xf32> to vector<8x4xf32>
    %60 = vector.extract_strided_slice %52 {offsets = [0, 256], sizes = [4, 256], strides = [1, 1]} : vector<4x2304xf32> to vector<4x256xf32>
    %cst_24 = arith.constant dense<0.000000e+00> : vector<8x256xf32>
    %61 = tpu.matmul %59, %60, %cst_24 {dimension_numbers = #tpu.dot_dimension_numbers<[1], [0], [0], [1], [0, 0, 1, 1], [], []>} : vector<8x4xf32>, vector<4x256xf32>, vector<8x256xf32> -> vector<8x256xf32>
    %62 = arith.addf %57, %61 : vector<8x256xf32>
    %c2 = arith.constant 2 : index
    %c0_25 = arith.constant 0 : index
    %c0_26 = arith.constant 0 : index
    %63 = vector.load %arg3[%c2, %c0_25, %c0_26] : memref<9x8x4xf32, #tpu.memory_space<vmem>>, vector<1x8x4xf32>
    %64 = vector.shape_cast %63 : vector<1x8x4xf32> to vector<8x4xf32>
    %65 = vector.extract_strided_slice %52 {offsets = [0, 512], sizes = [4, 256], strides = [1, 1]} : vector<4x2304xf32> to vector<4x256xf32>
    %cst_27 = arith.constant dense<0.000000e+00> : vector<8x256xf32>
    %66 = tpu.matmul %64, %65, %cst_27 {dimension_numbers = #tpu.dot_dimension_numbers<[1], [0], [0], [1], [0, 0, 1, 1], [], []>} : vector<8x4xf32>, vector<4x256xf32>, vector<8x256xf32> -> vector<8x256xf32>
    %67 = arith.addf %62, %66 : vector<8x256xf32>
    %c3 = arith.constant 3 : index
    %c0_28 = arith.constant 0 : index
    %c0_29 = arith.constant 0 : index
    %68 = vector.load %arg3[%c3, %c0_28, %c0_29] : memref<9x8x4xf32, #tpu.memory_space<vmem>>, vector<1x8x4xf32>
    %69 = vector.shape_cast %68 : vector<1x8x4xf32> to vector<8x4xf32>
    %70 = vector.extract_strided_slice %52 {offsets = [0, 768], sizes = [4, 256], strides = [1, 1]} : vector<4x2304xf32> to vector<4x256xf32>
    %cst_30 = arith.constant dense<0.000000e+00> : vector<8x256xf32>
    %71 = tpu.matmul %69, %70, %cst_30 {dimension_numbers = #tpu.dot_dimension_numbers<[1], [0], [0], [1], [0, 0, 1, 1], [], []>} : vector<8x4xf32>, vector<4x256xf32>, vector<8x256xf32> -> vector<8x256xf32>
    %72 = arith.addf %67, %71 : vector<8x256xf32>
    %c4 = arith.constant 4 : index
    %c0_31 = arith.constant 0 : index
    %c0_32 = arith.constant 0 : index
    %73 = vector.load %arg3[%c4, %c0_31, %c0_32] : memref<9x8x4xf32, #tpu.memory_space<vmem>>, vector<1x8x4xf32>
    %74 = vector.shape_cast %73 : vector<1x8x4xf32> to vector<8x4xf32>
    %75 = vector.extract_strided_slice %52 {offsets = [0, 1024], sizes = [4, 256], strides = [1, 1]} : vector<4x2304xf32> to vector<4x256xf32>
    %cst_33 = arith.constant dense<0.000000e+00> : vector<8x256xf32>
    %76 = tpu.matmul %74, %75, %cst_33 {dimension_numbers = #tpu.dot_dimension_numbers<[1], [0], [0], [1], [0, 0, 1, 1], [], []>} : vector<8x4xf32>, vector<4x256xf32>, vector<8x256xf32> -> vector<8x256xf32>
    %77 = arith.addf %72, %76 : vector<8x256xf32>
    %c5 = arith.constant 5 : index
    %c0_34 = arith.constant 0 : index
    %c0_35 = arith.constant 0 : index
    %78 = vector.load %arg3[%c5, %c0_34, %c0_35] : memref<9x8x4xf32, #tpu.memory_space<vmem>>, vector<1x8x4xf32>
    %79 = vector.shape_cast %78 : vector<1x8x4xf32> to vector<8x4xf32>
    %80 = vector.extract_strided_slice %52 {offsets = [0, 1280], sizes = [4, 256], strides = [1, 1]} : vector<4x2304xf32> to vector<4x256xf32>
    %cst_36 = arith.constant dense<0.000000e+00> : vector<8x256xf32>
    %81 = tpu.matmul %79, %80, %cst_36 {dimension_numbers = #tpu.dot_dimension_numbers<[1], [0], [0], [1], [0, 0, 1, 1], [], []>} : vector<8x4xf32>, vector<4x256xf32>, vector<8x256xf32> -> vector<8x256xf32>
    %82 = arith.addf %77, %81 : vector<8x256xf32>
    %c6 = arith.constant 6 : index
    %c0_37 = arith.constant 0 : index
    %c0_38 = arith.constant 0 : index
    %83 = vector.load %arg3[%c6, %c0_37, %c0_38] : memref<9x8x4xf32, #tpu.memory_space<vmem>>, vector<1x8x4xf32>
    %84 = vector.shape_cast %83 : vector<1x8x4xf32> to vector<8x4xf32>
    %85 = vector.extract_strided_slice %52 {offsets = [0, 1536], sizes = [4, 256], strides = [1, 1]} : vector<4x2304xf32> to vector<4x256xf32>
    %cst_39 = arith.constant dense<0.000000e+00> : vector<8x256xf32>
    %86 = tpu.matmul %84, %85, %cst_39 {dimension_numbers = #tpu.dot_dimension_numbers<[1], [0], [0], [1], [0, 0, 1, 1], [], []>} : vector<8x4xf32>, vector<4x256xf32>, vector<8x256xf32> -> vector<8x256xf32>
    %87 = arith.addf %82, %86 : vector<8x256xf32>
    %c7 = arith.constant 7 : index
    %c0_40 = arith.constant 0 : index
    %c0_41 = arith.constant 0 : index
    %88 = vector.load %arg3[%c7, %c0_40, %c0_41] : memref<9x8x4xf32, #tpu.memory_space<vmem>>, vector<1x8x4xf32>
    %89 = vector.shape_cast %88 : vector<1x8x4xf32> to vector<8x4xf32>
    %90 = vector.extract_strided_slice %52 {offsets = [0, 1792], sizes = [4, 256], strides = [1, 1]} : vector<4x2304xf32> to vector<4x256xf32>
    %cst_42 = arith.constant dense<0.000000e+00> : vector<8x256xf32>
    %91 = tpu.matmul %89, %90, %cst_42 {dimension_numbers = #tpu.dot_dimension_numbers<[1], [0], [0], [1], [0, 0, 1, 1], [], []>} : vector<8x4xf32>, vector<4x256xf32>, vector<8x256xf32> -> vector<8x256xf32>
    %92 = arith.addf %87, %91 : vector<8x256xf32>
    %c8 = arith.constant 8 : index
    %c0_43 = arith.constant 0 : index
    %c0_44 = arith.constant 0 : index
    %93 = vector.load %arg3[%c8, %c0_43, %c0_44] : memref<9x8x4xf32, #tpu.memory_space<vmem>>, vector<1x8x4xf32>
    %94 = vector.shape_cast %93 : vector<1x8x4xf32> to vector<8x4xf32>
    %95 = vector.extract_strided_slice %52 {offsets = [0, 2048], sizes = [4, 256], strides = [1, 1]} : vector<4x2304xf32> to vector<4x256xf32>
    %cst_45 = arith.constant dense<0.000000e+00> : vector<8x256xf32>
    %96 = tpu.matmul %94, %95, %cst_45 {dimension_numbers = #tpu.dot_dimension_numbers<[1], [0], [0], [1], [0, 0, 1, 1], [], []>} : vector<8x4xf32>, vector<4x256xf32>, vector<8x256xf32> -> vector<8x256xf32>
    %97 = arith.addf %92, %96 : vector<8x256xf32>
    %c0_46 = arith.constant 0 : index
    %c0_47 = arith.constant 0 : index
    %c0_48 = arith.constant 0 : index
    %98 = vector.load %arg5[%c0_46, %c0_47, %c0_48] : memref<1x8x64xf32, #tpu.memory_space<vmem>>, vector<1x8x64xf32>
    %99 = vector.shape_cast %98 : vector<1x8x64xf32> to vector<8x64xf32>
    %c0_49 = arith.constant 0 : index
    %c0_50 = arith.constant 0 : index
    %c0_51 = arith.constant 0 : index
    %100 = vector.load %arg6[%c0_49, %c0_50, %c0_51] : memref<1x8x3xf32, #tpu.memory_space<vmem>>, vector<1x8x3xf32>
    %101 = vector.shape_cast %100 : vector<1x8x3xf32> to vector<8x3xf32>
    %102 = vector.extract_strided_slice %101 {offsets = [0, 0], sizes = [8, 1], strides = [1, 1]} : vector<8x3xf32> to vector<8x1xf32>
    %103 = vector.extract_strided_slice %101 {offsets = [0, 1], sizes = [8, 1], strides = [1, 1]} : vector<8x3xf32> to vector<8x1xf32>
    %104 = vector.extract_strided_slice %101 {offsets = [0, 2], sizes = [8, 1], strides = [1, 1]} : vector<8x3xf32> to vector<8x1xf32>
    %cst_52 = arith.constant dense<0.000000e+00> : vector<8xf32>
    %105 = vector.multi_reduction <add>, %99, %cst_52 [1] : vector<8x64xf32> to vector<8xf32>
    %106 = vector.shape_cast %105 : vector<8xf32> to vector<8x1xf32>
    %cst_53 = arith.constant 6.400000e+01 : f32
    %107 = vector.broadcast %cst_53 : f32 to vector<8x1xf32>
    %108 = arith.divf %106, %107 : vector<8x1xf32>
    %109 = vector.broadcast %108 : vector<8x1xf32> to vector<8x64xf32>
    %110 = arith.subf %99, %109 : vector<8x64xf32>
    %111 = arith.mulf %110, %110 : vector<8x64xf32>
    %cst_54 = arith.constant dense<0.000000e+00> : vector<8xf32>
    %112 = vector.multi_reduction <add>, %111, %cst_54 [1] : vector<8x64xf32> to vector<8xf32>
    %113 = vector.shape_cast %112 : vector<8xf32> to vector<8x1xf32>
    %cst_55 = arith.constant 6.400000e+01 : f32
    %114 = vector.broadcast %cst_55 : f32 to vector<8x1xf32>
    %115 = arith.divf %113, %114 : vector<8x1xf32>
    %116 = vector.broadcast %108 : vector<8x1xf32> to vector<8x64xf32>
    %117 = arith.subf %99, %116 : vector<8x64xf32>
    %cst_56 = arith.constant 9.99999974E-6 : f32
    %118 = vector.broadcast %cst_56 : f32 to vector<8x1xf32>
    %119 = arith.addf %115, %118 : vector<8x1xf32>
    %120 = math.rsqrt %119 : vector<8x1xf32>
    %121 = vector.broadcast %120 : vector<8x1xf32> to vector<8x64xf32>
    %122 = arith.mulf %117, %121 : vector<8x64xf32>
    %cst_57 = arith.constant dense<0.000000e+00> : vector<1xf32>
    %123 = vector.multi_reduction <add>, %108, %cst_57 [0] : vector<8x1xf32> to vector<1xf32>
    %124 = vector.shape_cast %123 : vector<1xf32> to vector<1x1xf32>
    %cst_58 = arith.constant 8.000000e+00 : f32
    %125 = vector.broadcast %cst_58 : f32 to vector<1x1xf32>
    %126 = arith.divf %124, %125 : vector<1x1xf32>
    %127 = vector.broadcast %126 : vector<1x1xf32> to vector<8x1xf32>
    %128 = arith.subf %108, %127 : vector<8x1xf32>
    %129 = arith.mulf %128, %128 : vector<8x1xf32>
    %cst_59 = arith.constant dense<0.000000e+00> : vector<1xf32>
    %130 = vector.multi_reduction <add>, %129, %cst_59 [0] : vector<8x1xf32> to vector<1xf32>
    %131 = vector.shape_cast %130 : vector<1xf32> to vector<1x1xf32>
    %cst_60 = arith.constant 7.000000e+00 : f32
    %132 = vector.broadcast %cst_60 : f32 to vector<1x1xf32>
    %133 = arith.divf %131, %132 : vector<1x1xf32>
    %134 = vector.broadcast %126 : vector<1x1xf32> to vector<8x1xf32>
    %135 = arith.subf %108, %134 : vector<8x1xf32>
    %cst_61 = arith.constant 9.99999974E-6 : f32
    %136 = vector.broadcast %cst_61 : f32 to vector<1x1xf32>
    %137 = arith.addf %133, %136 : vector<1x1xf32>
    %138 = math.rsqrt %137 : vector<1x1xf32>
    %139 = vector.broadcast %138 : vector<1x1xf32> to vector<8x1xf32>
    %140 = arith.mulf %135, %139 : vector<8x1xf32>
    %141 = arith.mulf %140, %103 : vector<8x1xf32>
    %142 = vector.broadcast %141 : vector<8x1xf32> to vector<8x64xf32>
    %143 = arith.addf %122, %142 : vector<8x64xf32>
    %144 = vector.broadcast %102 : vector<8x1xf32> to vector<8x64xf32>
    %145 = arith.mulf %144, %143 : vector<8x64xf32>
    %146 = vector.broadcast %104 : vector<8x1xf32> to vector<8x64xf32>
    %147 = arith.addf %145, %146 : vector<8x64xf32>
    %c0_62 = arith.constant 0 : index
    %c0_63 = arith.constant 0 : index
    %148 = vector.load %arg8[%c0_62, %c0_63] : memref<64x2304xf32, #tpu.memory_space<vmem>>, vector<64x2304xf32>
    %cst_64 = arith.constant dense<0.000000e+00> : vector<8x2304xf32>
    %149 = tpu.matmul %147, %148, %cst_64 {dimension_numbers = #tpu.dot_dimension_numbers<[1], [0], [0], [1], [0, 0, 1, 1], [], []>} : vector<8x64xf32>, vector<64x2304xf32>, vector<8x2304xf32> -> vector<8x2304xf32>
    %c0_65 = arith.constant 0 : index
    %c0_66 = arith.constant 0 : index
    %c0_67 = arith.constant 0 : index
    %150 = vector.load %arg7[%c0_65, %c0_66, %c0_67] : memref<9x8x8xf32, #tpu.memory_space<vmem>>, vector<1x8x8xf32>
    %151 = vector.shape_cast %150 : vector<1x8x8xf32> to vector<8x8xf32>
    %152 = vector.extract_strided_slice %149 {offsets = [0, 0], sizes = [8, 256], strides = [1, 1]} : vector<8x2304xf32> to vector<8x256xf32>
    %cst_68 = arith.constant dense<0.000000e+00> : vector<8x256xf32>
    %153 = tpu.matmul %151, %152, %cst_68 {dimension_numbers = #tpu.dot_dimension_numbers<[1], [0], [0], [1], [0, 0, 1, 1], [], []>} : vector<8x8xf32>, vector<8x256xf32>, vector<8x256xf32> -> vector<8x256xf32>
    %154 = arith.addf %97, %153 : vector<8x256xf32>
    %c1_69 = arith.constant 1 : index
    %c0_70 = arith.constant 0 : index
    %c0_71 = arith.constant 0 : index
    %155 = vector.load %arg7[%c1_69, %c0_70, %c0_71] : memref<9x8x8xf32, #tpu.memory_space<vmem>>, vector<1x8x8xf32>
    %156 = vector.shape_cast %155 : vector<1x8x8xf32> to vector<8x8xf32>
    %157 = vector.extract_strided_slice %149 {offsets = [0, 256], sizes = [8, 256], strides = [1, 1]} : vector<8x2304xf32> to vector<8x256xf32>
    %cst_72 = arith.constant dense<0.000000e+00> : vector<8x256xf32>
    %158 = tpu.matmul %156, %157, %cst_72 {dimension_numbers = #tpu.dot_dimension_numbers<[1], [0], [0], [1], [0, 0, 1, 1], [], []>} : vector<8x8xf32>, vector<8x256xf32>, vector<8x256xf32> -> vector<8x256xf32>
    %159 = arith.addf %154, %158 : vector<8x256xf32>
    %c2_73 = arith.constant 2 : index
    %c0_74 = arith.constant 0 : index
    %c0_75 = arith.constant 0 : index
    %160 = vector.load %arg7[%c2_73, %c0_74, %c0_75] : memref<9x8x8xf32, #tpu.memory_space<vmem>>, vector<1x8x8xf32>
    %161 = vector.shape_cast %160 : vector<1x8x8xf32> to vector<8x8xf32>
    %162 = vector.extract_strided_slice %149 {offsets = [0, 512], sizes = [8, 256], strides = [1, 1]} : vector<8x2304xf32> to vector<8x256xf32>
    %cst_76 = arith.constant dense<0.000000e+00> : vector<8x256xf32>
    %163 = tpu.matmul %161, %162, %cst_76 {dimension_numbers = #tpu.dot_dimension_numbers<[1], [0], [0], [1], [0, 0, 1, 1], [], []>} : vector<8x8xf32>, vector<8x256xf32>, vector<8x256xf32> -> vector<8x256xf32>
    %164 = arith.addf %159, %163 : vector<8x256xf32>
    %c3_77 = arith.constant 3 : index
    %c0_78 = arith.constant 0 : index
    %c0_79 = arith.constant 0 : index
    %165 = vector.load %arg7[%c3_77, %c0_78, %c0_79] : memref<9x8x8xf32, #tpu.memory_space<vmem>>, vector<1x8x8xf32>
    %166 = vector.shape_cast %165 : vector<1x8x8xf32> to vector<8x8xf32>
    %167 = vector.extract_strided_slice %149 {offsets = [0, 768], sizes = [8, 256], strides = [1, 1]} : vector<8x2304xf32> to vector<8x256xf32>
    %cst_80 = arith.constant dense<0.000000e+00> : vector<8x256xf32>
    %168 = tpu.matmul %166, %167, %cst_80 {dimension_numbers = #tpu.dot_dimension_numbers<[1], [0], [0], [1], [0, 0, 1, 1], [], []>} : vector<8x8xf32>, vector<8x256xf32>, vector<8x256xf32> -> vector<8x256xf32>
    %169 = arith.addf %164, %168 : vector<8x256xf32>
    %c4_81 = arith.constant 4 : index
    %c0_82 = arith.constant 0 : index
    %c0_83 = arith.constant 0 : index
    %170 = vector.load %arg7[%c4_81, %c0_82, %c0_83] : memref<9x8x8xf32, #tpu.memory_space<vmem>>, vector<1x8x8xf32>
    %171 = vector.shape_cast %170 : vector<1x8x8xf32> to vector<8x8xf32>
    %172 = vector.extract_strided_slice %149 {offsets = [0, 1024], sizes = [8, 256], strides = [1, 1]} : vector<8x2304xf32> to vector<8x256xf32>
    %cst_84 = arith.constant dense<0.000000e+00> : vector<8x256xf32>
    %173 = tpu.matmul %171, %172, %cst_84 {dimension_numbers = #tpu.dot_dimension_numbers<[1], [0], [0], [1], [0, 0, 1, 1], [], []>} : vector<8x8xf32>, vector<8x256xf32>, vector<8x256xf32> -> vector<8x256xf32>
    %174 = arith.addf %169, %173 : vector<8x256xf32>
    %c5_85 = arith.constant 5 : index
    %c0_86 = arith.constant 0 : index
    %c0_87 = arith.constant 0 : index
    %175 = vector.load %arg7[%c5_85, %c0_86, %c0_87] : memref<9x8x8xf32, #tpu.memory_space<vmem>>, vector<1x8x8xf32>
    %176 = vector.shape_cast %175 : vector<1x8x8xf32> to vector<8x8xf32>
    %177 = vector.extract_strided_slice %149 {offsets = [0, 1280], sizes = [8, 256], strides = [1, 1]} : vector<8x2304xf32> to vector<8x256xf32>
    %cst_88 = arith.constant dense<0.000000e+00> : vector<8x256xf32>
    %178 = tpu.matmul %176, %177, %cst_88 {dimension_numbers = #tpu.dot_dimension_numbers<[1], [0], [0], [1], [0, 0, 1, 1], [], []>} : vector<8x8xf32>, vector<8x256xf32>, vector<8x256xf32> -> vector<8x256xf32>
    %179 = arith.addf %174, %178 : vector<8x256xf32>
    %c6_89 = arith.constant 6 : index
    %c0_90 = arith.constant 0 : index
    %c0_91 = arith.constant 0 : index
    %180 = vector.load %arg7[%c6_89, %c0_90, %c0_91] : memref<9x8x8xf32, #tpu.memory_space<vmem>>, vector<1x8x8xf32>
    %181 = vector.shape_cast %180 : vector<1x8x8xf32> to vector<8x8xf32>
    %182 = vector.extract_strided_slice %149 {offsets = [0, 1536], sizes = [8, 256], strides = [1, 1]} : vector<8x2304xf32> to vector<8x256xf32>
    %cst_92 = arith.constant dense<0.000000e+00> : vector<8x256xf32>
    %183 = tpu.matmul %181, %182, %cst_92 {dimension_numbers = #tpu.dot_dimension_numbers<[1], [0], [0], [1], [0, 0, 1, 1], [], []>} : vector<8x8xf32>, vector<8x256xf32>, vector<8x256xf32> -> vector<8x256xf32>
    %184 = arith.addf %179, %183 : vector<8x256xf32>
    %c7_93 = arith.constant 7 : index
    %c0_94 = arith.constant 0 : index
    %c0_95 = arith.constant 0 : index
    %185 = vector.load %arg7[%c7_93, %c0_94, %c0_95] : memref<9x8x8xf32, #tpu.memory_space<vmem>>, vector<1x8x8xf32>
    %186 = vector.shape_cast %185 : vector<1x8x8xf32> to vector<8x8xf32>
    %187 = vector.extract_strided_slice %149 {offsets = [0, 1792], sizes = [8, 256], strides = [1, 1]} : vector<8x2304xf32> to vector<8x256xf32>
    %cst_96 = arith.constant dense<0.000000e+00> : vector<8x256xf32>
    %188 = tpu.matmul %186, %187, %cst_96 {dimension_numbers = #tpu.dot_dimension_numbers<[1], [0], [0], [1], [0, 0, 1, 1], [], []>} : vector<8x8xf32>, vector<8x256xf32>, vector<8x256xf32> -> vector<8x256xf32>
    %189 = arith.addf %184, %188 : vector<8x256xf32>
    %c8_97 = arith.constant 8 : index
    %c0_98 = arith.constant 0 : index
    %c0_99 = arith.constant 0 : index
    %190 = vector.load %arg7[%c8_97, %c0_98, %c0_99] : memref<9x8x8xf32, #tpu.memory_space<vmem>>, vector<1x8x8xf32>
    %191 = vector.shape_cast %190 : vector<1x8x8xf32> to vector<8x8xf32>
    %192 = vector.extract_strided_slice %149 {offsets = [0, 2048], sizes = [8, 256], strides = [1, 1]} : vector<8x2304xf32> to vector<8x256xf32>
    %cst_100 = arith.constant dense<0.000000e+00> : vector<8x256xf32>
    %193 = tpu.matmul %191, %192, %cst_100 {dimension_numbers = #tpu.dot_dimension_numbers<[1], [0], [0], [1], [0, 0, 1, 1], [], []>} : vector<8x8xf32>, vector<8x256xf32>, vector<8x256xf32> -> vector<8x256xf32>
    %194 = arith.addf %189, %193 : vector<8x256xf32>
    %c0_101 = arith.constant 0 : index
    %c0_102 = arith.constant 0 : index
    %195 = vector.load %arg9[%c0_101, %c0_102] : memref<8x1xf32, #tpu.memory_space<vmem>>, vector<8x1xf32>
    %196 = vector.broadcast %195 : vector<8x1xf32> to vector<8x256xf32>
    %197 = arith.addf %194, %196 : vector<8x256xf32>
    %c0_103 = arith.constant 0 : index
    %c0_104 = arith.constant 0 : index
    %c0_105 = arith.constant 0 : index
    %198 = vector.load %arg10[%c0_103, %c0_104, %c0_105] : memref<1x8x256xf32, #tpu.memory_space<vmem>>, vector<1x8x256xf32>
    %199 = vector.shape_cast %198 : vector<1x8x256xf32> to vector<8x256xf32>
    %200 = vector.shape_cast %197 : vector<8x256xf32> to vector<1x8x256xf32>
    tpu.vector_store %arg10[%c0_103, %c0_104, %c0_105], %200 {strides = array<i32>} : memref<1x8x256xf32, #tpu.memory_space<vmem>>, vector<1x8x256xf32>,
    return
  }
  func.func @transform_0(%arg0: i32) -> (i32, i32, i32) {
    %c0_i32 = arith.constant 0 : i32
    %c0_i32_0 = arith.constant 0 : i32
    %c0_i32_1 = arith.constant 0 : i32
    return %arg0, %c0_i32, %c0_i32_0 : i32, i32, i32
  }
  func.func @transform_1(%arg0: i32) -> (i32, i32, i32) {
    %c0_i32 = arith.constant 0 : i32
    %c0_i32_0 = arith.constant 0 : i32
    %c0_i32_1 = arith.constant 0 : i32
    return %arg0, %c0_i32, %c0_i32_0 : i32, i32, i32
  }
  func.func @transform_2(%arg0: i32) -> (i32, i32, i32) {
    %c0_i32 = arith.constant 0 : i32
    %c0_i32_0 = arith.constant 0 : i32
    %c0_i32_1 = arith.constant 0 : i32
    %c0_i32_2 = arith.constant 0 : i32
    return %c0_i32, %c0_i32_0, %c0_i32_1 : i32, i32, i32
  }
  func.func @transform_3(%arg0: i32) -> (i32, i32) {
    %c0_i32 = arith.constant 0 : i32
    %c0_i32_0 = arith.constant 0 : i32
    %c0_i32_1 = arith.constant 0 : i32
    return %c0_i32, %c0_i32_0 : i32, i32
  }
  func.func @transform_4(%arg0: i32) -> (i32, i32, i32) {
    %c0_i32 = arith.constant 0 : i32
    %c0_i32_0 = arith.constant 0 : i32
    %c0_i32_1 = arith.constant 0 : i32
    return %arg0, %c0_i32, %c0_i32_0 : i32, i32, i32
  }
  func.func @transform_5(%arg0: i32) -> (i32, i32, i32) {
    %c0_i32 = arith.constant 0 : i32
    %c0_i32_0 = arith.constant 0 : i32
    %c0_i32_1 = arith.constant 0 : i32
    return %arg0, %c0_i32, %c0_i32_0 : i32, i32, i32
  }
  func.func @transform_6(%arg0: i32) -> (i32, i32, i32) {
    %c0_i32 = arith.constant 0 : i32
    %c0_i32_0 = arith.constant 0 : i32
    %c0_i32_1 = arith.constant 0 : i32
    %c0_i32_2 = arith.constant 0 : i32
    return %c0_i32, %c0_i32_0, %c0_i32_1 : i32, i32, i32
  }
  func.func @transform_7(%arg0: i32) -> (i32, i32) {
    %c0_i32 = arith.constant 0 : i32
    %c0_i32_0 = arith.constant 0 : i32
    %c0_i32_1 = arith.constant 0 : i32
    return %c0_i32, %c0_i32_0 : i32, i32
  }
  func.func @transform_8(%arg0: i32) -> (i32, i32) {
    %c0_i32 = arith.constant 0 : i32
    %c0_i32_0 = arith.constant 0 : i32
    %c0_i32_1 = arith.constant 0 : i32
    return %c0_i32, %c0_i32_0 : i32, i32
  }
  func.func @transform_9(%arg0: i32) -> (i32, i32, i32) {
    %c0_i32 = arith.constant 0 : i32
    %c0_i32_0 = arith.constant 0 : i32
    %c0_i32_1 = arith.constant 0 : i32
    return %arg0, %c0_i32, %c0_i32_0 : i32, i32, i32
  }
}

</mosaic_0001>

<llo_original>
// kernel: cond_msf_block.1
$region0: #{cond_msf_block.1}
  #allocation0 [shape = 'u32[]', space=smem, size = 0x4, offset = 0x4, fixed_abs, tag = 'smem constant byte address 0x4 - core index']
  #allocation1 [shape = 'u32[144,128]{1,0:T(1,128)}', space=vmem, size = 0x12000, scoped, tag = 'internal scratch']
  %s0 = inlined_call_operand.vmem [shape: f32[2,4,256], index: 0, kind: input, shape index: {}]
  %s1 = inlined_call_operand.vmem [shape: f32[2,4,3], index: 1, kind: input, shape index: {}]
  %s2 = inlined_call_operand.vmem [shape: f32[9,8,4], index: 2, kind: input, shape index: {}]
  %s3 = inlined_call_operand.vmem [shape: f32[256,2304], index: 3, kind: input, shape index: {}]
  %s4 = inlined_call_operand.vmem [shape: f32[2,8,64], index: 4, kind: input, shape index: {}]
  %s5 = inlined_call_operand.vmem [shape: f32[2,8,3], index: 5, kind: input, shape index: {}]
  %s6 = inlined_call_operand.vmem [shape: f32[9,8,8], index: 6, kind: input, shape index: {}]
  %s7 = inlined_call_operand.vmem [shape: f32[64,2304], index: 7, kind: input, shape index: {}]
  %s8 = inlined_call_operand.vmem [shape: f32[8,1], index: 8, kind: input, shape index: {}]
  %s9 = inlined_call_operand.vmem [shape: f32[2,8,256], index: 9, kind: output, shape index: {}]
  %s10 = sld [smem:[#allocation0]]
  $region69: #{cond_msf_block.1} parent=0
    _
  %s12 = ssub.s32 1, %s10
  %s13 = scalar_select 0, %s12, %s10
  loop: start=0, step=1, limit=4
  $region2: #{cond_msf_block.1} parent=0 // loop_pre_header
    _
  $region3: #{cond_msf_block.1} parent=0 // loop_header
    %s15 = sphi 0, %s19
    %p16 = scmp.ge.s32.totalorder %s15, 4
    %s25 = sphi 0, %s27
    %s28 = sphi 0, %s25
    %s29 = sphi 0, %s28
    %s45 = sphi 0, %s29
    %s51 = sphi 0, %s53
    %s54 = sphi 0, %s51
    %s55 = sphi 0, %s54
    %s71 = sphi 0, %s55
    %s75 = sphi 0, %s75
    %s77 = sphi 0, %s75
    %s78 = sphi 0, %s77
    %s92 = sphi 0, %s78
    %s96 = sphi 0, %s96
    %s98 = sphi 0, %s96
    %s99 = sphi 0, %s98
    %s113 = sphi 0, %s99
    %s119 = sphi 0, %s121
    %s122 = sphi 0, %s119
    %s123 = sphi 0, %s122
    %s139 = sphi 0, %s123
    %s145 = sphi 0, %s147
    %s148 = sphi 0, %s145
    %s149 = sphi 0, %s148
    %s165 = sphi 0, %s149
    %s169 = sphi 0, %s169
    %s171 = sphi 0, %s169
    %s172 = sphi 0, %s171
    %s186 = sphi 0, %s172
    %s190 = sphi 0, %s190
    %s192 = sphi 0, %s190
    %s193 = sphi 0, %s192
    %s207 = sphi 0, %s193
    %s211 = sphi 0, %s211
    %s213 = sphi 0, %s211
    %s214 = sphi 0, %s213
    %s228 = sphi 0, %s214
    %s234 = sphi 0, %s236
    %s237 = sphi 0, %s234
    %s238 = sphi 0, %s237
    %s254 = sphi 0, %s238
  $region4: #{cond_msf_block.1} parent=0 // loop_header_branch
    %18 = sbr.rel (%p16) target = $region8
  $region5: #{cond_msf_block.1} parent=0 // loop_body
    %s20 = ssub.s32 %s15, 1
    %s21 = ssub.s32 %s15, 2
    %s22 = sadd.s32 %s15, 1
    %s23 = ssub.s32 %s15, %s22
    %p24 = scmp.eq.s32.totalorder %s23, 0
    %s26 = sadd.s32 %s25, 1
    %s27 = scalar_select %p24, %s25, %s26
    %p30 = pneg %p24
    %p31 = scmp.eq.s32.totalorder %s15, 1
    %p32 = por %p30, %p31
    %p33 = scmp.ne.s32.totalorder %s25, %s28
    %p34 = scmp.eq.s32.totalorder %s15, 0
    %p35 = por %p33, %p34
    %p36 = scmp.ne.s32.totalorder %s25, %s28
    %p37 = scmp.eq.s32.totalorder %s20, 1
    %p38 = por %p36, %p37
    %p39 = scmp.ne.s32.totalorder %s28, %s29
    %p40 = scmp.eq.s32.totalorder %s20, 0
    %p41 = por %p39, %p40
    %p42 = scmp.ne.s32.totalorder %s28, %s29
    %p43 = scmp.eq.s32.totalorder %s21, 1
    %p44 = por %p42, %p43
    %p46 = scmp.ne.s32.totalorder %s29, %s45
    %p47 = scmp.eq.s32.totalorder %s21, 0
    %p48 = por %p46, %p47
    %s49 = ssub.s32 %s15, %s22
    %p50 = scmp.eq.s32.totalorder %s49, 0
    %s52 = sadd.s32 %s51, 1
    %s53 = scalar_select %p50, %s51, %s52
    %p56 = pneg %p50
    %p57 = scmp.eq.s32.totalorder %s15, 1
    %p58 = por %p56, %p57
    %p59 = scmp.ne.s32.totalorder %s51, %s54
    %p60 = scmp.eq.s32.totalorder %s15, 0
    %p61 = por %p59, %p60
    %p62 = scmp.ne.s32.totalorder %s51, %s54
    %p63 = scmp.eq.s32.totalorder %s20, 1
    %p64 = por %p62, %p63
    %p65 = scmp.ne.s32.totalorder %s54, %s55
    %p66 = scmp.eq.s32.totalorder %s20, 0
    %p67 = por %p65, %p66
    %p68 = scmp.ne.s32.totalorder %s54, %s55
    %p69 = scmp.eq.s32.totalorder %s21, 1
    %p70 = por %p68, %p69
    %p72 = scmp.ne.s32.totalorder %s55, %s71
    %p73 = scmp.eq.s32.totalorder %s21, 0
    %p74 = por %p72, %p73
    %s76 = sadd.s32 %s75, 1
    %p79 = scmp.eq.s32.totalorder %s15, 1
    %p80 = scmp.ne.s32.totalorder %s75, %s77
    %p81 = scmp.eq.s32.totalorder %s15, 0
    %p82 = por %p80, %p81
    %p83 = scmp.ne.s32.totalorder %s75, %s77
    %p84 = scmp.eq.s32.totalorder %s20, 1
    %p85 = por %p83, %p84
    %p86 = scmp.ne.s32.totalorder %s77, %s78
    %p87 = scmp.eq.s32.totalorder %s20, 0
    %p88 = por %p86, %p87
    %p89 = scmp.ne.s32.totalorder %s77, %s78
    %p90 = scmp.eq.s32.totalorder %s21, 1
    %p91 = por %p89, %p90
    %p93 = scmp.ne.s32.totalorder %s78, %s92
    %p94 = scmp.eq.s32.totalorder %s21, 0
    %p95 = por %p93, %p94
    %s97 = sadd.s32 %s96, 1
    %p100 = scmp.eq.s32.totalorder %s15, 1
    %p101 = scmp.ne.s32.totalorder %s96, %s98
    %p102 = scmp.eq.s32.totalorder %s15, 0
    %p103 = por %p101, %p102
    %p104 = scmp.ne.s32.totalorder %s96, %s98
    %p105 = scmp.eq.s32.totalorder %s20, 1
    %p106 = por %p104, %p105
    %p107 = scmp.ne.s32.totalorder %s98, %s99
    %p108 = scmp.eq.s32.totalorder %s20, 0
    %p109 = por %p107, %p108
    %p110 = scmp.ne.s32.totalorder %s98, %s99
    %p111 = scmp.eq.s32.totalorder %s21, 1
    %p112 = por %p110, %p111
    %p114 = scmp.ne.s32.totalorder %s99, %s113
    %p115 = scmp.eq.s32.totalorder %s21, 0
    %p116 = por %p114, %p115
    %s117 = ssub.s32 %s15, %s22
    %p118 = scmp.eq.s32.totalorder %s117, 0
    %s120 = sadd.s32 %s119, 1
    %s121 = scalar_select %p118, %s119, %s120
    %p124 = pneg %p118
    %p125 = scmp.eq.s32.totalorder %s15, 1
    %p126 = por %p124, %p125
    %p127 = scmp.ne.s32.totalorder %s119, %s122
    %p128 = scmp.eq.s32.totalorder %s15, 0
    %p129 = por %p127, %p128
    %p130 = scmp.ne.s32.totalorder %s119, %s122
    %p131 = scmp.eq.s32.totalorder %s20, 1
    %p132 = por %p130, %p131
    %p133 = scmp.ne.s32.totalorder %s122, %s123
    %p134 = scmp.eq.s32.totalorder %s20, 0
    %p135 = por %p133, %p134
    %p136 = scmp.ne.s32.totalorder %s122, %s123
    %p137 = scmp.eq.s32.totalorder %s21, 1
    %p138 = por %p136, %p137
    %p140 = scmp.ne.s32.totalorder %s123, %s139
    %p141 = scmp.eq.s32.totalorder %s21, 0
    %p142 = por %p140, %p141
    %s143 = ssub.s32 %s15, %s22
    %p144 = scmp.eq.s32.totalorder %s143, 0
    %s146 = sadd.s32 %s145, 1
    %s147 = scalar_select %p144, %s145, %s146
    %p150 = pneg %p144
    %p151 = scmp.eq.s32.totalorder %s15, 1
    %p152 = por %p150, %p151
    %p153 = scmp.ne.s32.totalorder %s145, %s148
    %p154 = scmp.eq.s32.totalorder %s15, 0
    %p155 = por %p153, %p154
    %p156 = scmp.ne.s32.totalorder %s145, %s148
    %p157 = scmp.eq.s32.totalorder %s20, 1
    %p158 = por %p156, %p157
    %p159 = scmp.ne.s32.totalorder %s148, %s149
    %p160 = scmp.eq.s32.totalorder %s20, 0
    %p161 = por %p159, %p160
    %p162 = scmp.ne.s32.totalorder %s148, %s149
    %p163 = scmp.eq.s32.totalorder %s21, 1
    %p164 = por %p162, %p163
    %p166 = scmp.ne.s32.totalorder %s149, %s165
    %p167 = scmp.eq.s32.totalorder %s21, 0
    %p168 = por %p166, %p167
    %s170 = sadd.s32 %s169, 1
    %p173 = scmp.eq.s32.totalorder %s15, 1
    %p174 = scmp.ne.s32.totalorder %s169, %s171
    %p175 = scmp.eq.s32.totalorder %s15, 0
    %p176 = por %p174, %p175
    %p177 = scmp.ne.s32.totalorder %s169, %s171
    %p178 = scmp.eq.s32.totalorder %s20, 1
    %p179 = por %p177, %p178
    %p180 = scmp.ne.s32.totalorder %s171, %s172
    %p181 = scmp.eq.s32.totalorder %s20, 0
    %p182 = por %p180, %p181
    %p183 = scmp.ne.s32.totalorder %s171, %s172
    %p184 = scmp.eq.s32.totalorder %s21, 1
    %p185 = por %p183, %p184
    %p187 = scmp.ne.s32.totalorder %s172, %s186
    %p188 = scmp.eq.s32.totalorder %s21, 0
    %p189 = por %p187, %p188
    %s191 = sadd.s32 %s190, 1
    %p194 = scmp.eq.s32.totalorder %s15, 1
    %p195 = scmp.ne.s32.totalorder %s190, %s192
    %p196 = scmp.eq.s32.totalorder %s15, 0
    %p197 = por %p195, %p196
    %p198 = scmp.ne.s32.totalorder %s190, %s192
    %p199 = scmp.eq.s32.totalorder %s20, 1
    %p200 = por %p198, %p199
    %p201 = scmp.ne.s32.totalorder %s192, %s193
    %p202 = scmp.eq.s32.totalorder %s20, 0
    %p203 = por %p201, %p202
    %p204 = scmp.ne.s32.totalorder %s192, %s193
    %p205 = scmp.eq.s32.totalorder %s21, 1
    %p206 = por %p204, %p205
    %p208 = scmp.ne.s32.totalorder %s193, %s207
    %p209 = scmp.eq.s32.totalorder %s21, 0
    %p210 = por %p208, %p209
    %s212 = sadd.s32 %s211, 1
    %p215 = scmp.eq.s32.totalorder %s15, 1
    %p216 = scmp.ne.s32.totalorder %s211, %s213
    %p217 = scmp.eq.s32.totalorder %s15, 0
    %p218 = por %p216, %p217
    %p219 = scmp.ne.s32.totalorder %s211, %s213
    %p220 = scmp.eq.s32.totalorder %s20, 1
    %p221 = por %p219, %p220
    %p222 = scmp.ne.s32.totalorder %s213, %s214
    %p223 = scmp.eq.s32.totalorder %s20, 0
    %p224 = por %p222, %p223
    %p225 = scmp.ne.s32.totalorder %s213, %s214
    %p226 = scmp.eq.s32.totalorder %s21, 1
    %p227 = por %p225, %p226
    %p229 = scmp.ne.s32.totalorder %s214, %s228
    %p230 = scmp.eq.s32.totalorder %s21, 0
    %p231 = por %p229, %p230
    %s232 = ssub.s32 %s15, %s22
    %p233 = scmp.eq.s32.totalorder %s232, 0
    %s235 = sadd.s32 %s234, 1
    %s236 = scalar_select %p233, %s234, %s235
    %p239 = pneg %p233
    %p240 = scmp.eq.s32.totalorder %s15, 1
    %p241 = por %p239, %p240
    %p242 = scmp.ne.s32.totalorder %s234, %s237
    %p243 = scmp.eq.s32.totalorder %s15, 0
    %p244 = por %p242, %p243
    %p245 = scmp.ne.s32.totalorder %s234, %s237
    %p246 = scmp.eq.s32.totalorder %s20, 1
    %p247 = por %p245, %p246
    %p248 = scmp.ne.s32.totalorder %s237, %s238
    %p249 = scmp.eq.s32.totalorder %s20, 0
    %p250 = por %p248, %p249
    %p251 = scmp.ne.s32.totalorder %s237, %s238
    %p252 = scmp.eq.s32.totalorder %s21, 1
    %p253 = por %p251, %p252
    %p255 = scmp.ne.s32.totalorder %s238, %s254
    %p256 = scmp.eq.s32.totalorder %s21, 0
    %p257 = por %p255, %p256
    %p258 = scmp.le.s32.totalorder 1, %s15
    %p259 = scmp.lt.s32.totalorder %s15, 3
    %p260 = pnand %p258, %p259
    %p261 = pneg %p260
    // Predicated region
    $region9: #{cond_msf_block.1} parent=5 // pred_check
      _
    $region10: #{cond_msf_block.1} parent=5 // pred_check_branch
      %263 = sbr.rel (%p260) target = $region12
    $region11: #{cond_msf_block.1} parent=5 // pred_region
      %s264 = ssub.s32 %s15, 1
      // Predicated region
      $region13: #{cond_msf_block.1} parent=11 // pred_check
        %p265 = pneg %p88
      $region14: #{cond_msf_block.1} parent=11 // pred_check_branch
        %267 = sbr.rel (%p265) target = $region16
      $region15: #{cond_msf_block.1} parent=11 // pred_region
        _
      $region16: #{cond_msf_block.1} parent=11 // pred_fallthru
        _
      // Predicated region
      $region17: #{cond_msf_block.1} parent=11 // pred_check
        %p268 = pneg %p109
      $region18: #{cond_msf_block.1} parent=11 // pred_check_branch
        %270 = sbr.rel (%p268) target = $region20
      $region19: #{cond_msf_block.1} parent=11 // pred_region
        _
      $region20: #{cond_msf_block.1} parent=11 // pred_fallthru
        _
      // Predicated region
      $region21: #{cond_msf_block.1} parent=11 // pred_check
        %p271 = pneg %p182
      $region22: #{cond_msf_block.1} parent=11 // pred_check_branch
        %273 = sbr.rel (%p271) target = $region24
      $region23: #{cond_msf_block.1} parent=11 // pred_region
        _
      $region24: #{cond_msf_block.1} parent=11 // pred_fallthru
        _
      // Predicated region
      $region25: #{cond_msf_block.1} parent=11 // pred_check
        %p274 = pneg %p203
      $region26: #{cond_msf_block.1} parent=11 // pred_check_branch
        %276 = sbr.rel (%p274) target = $region28
      $region27: #{cond_msf_block.1} parent=11 // pred_region
        _
      $region28: #{cond_msf_block.1} parent=11 // pred_fallthru
        _
      // Predicated region
      $region29: #{cond_msf_block.1} parent=11 // pred_check
        %p277 = pneg %p224
      $region30: #{cond_msf_block.1} parent=11 // pred_check_branch
        %279 = sbr.rel (%p277) target = $region32
      $region31: #{cond_msf_block.1} parent=11 // pred_region
        _
      $region32: #{cond_msf_block.1} parent=11 // pred_fallthru
        _
    $region12: #{cond_msf_block.1} parent=5 // pred_fallthru
      _
    %p280 = scmp.lt.s32.totalorder %s15, 2
    // Predicated region
    $region33: #{cond_msf_block.1} parent=5 // pred_check
      %p281 = pneg %p280
    $region34: #{cond_msf_block.1} parent=5 // pred_check_branch
      %283 = sbr.rel (%p281) target = $region36
    $region35: #{cond_msf_block.1} parent=5 // pred_region
      // Predicated region
      $region37: #{cond_msf_block.1} parent=35 // pred_check
        %p284 = pneg %p35
      $region38: #{cond_msf_block.1} parent=35 // pred_check_branch
        %286 = sbr.rel (%p284) target = $region40
      $region39: #{cond_msf_block.1} parent=35 // pred_region
        %p287 = scmp.lt.s32.totalorder %s15, 1
        %s288 = scalar_select %p287, %s15, 1
        %s289 = smul.addr %s288, 2
        %s290 = smul.addr %s289, 4
        %s291 = scalar_lea.vmem %s0, %s290
      $region40: #{cond_msf_block.1} parent=35 // pred_fallthru
        _
      // Predicated region
      $region41: #{cond_msf_block.1} parent=35 // pred_check
        %p292 = pneg %p61
      $region42: #{cond_msf_block.1} parent=35 // pred_check_branch
        %294 = sbr.rel (%p292) target = $region44
      $region43: #{cond_msf_block.1} parent=35 // pred_region
        %p295 = scmp.lt.s32.totalorder %s15, 1
        %s296 = scalar_select %p295, %s15, 1
        %s297 = smul.addr %s296, 4
        %s298 = scalar_lea.vmem %s1, %s297
      $region44: #{cond_msf_block.1} parent=35 // pred_fallthru
        _
      // Predicated region
      $region45: #{cond_msf_block.1} parent=35 // pred_check
        %p299 = pneg %p129
      $region46: #{cond_msf_block.1} parent=35 // pred_check_branch
        %301 = sbr.rel (%p299) target = $region48
      $region47: #{cond_msf_block.1} parent=35 // pred_region
        %p302 = scmp.lt.s32.totalorder %s15, 1
        %s303 = scalar_select %p302, %s15, 1
        %s304 = smul.addr %s303, 8
        %s305 = scalar_lea.vmem %s4, %s304
      $region48: #{cond_msf_block.1} parent=35 // pred_fallthru
        _
      // Predicated region
      $region49: #{cond_msf_block.1} parent=35 // pred_check
        %p306 = pneg %p155
      $region50: #{cond_msf_block.1} parent=35 // pred_check_branch
        %308 = sbr.rel (%p306) target = $region52
      $region51: #{cond_msf_block.1} parent=35 // pred_region
        %p309 = scmp.lt.s32.totalorder %s15, 1
        %s310 = scalar_select %p309, %s15, 1
        %s311 = smul.addr %s310, 8
        %s312 = scalar_lea.vmem %s5, %s311
      $region52: #{cond_msf_block.1} parent=35 // pred_fallthru
        _
    $region36: #{cond_msf_block.1} parent=5 // pred_fallthru
      _
    %p313 = scmp.le.s32.totalorder 1, %s15
    %p314 = scmp.lt.s32.totalorder %s15, 3
    %p315 = pnand %p313, %p314
    %p316 = pneg %p315
    // Predicated region
    $region53: #{cond_msf_block.1} parent=5 // pred_check
      _
    $region54: #{cond_msf_block.1} parent=5 // pred_check_branch
      %318 = sbr.rel (%p315) target = $region56
    $region55: #{cond_msf_block.1} parent=5 // pred_region
      %s319 = ssub.s32 %s15, 1
      %p320 = scmp.lt.s32.totalorder %s20, 1
      %s321 = scalar_select %p320, %s20, 1
      %s322 = smul.addr %s321, 2
      %s323 = smul.addr %s322, 4
      %s324 = scalar_lea.vmem %s0, %s323
      %p325 = pneg %p41
      %p326 = pneg %p38
      %p327 = scmp.lt.s32.totalorder %s20, 1
      %s328 = scalar_select %p327, %s20, 1
      %s329 = smul.addr %s328, 4
      %s330 = scalar_lea.vmem %s1, %s329
      %p331 = pneg %p67
      %p332 = pneg %p64
      %p333 = pneg %p88
      %p334 = pneg %p85
      %p335 = pneg %p109
      %p336 = pneg %p106
      %p337 = scmp.lt.s32.totalorder %s20, 1
      %s338 = scalar_select %p337, %s20, 1
      %s339 = smul.addr %s338, 8
      %s340 = scalar_lea.vmem %s4, %s339
      %p341 = pneg %p135
      %p342 = pneg %p132
      %p343 = scmp.lt.s32.totalorder %s20, 1
      %s344 = scalar_select %p343, %s20, 1
      %s345 = smul.addr %s344, 8
      %s346 = scalar_lea.vmem %s5, %s345
      %p347 = pneg %p161
      %p348 = pneg %p158
      %p349 = pneg %p182
      %p350 = pneg %p179
      %p351 = pneg %p203
      %p352 = pneg %p200
      %p353 = pneg %p224
      %p354 = pneg %p221
      %p355 = pneg %p250
      %p356 = pneg %p247
      %p357 = scmp.lt.s32.totalorder %s20, 1
      %s358 = scalar_select %p357, %s20, 1
      %s359 = smul.addr %s358, 2
      %s360 = smul.addr %s359, 8
      %s361 = scalar_lea.vmem %s9, %s360
      %p362 = scmp.lt.s32.totalorder %s20, 1
      %s363 = scalar_select %p362, %s20, 1
      %s364 = smul.addr %s363, 2
      %s365 = smul.addr %s364, 4
      %s366 = scalar_lea.vmem %s0, %s365
      %p367 = scmp.lt.s32.totalorder %s20, 1
      %s368 = scalar_select %p367, %s20, 1
      %s369 = smul.addr %s368, 4
      %s370 = scalar_lea.vmem %s1, %s369
      %p371 = scmp.lt.s32.totalorder %s20, 1
      %s372 = scalar_select %p371, %s20, 1
      %s373 = smul.addr %s372, 8
      %s374 = scalar_lea.vmem %s4, %s373
      %p375 = scmp.lt.s32.totalorder %s20, 1
      %s376 = scalar_select %p375, %s20, 1
      %s377 = smul.addr %s376, 8
      %s378 = scalar_lea.vmem %s5, %s377
      %p379 = scmp.lt.s32.totalorder %s20, 1
      %s380 = scalar_select %p379, %s20, 1
      %s381 = smul.addr %s380, 2
      %s382 = smul.addr %s381, 8
      %s383 = scalar_lea.vmem %s9, %s382
      %v384 = vld [vmem:[%s366] sm:$0xff]
      %v385 = vld [vmem:[%s370] sm:$0xf]
      %v387 = vcombine.high %v384, %v384
      %vm389 = vcmask 1043456
      %v390 = vsel %vm389, %v384, 0.0
      %v391 = vsel %vm389, %v387, 0.0
      %v392 = vadd.f32 %v390, %v391
      %393 = vadd.xlane.f32.xlu0 %v392
      %v394 = vpop.xlane.xlu0 %393
      %v395 = vrcp.pop 256.0
      %v396 = vmul.f32 %v394, %v395
      %v399 = vunpack.c.l.s4 839922192
      %v400 = vunpack.c.0.s8 %v399
      %v401 = vlaneseq
      %v402 = vshrl.u32 %v401, 7
      %v403 = vsub.s32 %v400, %v402
      %v404 = vrot.slane %v396, %v403
      %v406 = vsub.f32 %v384, %v404
      %v407 = vmul.f32 %v406, %v406
      %v409 = vcombine.high %v407, %v407
      %v411 = vsel %vm389, %v407, 0.0
      %v412 = vsel %vm389, %v409, 0.0
      %v413 = vadd.f32 %v411, %v412
      %414 = vadd.xlane.f32.xlu0 %v413
      %v415 = vpop.xlane.xlu0 %414
      %v416 = vmul.f32 %v415, %v395
      %v417 = vadd.f32 %v416, 1e-05
      %v418 = vrsqrt.pop %v417
      %v421 = vunpack.c.l.s4 839922192
      %v422 = vunpack.c.0.s8 %v421
      %v423 = vlaneseq
      %v424 = vshrl.u32 %v423, 7
      %v425 = vsub.s32 %v422, %v424
      %v426 = vrot.slane %v418, %v425
      %v428 = vmul.f32 %v406, %v426
      %v429 = vsel %vm389, %v396, 0.0
      %v430 = vrot.slane %v429, 4
      %v431 = vadd.f32 %v429, %v430
      %v432 = vrot.slane %v431, 2
      %v433 = vadd.f32 %v431, %v432
      %v434 = vrot.slane %v433, 1
      %v435 = vadd.f32 %v433, %v434
      %v436 = vrcp.pop 4.0
      %v437 = vmul.f32 %v435, %v436
      %v438 = vsub.f32 %v396, %v437
      %v439 = vmul.f32 %v438, %v438
      %v440 = vsel %vm389, %v439, 0.0
      %v441 = vrot.slane %v440, 4
      %v442 = vadd.f32 %v440, %v441
      %v443 = vrot.slane %v442, 2
      %v444 = vadd.f32 %v442, %v443
      %v445 = vrot.slane %v444, 1
      %v446 = vadd.f32 %v444, %v445
      %v447 = vrcp.pop 3.0
      %v448 = vmul.f32 %v446, %v447
      %v449 = vadd.f32 %v448, 1e-05
      %v450 = vrsqrt.pop %v449
      %v451 = vmul.f32 %v438, %v450
      %v452 = vmul.f32 %v451, %v385
      %454 = vset.pattern.permute.xlu0 1
      %455 = vperm.xlu0 %454, %v452
      %v456 = vpop.permute.xlu0 %455
      %v458 = vunpack.c.l.s4 839922192
      %v459 = vunpack.c.0.s8 %v458
      %v460 = vlaneseq
      %v461 = vshrl.u32 %v460, 7
      %v462 = vsub.s32 %v459, %v461
      %v463 = vrot.slane %v456, %v462
      %v465 = vadd.f32 %v428, %v463
      %467 = vset.pattern.permute.xlu0 0
      %468 = vperm.xlu0 %467, %v385
      %v469 = vpop.permute.xlu0 %468
      %v472 = vcombine.high %v465, %v465
      %v474 = vmul.f32 %v469, %v465
      %v475 = vmul.f32 %v469, %v472
      %476 = vset.pattern.permute.xlu0 2
      %477 = vperm.xlu0 %476, %v385
      %v478 = vpop.permute.xlu0 %477
      %v480 = vadd.f32 %v474, %v478
      %v481 = vadd.f32 %v475, %v478
      %v482 = vld [vmem:[%s3] sm:$0xff]
      %v483 = vld [vmem:[%s3 + $0x8] sm:$0xff]
      %v484 = vld [vmem:[%s3 + $0x10] sm:$0xff]
      %v485 = vld [vmem:[%s3 + $0x18] sm:$0xff]
      %v486 = vld [vmem:[%s3 + $0x20] sm:$0xff]
      %v487 = vld [vmem:[%s3 + $0x28] sm:$0xff]
      %v488 = vld [vmem:[%s3 + $0x30] sm:$0xff]
      %v489 = vld [vmem:[%s3 + $0x38] sm:$0xff]
      %v490 = vld [vmem:[%s3 + $0x40] sm:$0xff]
      %v491 = vld [vmem:[%s3 + $0x48] sm:$0xff]
      %v492 = vld [vmem:[%s3 + $0x50] sm:$0xff]
      %v493 = vld [vmem:[%s3 + $0x58] sm:$0xff]
      %v494 = vld [vmem:[%s3 + $0x60] sm:$0xff]
      %v495 = vld [vmem:[%s3 + $0x68] sm:$0xff]
      %v496 = vld [vmem:[%s3 + $0x70] sm:$0xff]
      %v497 = vld [vmem:[%s3 + $0x78] sm:$0xff]
      %v498 = vld [vmem:[%s3 + $0x80] sm:$0xff]
      %v499 = vld [vmem:[%s3 + $0x88] sm:$0xff]
      %v500 = vld [vmem:[%s3 + $0x90] sm:$0xff]
      %v501 = vld [vmem:[%s3 + $0x98] sm:$0xff]
      %v502 = vld [vmem:[%s3 + $0xa0] sm:$0xff]
      %v503 = vld [vmem:[%s3 + $0xa8] sm:$0xff]
      %v504 = vld [vmem:[%s3 + $0xb0] sm:$0xff]
      %v505 = vld [vmem:[%s3 + $0xb8] sm:$0xff]
      %v506 = vld [vmem:[%s3 + $0xc0] sm:$0xff]
      %v507 = vld [vmem:[%s3 + $0xc8] sm:$0xff]
      %v508 = vld [vmem:[%s3 + $0xd0] sm:$0xff]
      %v509 = vld [vmem:[%s3 + $0xd8] sm:$0xff]
      %v510 = vld [vmem:[%s3 + $0xe0] sm:$0xff]
      %v511 = vld [vmem:[%s3 + $0xe8] sm:$0xff]
      %v512 = vld [vmem:[%s3 + $0xf0] sm:$0xff]
      %v513 = vld [vmem:[%s3 + $0xf8] sm:$0xff]
      %v514 = vld [vmem:[%s3 + $0x100] sm:$0xff]
      %v515 = vld [vmem:[%s3 + $0x108] sm:$0xff]
      %v516 = vld [vmem:[%s3 + $0x110] sm:$0xff]
      %v517 = vld [vmem:[%s3 + $0x118] sm:$0xff]
      %v518 = vld [vmem:[%s3 + $0x120] sm:$0xff]
      %v519 = vld [vmem:[%s3 + $0x128] sm:$0xff]
      %v520 = vld [vmem:[%s3 + $0x130] sm:$0xff]
      %v521 = vld [vmem:[%s3 + $0x138] sm:$0xff]
      %v522 = vld [vmem:[%s3 + $0x140] sm:$0xff]
      %v523 = vld [vmem:[%s3 + $0x148] sm:$0xff]
      %v524 = vld [vmem:[%s3 + $0x150] sm:$0xff]
      %v525 = vld [vmem:[%s3 + $0x158] sm:$0xff]
      %v526 = vld [vmem:[%s3 + $0x160] sm:$0xff]
      %v527 = vld [vmem:[%s3 + $0x168] sm:$0xff]
      %v528 = vld [vmem:[%s3 + $0x170] sm:$0xff]
      %v529 = vld [vmem:[%s3 + $0x178] sm:$0xff]
      %v530 = vld [vmem:[%s3 + $0x180] sm:$0xff]
      %v531 = vld [vmem:[%s3 + $0x188] sm:$0xff]
      %v532 = vld [vmem:[%s3 + $0x190] sm:$0xff]
      %v533 = vld [vmem:[%s3 + $0x198] sm:$0xff]
      %v534 = vld [vmem:[%s3 + $0x1a0] sm:$0xff]
      %v535 = vld [vmem:[%s3 + $0x1a8] sm:$0xff]
      %v536 = vld [vmem:[%s3 + $0x1b0] sm:$0xff]
      %v537 = vld [vmem:[%s3 + $0x1b8] sm:$0xff]
      %v538 = vld [vmem:[%s3 + $0x1c0] sm:$0xff]
      %v539 = vld [vmem:[%s3 + $0x1c8] sm:$0xff]
      %v540 = vld [vmem:[%s3 + $0x1d0] sm:$0xff]
      %v541 = vld [vmem:[%s3 + $0x1d8] sm:$0xff]
      %v542 = vld [vmem:[%s3 + $0x1e0] sm:$0xff]
      %v543 = vld [vmem:[%s3 + $0x1e8] sm:$0xff]
      %v544 = vld [vmem:[%s3 + $0x1f0] sm:$0xff]
      %v545 = vld [vmem:[%s3 + $0x1f8] sm:$0xff]
      %v546 = vld [vmem:[%s3 + $0x200] sm:$0xff]
      %v547 = vld [vmem:[%s3 + $0x208] sm:$0xff]
      %v548 = vld [vmem:[%s3 + $0x210] sm:$0xff]
      %v549 = vld [vmem:[%s3 + $0x218] sm:$0xff]
      %v550 = vld [vmem:[%s3 + $0x220] sm:$0xff]
      %v551 = vld [vmem:[%s3 + $0x228] sm:$0xff]
      %v552 = vld [vmem:[%s3 + $0x230] sm:$0xff]
      %v553 = vld [vmem:[%s3 + $0x238] sm:$0xff]
      %v554 = vld [vmem:[%s3 + $0x240] sm:$0xff]
      %v555 = vld [vmem:[%s3 + $0x248] sm:$0xff]
      %v556 = vld [vmem:[%s3 + $0x250] sm:$0xff]
      %v557 = vld [vmem:[%s3 + $0x258] sm:$0xff]
      %v558 = vld [vmem:[%s3 + $0x260] sm:$0xff]
      %v559 = vld [vmem:[%s3 + $0x268] sm:$0xff]
      %v560 = vld [vmem:[%s3 + $0x270] sm:$0xff]
      %v561 = vld [vmem:[%s3 + $0x278] sm:$0xff]
      %v562 = vld [vmem:[%s3 + $0x280] sm:$0xff]
      %v563 = vld [vmem:[%s3 + $0x288] sm:$0xff]
      %v564 = vld [vmem:[%s3 + $0x290] sm:$0xff]
      %v565 = vld [vmem:[%s3 + $0x298] sm:$0xff]
      %v566 = vld [vmem:[%s3 + $0x2a0] sm:$0xff]
      %v567 = vld [vmem:[%s3 + $0x2a8] sm:$0xff]
      %v568 = vld [vmem:[%s3 + $0x2b0] sm:$0xff]
      %v569 = vld [vmem:[%s3 + $0x2b8] sm:$0xff]
      %v570 = vld [vmem:[%s3 + $0x2c0] sm:$0xff]
      %v571 = vld [vmem:[%s3 + $0x2c8] sm:$0xff]
      %v572 = vld [vmem:[%s3 + $0x2d0] sm:$0xff]
      %v573 = vld [vmem:[%s3 + $0x2d8] sm:$0xff]
      %v574 = vld [vmem:[%s3 + $0x2e0] sm:$0xff]
      %v575 = vld [vmem:[%s3 + $0x2e8] sm:$0xff]
      %v576 = vld [vmem:[%s3 + $0x2f0] sm:$0xff]
      %v577 = vld [vmem:[%s3 + $0x2f8] sm:$0xff]
      %v578 = vld [vmem:[%s3 + $0x300] sm:$0xff]
      %v579 = vld [vmem:[%s3 + $0x308] sm:$0xff]
      %v580 = vld [vmem:[%s3 + $0x310] sm:$0xff]
      %v581 = vld [vmem:[%s3 + $0x318] sm:$0xff]
      %v582 = vld [vmem:[%s3 + $0x320] sm:$0xff]
      %v583 = vld [vmem:[%s3 + $0x328] sm:$0xff]
      %v584 = vld [vmem:[%s3 + $0x330] sm:$0xff]
      %v585 = vld [vmem:[%s3 + $0x338] sm:$0xff]
      %v586 = vld [vmem:[%s3 + $0x340] sm:$0xff]
      %v587 = vld [vmem:[%s3 + $0x348] sm:$0xff]
      %v588 = vld [vmem:[%s3 + $0x350] sm:$0xff]
      %v589 = vld [vmem:[%s3 + $0x358] sm:$0xff]
      %v590 = vld [vmem:[%s3 + $0x360] sm:$0xff]
      %v591 = vld [vmem:[%s3 + $0x368] sm:$0xff]
      %v592 = vld [vmem:[%s3 + $0x370] sm:$0xff]
      %v593 = vld [vmem:[%s3 + $0x378] sm:$0xff]
      %v594 = vld [vmem:[%s3 + $0x380] sm:$0xff]
      %v595 = vld [vmem:[%s3 + $0x388] sm:$0xff]
      %v596 = vld [vmem:[%s3 + $0x390] sm:$0xff]
      %v597 = vld [vmem:[%s3 + $0x398] sm:$0xff]
      %v598 = vld [vmem:[%s3 + $0x3a0] sm:$0xff]
      %v599 = vld [vmem:[%s3 + $0x3a8] sm:$0xff]
      %v600 = vld [vmem:[%s3 + $0x3b0] sm:$0xff]
      %v601 = vld [vmem:[%s3 + $0x3b8] sm:$0xff]
      %v602 = vld [vmem:[%s3 + $0x3c0] sm:$0xff]
      %v603 = vld [vmem:[%s3 + $0x3c8] sm:$0xff]
      %v604 = vld [vmem:[%s3 + $0x3d0] sm:$0xff]
      %v605 = vld [vmem:[%s3 + $0x3d8] sm:$0xff]
      %v606 = vld [vmem:[%s3 + $0x3e0] sm:$0xff]
      %v607 = vld [vmem:[%s3 + $0x3e8] sm:$0xff]
      %v608 = vld [vmem:[%s3 + $0x3f0] sm:$0xff]
      %v609 = vld [vmem:[%s3 + $0x3f8] sm:$0xff]
      %v610 = vld [vmem:[%s3 + $0x400] sm:$0xff]
      %v611 = vld [vmem:[%s3 + $0x408] sm:$0xff]
      %v612 = vld [vmem:[%s3 + $0x410] sm:$0xff]
      %v613 = vld [vmem:[%s3 + $0x418] sm:$0xff]
      %v614 = vld [vmem:[%s3 + $0x420] sm:$0xff]
      %v615 = vld [vmem:[%s3 + $0x428] sm:$0xff]
      %v616 = vld [vmem:[%s3 + $0x430] sm:$0xff]
      %v617 = vld [vmem:[%s3 + $0x438] sm:$0xff]
      %v618 = vld [vmem:[%s3 + $0x440] sm:$0xff]
      %v619 = vld [vmem:[%s3 + $0x448] sm:$0xff]
      %v620 = vld [vmem:[%s3 + $0x450] sm:$0xff]
      %v621 = vld [vmem:[%s3 + $0x458] sm:$0xff]
      %v622 = vld [vmem:[%s3 + $0x460] sm:$0xff]
      %v623 = vld [vmem:[%s3 + $0x468] sm:$0xff]
      %v624 = vld [vmem:[%s3 + $0x470] sm:$0xff]
      %v625 = vld [vmem:[%s3 + $0x478] sm:$0xff]
      %v626 = vld [vmem:[%s3 + $0x480] sm:$0xff]
      %v627 = vld [vmem:[%s3 + $0x488] sm:$0xff]
      %v628 = vld [vmem:[%s3 + $0x490] sm:$0xff]
      %v629 = vld [vmem:[%s3 + $0x498] sm:$0xff]
      %v630 = vld [vmem:[%s3 + $0x4a0] sm:$0xff]
      %v631 = vld [vmem:[%s3 + $0x4a8] sm:$0xff]
      %v632 = vld [vmem:[%s3 + $0x4b0] sm:$0xff]
      %v633 = vld [vmem:[%s3 + $0x4b8] sm:$0xff]
      %v634 = vld [vmem:[%s3 + $0x4c0] sm:$0xff]
      %v635 = vld [vmem:[%s3 + $0x4c8] sm:$0xff]
      %v636 = vld [vmem:[%s3 + $0x4d0] sm:$0xff]
      %v637 = vld [vmem:[%s3 + $0x4d8] sm:$0xff]
      %v638 = vld [vmem:[%s3 + $0x4e0] sm:$0xff]
      %v639 = vld [vmem:[%s3 + $0x4e8] sm:$0xff]
      %v640 = vld [vmem:[%s3 + $0x4f0] sm:$0xff]
      %v641 = vld [vmem:[%s3 + $0x4f8] sm:$0xff]
      %v642 = vld [vmem:[%s3 + $0x500] sm:$0xff]
      %v643 = vld [vmem:[%s3 + $0x508] sm:$0xff]
      %v644 = vld [vmem:[%s3 + $0x510] sm:$0xff]
      %v645 = vld [vmem:[%s3 + $0x518] sm:$0xff]
      %v646 = vld [vmem:[%s3 + $0x520] sm:$0xff]
      %v647 = vld [vmem:[%s3 + $0x528] sm:$0xff]
      %v648 = vld [vmem:[%s3 + $0x530] sm:$0xff]
      %v649 = vld [vmem:[%s3 + $0x538] sm:$0xff]
      %v650 = vld [vmem:[%s3 + $0x540] sm:$0xff]
      %v651 = vld [vmem:[%s3 + $0x548] sm:$0xff]
      %v652 = vld [vmem:[%s3 + $0x550] sm:$0xff]
      %v653 = vld [vmem:[%s3 + $0x558] sm:$0xff]
      %v654 = vld [vmem:[%s3 + $0x560] sm:$0xff]
      %v655 = vld [vmem:[%s3 + $0x568] sm:$0xff]
      %v656 = vld [vmem:[%s3 + $0x570] sm:$0xff]
      %v657 = vld [vmem:[%s3 + $0x578] sm:$0xff]
      %v658 = vld [vmem:[%s3 + $0x580] sm:$0xff]
      %v659 = vld [vmem:[%s3 + $0x588] sm:$0xff]
      %v660 = vld [vmem:[%s3 + $0x590] sm:$0xff]
      %v661 = vld [vmem:[%s3 + $0x598] sm:$0xff]
      %v662 = vld [vmem:[%s3 + $0x5a0] sm:$0xff]
      %v663 = vld [vmem:[%s3 + $0x5a8] sm:$0xff]
      %v664 = vld [vmem:[%s3 + $0x5b0] sm:$0xff]
      %v665 = vld [vmem:[%s3 + $0x5b8] sm:$0xff]
      %v666 = vld [vmem:[%s3 + $0x5c0] sm:$0xff]
      %v667 = vld [vmem:[%s3 + $0x5c8] sm:$0xff]
      %v668 = vld [vmem:[%s3 + $0x5d0] sm:$0xff]
      %v669 = vld [vmem:[%s3 + $0x5d8] sm:$0xff]
      %v670 = vld [vmem:[%s3 + $0x5e0] sm:$0xff]
      %v671 = vld [vmem:[%s3 + $0x5e8] sm:$0xff]
      %v672 = vld [vmem:[%s3 + $0x5f0] sm:$0xff]
      %v673 = vld [vmem:[%s3 + $0x5f8] sm:$0xff]
      %v674 = vld [vmem:[%s3 + $0x600] sm:$0xff]
      %v675 = vld [vmem:[%s3 + $0x608] sm:$0xff]
      %v676 = vld [vmem:[%s3 + $0x610] sm:$0xff]
      %v677 = vld [vmem:[%s3 + $0x618] sm:$0xff]
      %v678 = vld [vmem:[%s3 + $0x620] sm:$0xff]
      %v679 = vld [vmem:[%s3 + $0x628] sm:$0xff]
      %v680 = vld [vmem:[%s3 + $0x630] sm:$0xff]
      %v681 = vld [vmem:[%s3 + $0x638] sm:$0xff]
      %v682 = vld [vmem:[%s3 + $0x640] sm:$0xff]
      %v683 = vld [vmem:[%s3 + $0x648] sm:$0xff]
      %v684 = vld [vmem:[%s3 + $0x650] sm:$0xff]
      %v685 = vld [vmem:[%s3 + $0x658] sm:$0xff]
      %v686 = vld [vmem:[%s3 + $0x660] sm:$0xff]
      %v687 = vld [vmem:[%s3 + $0x668] sm:$0xff]
      %v688 = vld [vmem:[%s3 + $0x670] sm:$0xff]
      %v689 = vld [vmem:[%s3 + $0x678] sm:$0xff]
      %v690 = vld [vmem:[%s3 + $0x680] sm:$0xff]
      %v691 = vld [vmem:[%s3 + $0x688] sm:$0xff]
      %v692 = vld [vmem:[%s3 + $0x690] sm:$0xff]
      %v693 = vld [vmem:[%s3 + $0x698] sm:$0xff]
      %v694 = vld [vmem:[%s3 + $0x6a0] sm:$0xff]
      %v695 = vld [vmem:[%s3 + $0x6a8] sm:$0xff]
      %v696 = vld [vmem:[%s3 + $0x6b0] sm:$0xff]
      %v697 = vld [vmem:[%s3 + $0x6b8] sm:$0xff]
      %v698 = vld [vmem:[%s3 + $0x6c0] sm:$0xff]
      %v699 = vld [vmem:[%s3 + $0x6c8] sm:$0xff]
      %v700 = vld [vmem:[%s3 + $0x6d0] sm:$0xff]
      %v701 = vld [vmem:[%s3 + $0x6d8] sm:$0xff]
      %v702 = vld [vmem:[%s3 + $0x6e0] sm:$0xff]
      %v703 = vld [vmem:[%s3 + $0x6e8] sm:$0xff]
      %v704 = vld [vmem:[%s3 + $0x6f0] sm:$0xff]
      %v705 = vld [vmem:[%s3 + $0x6f8] sm:$0xff]
      %v706 = vld [vmem:[%s3 + $0x700] sm:$0xff]
      %v707 = vld [vmem:[%s3 + $0x708] sm:$0xff]
      %v708 = vld [vmem:[%s3 + $0x710] sm:$0xff]
      %v709 = vld [vmem:[%s3 + $0x718] sm:$0xff]
      %v710 = vld [vmem:[%s3 + $0x720] sm:$0xff]
      %v711 = vld [vmem:[%s3 + $0x728] sm:$0xff]
      %v712 = vld [vmem:[%s3 + $0x730] sm:$0xff]
      %v713 = vld [vmem:[%s3 + $0x738] sm:$0xff]
      %v714 = vld [vmem:[%s3 + $0x740] sm:$0xff]
      %v715 = vld [vmem:[%s3 + $0x748] sm:$0xff]
      %v716 = vld [vmem:[%s3 + $0x750] sm:$0xff]
      %v717 = vld [vmem:[%s3 + $0x758] sm:$0xff]
      %v718 = vld [vmem:[%s3 + $0x760] sm:$0xff]
      %v719 = vld [vmem:[%s3 + $0x768] sm:$0xff]
      %v720 = vld [vmem:[%s3 + $0x770] sm:$0xff]
      %v721 = vld [vmem:[%s3 + $0x778] sm:$0xff]
      %v722 = vld [vmem:[%s3 + $0x780] sm:$0xff]
      %v723 = vld [vmem:[%s3 + $0x788] sm:$0xff]
      %v724 = vld [vmem:[%s3 + $0x790] sm:$0xff]
      %v725 = vld [vmem:[%s3 + $0x798] sm:$0xff]
      %v726 = vld [vmem:[%s3 + $0x7a0] sm:$0xff]
      %v727 = vld [vmem:[%s3 + $0x7a8] sm:$0xff]
      %v728 = vld [vmem:[%s3 + $0x7b0] sm:$0xff]
      %v729 = vld [vmem:[%s3 + $0x7b8] sm:$0xff]
      %v730 = vld [vmem:[%s3 + $0x7c0] sm:$0xff]
      %v731 = vld [vmem:[%s3 + $0x7c8] sm:$0xff]
      %v732 = vld [vmem:[%s3 + $0x7d0] sm:$0xff]
      %v733 = vld [vmem:[%s3 + $0x7d8] sm:$0xff]
      %v734 = vld [vmem:[%s3 + $0x7e0] sm:$0xff]
      %v735 = vld [vmem:[%s3 + $0x7e8] sm:$0xff]
      %v736 = vld [vmem:[%s3 + $0x7f0] sm:$0xff]
      %v737 = vld [vmem:[%s3 + $0x7f8] sm:$0xff]
      %v738 = vld [vmem:[%s3 + $0x800] sm:$0xff]
      %v739 = vld [vmem:[%s3 + $0x808] sm:$0xff]
      %v740 = vld [vmem:[%s3 + $0x810] sm:$0xff]
      %v741 = vld [vmem:[%s3 + $0x818] sm:$0xff]
      %v742 = vld [vmem:[%s3 + $0x820] sm:$0xff]
      %v743 = vld [vmem:[%s3 + $0x828] sm:$0xff]
      %v744 = vld [vmem:[%s3 + $0x830] sm:$0xff]
      %v745 = vld [vmem:[%s3 + $0x838] sm:$0xff]
      %v746 = vld [vmem:[%s3 + $0x840] sm:$0xff]
      %v747 = vld [vmem:[%s3 + $0x848] sm:$0xff]
      %v748 = vld [vmem:[%s3 + $0x850] sm:$0xff]
      %v749 = vld [vmem:[%s3 + $0x858] sm:$0xff]
      %v750 = vld [vmem:[%s3 + $0x860] sm:$0xff]
      %v751 = vld [vmem:[%s3 + $0x868] sm:$0xff]
      %v752 = vld [vmem:[%s3 + $0x870] sm:$0xff]
      %v753 = vld [vmem:[%s3 + $0x878] sm:$0xff]
      %v754 = vld [vmem:[%s3 + $0x880] sm:$0xff]
      %v755 = vld [vmem:[%s3 + $0x888] sm:$0xff]
      %v756 = vld [vmem:[%s3 + $0x890] sm:$0xff]
      %v757 = vld [vmem:[%s3 + $0x898] sm:$0xff]
      %v758 = vld [vmem:[%s3 + $0x8a0] sm:$0xff]
      %v759 = vld [vmem:[%s3 + $0x8a8] sm:$0xff]
      %v760 = vld [vmem:[%s3 + $0x8b0] sm:$0xff]
      %v761 = vld [vmem:[%s3 + $0x8b8] sm:$0xff]
      %v762 = vld [vmem:[%s3 + $0x8c0] sm:$0xff]
      %v763 = vld [vmem:[%s3 + $0x8c8] sm:$0xff]
      %v764 = vld [vmem:[%s3 + $0x8d0] sm:$0xff]
      %v765 = vld [vmem:[%s3 + $0x8d8] sm:$0xff]
      %v766 = vld [vmem:[%s3 + $0x8e0] sm:$0xff]
      %v767 = vld [vmem:[%s3 + $0x8e8] sm:$0xff]
      %v768 = vld [vmem:[%s3 + $0x8f0] sm:$0xff]
      %v769 = vld [vmem:[%s3 + $0x8f8] sm:$0xff]
      %v770 = vld [vmem:[%s3 + $0x900] sm:$0xff]
      %v771 = vld [vmem:[%s3 + $0x908] sm:$0xff]
      %v772 = vld [vmem:[%s3 + $0x910] sm:$0xff]
      %v773 = vld [vmem:[%s3 + $0x918] sm:$0xff]
      %v774 = vld [vmem:[%s3 + $0x920] sm:$0xff]
      %v775 = vld [vmem:[%s3 + $0x928] sm:$0xff]
      %v776 = vld [vmem:[%s3 + $0x930] sm:$0xff]
      %v777 = vld [vmem:[%s3 + $0x938] sm:$0xff]
      %v778 = vld [vmem:[%s3 + $0x940] sm:$0xff]
      %v779 = vld [vmem:[%s3 + $0x948] sm:$0xff]
      %v780 = vld [vmem:[%s3 + $0x950] sm:$0xff]
      %v781 = vld [vmem:[%s3 + $0x958] sm:$0xff]
      %v782 = vld [vmem:[%s3 + $0x960] sm:$0xff]
      %v783 = vld [vmem:[%s3 + $0x968] sm:$0xff]
      %v784 = vld [vmem:[%s3 + $0x970] sm:$0xff]
      %v785 = vld [vmem:[%s3 + $0x978] sm:$0xff]
      %v786 = vld [vmem:[%s3 + $0x980] sm:$0xff]
      %v787 = vld [vmem:[%s3 + $0x988] sm:$0xff]
      %v788 = vld [vmem:[%s3 + $0x990] sm:$0xff]
      %v789 = vld [vmem:[%s3 + $0x998] sm:$0xff]
      %v790 = vld [vmem:[%s3 + $0x9a0] sm:$0xff]
      %v791 = vld [vmem:[%s3 + $0x9a8] sm:$0xff]
      %v792 = vld [vmem:[%s3 + $0x9b0] sm:$0xff]
      %v793 = vld [vmem:[%s3 + $0x9b8] sm:$0xff]
      %v794 = vld [vmem:[%s3 + $0x9c0] sm:$0xff]
      %v795 = vld [vmem:[%s3 + $0x9c8] sm:$0xff]
      %v796 = vld [vmem:[%s3 + $0x9d0] sm:$0xff]
      %v797 = vld [vmem:[%s3 + $0x9d8] sm:$0xff]
      %v798 = vld [vmem:[%s3 + $0x9e0] sm:$0xff]
      %v799 = vld [vmem:[%s3 + $0x9e8] sm:$0xff]
      %v800 = vld [vmem:[%s3 + $0x9f0] sm:$0xff]
      %v801 = vld [vmem:[%s3 + $0x9f8] sm:$0xff]
      %v802 = vld [vmem:[%s3 + $0xa00] sm:$0xff]
      %v803 = vld [vmem:[%s3 + $0xa08] sm:$0xff]
      %v804 = vld [vmem:[%s3 + $0xa10] sm:$0xff]
      %v805 = vld [vmem:[%s3 + $0xa18] sm:$0xff]
      %v806 = vld [vmem:[%s3 + $0xa20] sm:$0xff]
      %v807 = vld [vmem:[%s3 + $0xa28] sm:$0xff]
      %v808 = vld [vmem:[%s3 + $0xa30] sm:$0xff]
      %v809 = vld [vmem:[%s3 + $0xa38] sm:$0xff]
      %v810 = vld [vmem:[%s3 + $0xa40] sm:$0xff]
      %v811 = vld [vmem:[%s3 + $0xa48] sm:$0xff]
      %v812 = vld [vmem:[%s3 + $0xa50] sm:$0xff]
      %v813 = vld [vmem:[%s3 + $0xa58] sm:$0xff]
      %v814 = vld [vmem:[%s3 + $0xa60] sm:$0xff]
      %v815 = vld [vmem:[%s3 + $0xa68] sm:$0xff]
      %v816 = vld [vmem:[%s3 + $0xa70] sm:$0xff]
      %v817 = vld [vmem:[%s3 + $0xa78] sm:$0xff]
      %v818 = vld [vmem:[%s3 + $0xa80] sm:$0xff]
      %v819 = vld [vmem:[%s3 + $0xa88] sm:$0xff]
      %v820 = vld [vmem:[%s3 + $0xa90] sm:$0xff]
      %v821 = vld [vmem:[%s3 + $0xa98] sm:$0xff]
      %v822 = vld [vmem:[%s3 + $0xaa0] sm:$0xff]
      %v823 = vld [vmem:[%s3 + $0xaa8] sm:$0xff]
      %v824 = vld [vmem:[%s3 + $0xab0] sm:$0xff]
      %v825 = vld [vmem:[%s3 + $0xab8] sm:$0xff]
      %v826 = vld [vmem:[%s3 + $0xac0] sm:$0xff]
      %v827 = vld [vmem:[%s3 + $0xac8] sm:$0xff]
      %v828 = vld [vmem:[%s3 + $0xad0] sm:$0xff]
      %v829 = vld [vmem:[%s3 + $0xad8] sm:$0xff]
      %v830 = vld [vmem:[%s3 + $0xae0] sm:$0xff]
      %v831 = vld [vmem:[%s3 + $0xae8] sm:$0xff]
      %v832 = vld [vmem:[%s3 + $0xaf0] sm:$0xff]
      %v833 = vld [vmem:[%s3 + $0xaf8] sm:$0xff]
      %v834 = vld [vmem:[%s3 + $0xb00] sm:$0xff]
      %v835 = vld [vmem:[%s3 + $0xb08] sm:$0xff]
      %v836 = vld [vmem:[%s3 + $0xb10] sm:$0xff]
      %v837 = vld [vmem:[%s3 + $0xb18] sm:$0xff]
      %v838 = vld [vmem:[%s3 + $0xb20] sm:$0xff]
      %v839 = vld [vmem:[%s3 + $0xb28] sm:$0xff]
      %v840 = vld [vmem:[%s3 + $0xb30] sm:$0xff]
      %v841 = vld [vmem:[%s3 + $0xb38] sm:$0xff]
      %v842 = vld [vmem:[%s3 + $0xb40] sm:$0xff]
      %v843 = vld [vmem:[%s3 + $0xb48] sm:$0xff]
      %v844 = vld [vmem:[%s3 + $0xb50] sm:$0xff]
      %v845 = vld [vmem:[%s3 + $0xb58] sm:$0xff]
      %v846 = vld [vmem:[%s3 + $0xb60] sm:$0xff]
      %v847 = vld [vmem:[%s3 + $0xb68] sm:$0xff]
      %v848 = vld [vmem:[%s3 + $0xb70] sm:$0xff]
      %v849 = vld [vmem:[%s3 + $0xb78] sm:$0xff]
      %v850 = vld [vmem:[%s3 + $0xb80] sm:$0xff]
      %v851 = vld [vmem:[%s3 + $0xb88] sm:$0xff]
      %v852 = vld [vmem:[%s3 + $0xb90] sm:$0xff]
      %v853 = vld [vmem:[%s3 + $0xb98] sm:$0xff]
      %v854 = vld [vmem:[%s3 + $0xba0] sm:$0xff]
      %v855 = vld [vmem:[%s3 + $0xba8] sm:$0xff]
      %v856 = vld [vmem:[%s3 + $0xbb0] sm:$0xff]
      %v857 = vld [vmem:[%s3 + $0xbb8] sm:$0xff]
      %v858 = vld [vmem:[%s3 + $0xbc0] sm:$0xff]
      %v859 = vld [vmem:[%s3 + $0xbc8] sm:$0xff]
      %v860 = vld [vmem:[%s3 + $0xbd0] sm:$0xff]
      %v861 = vld [vmem:[%s3 + $0xbd8] sm:$0xff]
      %v862 = vld [vmem:[%s3 + $0xbe0] sm:$0xff]
      %v863 = vld [vmem:[%s3 + $0xbe8] sm:$0xff]
      %v864 = vld [vmem:[%s3 + $0xbf0] sm:$0xff]
      %v865 = vld [vmem:[%s3 + $0xbf8] sm:$0xff]
      %v866 = vld [vmem:[%s3 + $0xc00] sm:$0xff]
      %v867 = vld [vmem:[%s3 + $0xc08] sm:$0xff]
      %v868 = vld [vmem:[%s3 + $0xc10] sm:$0xff]
      %v869 = vld [vmem:[%s3 + $0xc18] sm:$0xff]
      %v870 = vld [vmem:[%s3 + $0xc20] sm:$0xff]
      %v871 = vld [vmem:[%s3 + $0xc28] sm:$0xff]
      %v872 = vld [vmem:[%s3 + $0xc30] sm:$0xff]
      %v873 = vld [vmem:[%s3 + $0xc38] sm:$0xff]
      %v874 = vld [vmem:[%s3 + $0xc40] sm:$0xff]
      %v875 = vld [vmem:[%s3 + $0xc48] sm:$0xff]
      %v876 = vld [vmem:[%s3 + $0xc50] sm:$0xff]
      %v877 = vld [vmem:[%s3 + $0xc58] sm:$0xff]
      %v878 = vld [vmem:[%s3 + $0xc60] sm:$0xff]
      %v879 = vld [vmem:[%s3 + $0xc68] sm:$0xff]
      %v880 = vld [vmem:[%s3 + $0xc70] sm:$0xff]
      %v881 = vld [vmem:[%s3 + $0xc78] sm:$0xff]
      %v882 = vld [vmem:[%s3 + $0xc80] sm:$0xff]
      %v883 = vld [vmem:[%s3 + $0xc88] sm:$0xff]
      %v884 = vld [vmem:[%s3 + $0xc90] sm:$0xff]
      %v885 = vld [vmem:[%s3 + $0xc98] sm:$0xff]
      %v886 = vld [vmem:[%s3 + $0xca0] sm:$0xff]
      %v887 = vld [vmem:[%s3 + $0xca8] sm:$0xff]
      %v888 = vld [vmem:[%s3 + $0xcb0] sm:$0xff]
      %v889 = vld [vmem:[%s3 + $0xcb8] sm:$0xff]
      %v890 = vld [vmem:[%s3 + $0xcc0] sm:$0xff]
      %v891 = vld [vmem:[%s3 + $0xcc8] sm:$0xff]
      %v892 = vld [vmem:[%s3 + $0xcd0] sm:$0xff]
      %v893 = vld [vmem:[%s3 + $0xcd8] sm:$0xff]
      %v894 = vld [vmem:[%s3 + $0xce0] sm:$0xff]
      %v895 = vld [vmem:[%s3 + $0xce8] sm:$0xff]
      %v896 = vld [vmem:[%s3 + $0xcf0] sm:$0xff]
      %v897 = vld [vmem:[%s3 + $0xcf8] sm:$0xff]
      %v898 = vld [vmem:[%s3 + $0xd00] sm:$0xff]
      %v899 = vld [vmem:[%s3 + $0xd08] sm:$0xff]
      %v900 = vld [vmem:[%s3 + $0xd10] sm:$0xff]
      %v901 = vld [vmem:[%s3 + $0xd18] sm:$0xff]
      %v902 = vld [vmem:[%s3 + $0xd20] sm:$0xff]
      %v903 = vld [vmem:[%s3 + $0xd28] sm:$0xff]
      %v904 = vld [vmem:[%s3 + $0xd30] sm:$0xff]
      %v905 = vld [vmem:[%s3 + $0xd38] sm:$0xff]
      %v906 = vld [vmem:[%s3 + $0xd40] sm:$0xff]
      %v907 = vld [vmem:[%s3 + $0xd48] sm:$0xff]
      %v908 = vld [vmem:[%s3 + $0xd50] sm:$0xff]
      %v909 = vld [vmem:[%s3 + $0xd58] sm:$0xff]
      %v910 = vld [vmem:[%s3 + $0xd60] sm:$0xff]
      %v911 = vld [vmem:[%s3 + $0xd68] sm:$0xff]
      %v912 = vld [vmem:[%s3 + $0xd70] sm:$0xff]
      %v913 = vld [vmem:[%s3 + $0xd78] sm:$0xff]
      %v914 = vld [vmem:[%s3 + $0xd80] sm:$0xff]
      %v915 = vld [vmem:[%s3 + $0xd88] sm:$0xff]
      %v916 = vld [vmem:[%s3 + $0xd90] sm:$0xff]
      %v917 = vld [vmem:[%s3 + $0xd98] sm:$0xff]
      %v918 = vld [vmem:[%s3 + $0xda0] sm:$0xff]
      %v919 = vld [vmem:[%s3 + $0xda8] sm:$0xff]
      %v920 = vld [vmem:[%s3 + $0xdb0] sm:$0xff]
      %v921 = vld [vmem:[%s3 + $0xdb8] sm:$0xff]
      %v922 = vld [vmem:[%s3 + $0xdc0] sm:$0xff]
      %v923 = vld [vmem:[%s3 + $0xdc8] sm:$0xff]
      %v924 = vld [vmem:[%s3 + $0xdd0] sm:$0xff]
      %v925 = vld [vmem:[%s3 + $0xdd8] sm:$0xff]
      %v926 = vld [vmem:[%s3 + $0xde0] sm:$0xff]
      %v927 = vld [vmem:[%s3 + $0xde8] sm:$0xff]
      %v928 = vld [vmem:[%s3 + $0xdf0] sm:$0xff]
      %v929 = vld [vmem:[%s3 + $0xdf8] sm:$0xff]
      %v930 = vld [vmem:[%s3 + $0xe00] sm:$0xff]
      %v931 = vld [vmem:[%s3 + $0xe08] sm:$0xff]
      %v932 = vld [vmem:[%s3 + $0xe10] sm:$0xff]
      %v933 = vld [vmem:[%s3 + $0xe18] sm:$0xff]
      %v934 = vld [vmem:[%s3 + $0xe20] sm:$0xff]
      %v935 = vld [vmem:[%s3 + $0xe28] sm:$0xff]
      %v936 = vld [vmem:[%s3 + $0xe30] sm:$0xff]
      %v937 = vld [vmem:[%s3 + $0xe38] sm:$0xff]
      %v938 = vld [vmem:[%s3 + $0xe40] sm:$0xff]
      %v939 = vld [vmem:[%s3 + $0xe48] sm:$0xff]
      %v940 = vld [vmem:[%s3 + $0xe50] sm:$0xff]
      %v941 = vld [vmem:[%s3 + $0xe58] sm:$0xff]
      %v942 = vld [vmem:[%s3 + $0xe60] sm:$0xff]
      %v943 = vld [vmem:[%s3 + $0xe68] sm:$0xff]
      %v944 = vld [vmem:[%s3 + $0xe70] sm:$0xff]
      %v945 = vld [vmem:[%s3 + $0xe78] sm:$0xff]
      %v946 = vld [vmem:[%s3 + $0xe80] sm:$0xff]
      %v947 = vld [vmem:[%s3 + $0xe88] sm:$0xff]
      %v948 = vld [vmem:[%s3 + $0xe90] sm:$0xff]
      %v949 = vld [vmem:[%s3 + $0xe98] sm:$0xff]
      %v950 = vld [vmem:[%s3 + $0xea0] sm:$0xff]
      %v951 = vld [vmem:[%s3 + $0xea8] sm:$0xff]
      %v952 = vld [vmem:[%s3 + $0xeb0] sm:$0xff]
      %v953 = vld [vmem:[%s3 + $0xeb8] sm:$0xff]
      %v954 = vld [vmem:[%s3 + $0xec0] sm:$0xff]
      %v955 = vld [vmem:[%s3 + $0xec8] sm:$0xff]
      %v956 = vld [vmem:[%s3 + $0xed0] sm:$0xff]
      %v957 = vld [vmem:[%s3 + $0xed8] sm:$0xff]
      %v958 = vld [vmem:[%s3 + $0xee0] sm:$0xff]
      %v959 = vld [vmem:[%s3 + $0xee8] sm:$0xff]
      %v960 = vld [vmem:[%s3 + $0xef0] sm:$0xff]
      %v961 = vld [vmem:[%s3 + $0xef8] sm:$0xff]
      %v962 = vld [vmem:[%s3 + $0xf00] sm:$0xff]
      %v963 = vld [vmem:[%s3 + $0xf08] sm:$0xff]
      %v964 = vld [vmem:[%s3 + $0xf10] sm:$0xff]
      %v965 = vld [vmem:[%s3 + $0xf18] sm:$0xff]
      %v966 = vld [vmem:[%s3 + $0xf20] sm:$0xff]
      %v967 = vld [vmem:[%s3 + $0xf28] sm:$0xff]
      %v968 = vld [vmem:[%s3 + $0xf30] sm:$0xff]
      %v969 = vld [vmem:[%s3 + $0xf38] sm:$0xff]
      %v970 = vld [vmem:[%s3 + $0xf40] sm:$0xff]
      %v971 = vld [vmem:[%s3 + $0xf48] sm:$0xff]
      %v972 = vld [vmem:[%s3 + $0xf50] sm:$0xff]
      %v973 = vld [vmem:[%s3 + $0xf58] sm:$0xff]
      %v974 = vld [vmem:[%s3 + $0xf60] sm:$0xff]
      %v975 = vld [vmem:[%s3 + $0xf68] sm:$0xff]
      %v976 = vld [vmem:[%s3 + $0xf70] sm:$0xff]
      %v977 = vld [vmem:[%s3 + $0xf78] sm:$0xff]
      %v978 = vld [vmem:[%s3 + $0xf80] sm:$0xff]
      %v979 = vld [vmem:[%s3 + $0xf88] sm:$0xff]
      %v980 = vld [vmem:[%s3 + $0xf90] sm:$0xff]
      %v981 = vld [vmem:[%s3 + $0xf98] sm:$0xff]
      %v982 = vld [vmem:[%s3 + $0xfa0] sm:$0xff]
      %v983 = vld [vmem:[%s3 + $0xfa8] sm:$0xff]
      %v984 = vld [vmem:[%s3 + $0xfb0] sm:$0xff]
      %v985 = vld [vmem:[%s3 + $0xfb8] sm:$0xff]
      %v986 = vld [vmem:[%s3 + $0xfc0] sm:$0xff]
      %v987 = vld [vmem:[%s3 + $0xfc8] sm:$0xff]
      %v988 = vld [vmem:[%s3 + $0xfd0] sm:$0xff]
      %v989 = vld [vmem:[%s3 + $0xfd8] sm:$0xff]
      %v990 = vld [vmem:[%s3 + $0xfe0] sm:$0xff]
      %v991 = vld [vmem:[%s3 + $0xfe8] sm:$0xff]
      %v992 = vld [vmem:[%s3 + $0xff0] sm:$0xff]
      %v993 = vld [vmem:[%s3 + $0xff8] sm:$0xff]
      %v994 = vld [vmem:[%s3 + $0x1000] sm:$0xff]
      %v995 = vld [vmem:[%s3 + $0x1008] sm:$0xff]
      %v996 = vld [vmem:[%s3 + $0x1010] sm:$0xff]
      %v997 = vld [vmem:[%s3 + $0x1018] sm:$0xff]
      %v998 = vld [vmem:[%s3 + $0x1020] sm:$0xff]
      %v999 = vld [vmem:[%s3 + $0x1028] sm:$0xff]
      %v1000 = vld [vmem:[%s3 + $0x1030] sm:$0xff]
      %v1001 = vld [vmem:[%s3 + $0x1038] sm:$0xff]
      %v1002 = vld [vmem:[%s3 + $0x1040] sm:$0xff]
      %v1003 = vld [vmem:[%s3 + $0x1048] sm:$0xff]
      %v1004 = vld [vmem:[%s3 + $0x1050] sm:$0xff]
      %v1005 = vld [vmem:[%s3 + $0x1058] sm:$0xff]
      %v1006 = vld [vmem:[%s3 + $0x1060] sm:$0xff]
      %v1007 = vld [vmem:[%s3 + $0x1068] sm:$0xff]
      %v1008 = vld [vmem:[%s3 + $0x1070] sm:$0xff]
      %v1009 = vld [vmem:[%s3 + $0x1078] sm:$0xff]
      %v1010 = vld [vmem:[%s3 + $0x1080] sm:$0xff]
      %v1011 = vld [vmem:[%s3 + $0x1088] sm:$0xff]
      %v1012 = vld [vmem:[%s3 + $0x1090] sm:$0xff]
      %v1013 = vld [vmem:[%s3 + $0x1098] sm:$0xff]
      %v1014 = vld [vmem:[%s3 + $0x10a0] sm:$0xff]
      %v1015 = vld [vmem:[%s3 + $0x10a8] sm:$0xff]
      %v1016 = vld [vmem:[%s3 + $0x10b0] sm:$0xff]
      %v1017 = vld [vmem:[%s3 + $0x10b8] sm:$0xff]
      %v1018 = vld [vmem:[%s3 + $0x10c0] sm:$0xff]
      %v1019 = vld [vmem:[%s3 + $0x10c8] sm:$0xff]
      %v1020 = vld [vmem:[%s3 + $0x10d0] sm:$0xff]
      %v1021 = vld [vmem:[%s3 + $0x10d8] sm:$0xff]
      %v1022 = vld [vmem:[%s3 + $0x10e0] sm:$0xff]
      %v1023 = vld [vmem:[%s3 + $0x10e8] sm:$0xff]
      %v1024 = vld [vmem:[%s3 + $0x10f0] sm:$0xff]
      %v1025 = vld [vmem:[%s3 + $0x10f8] sm:$0xff]
      %v1026 = vld [vmem:[%s3 + $0x1100] sm:$0xff]
      %v1027 = vld [vmem:[%s3 + $0x1108] sm:$0xff]
      %v1028 = vld [vmem:[%s3 + $0x1110] sm:$0xff]
      %v1029 = vld [vmem:[%s3 + $0x1118] sm:$0xff]
      %v1030 = vld [vmem:[%s3 + $0x1120] sm:$0xff]
      %v1031 = vld [vmem:[%s3 + $0x1128] sm:$0xff]
      %v1032 = vld [vmem:[%s3 + $0x1130] sm:$0xff]
      %v1033 = vld [vmem:[%s3 + $0x1138] sm:$0xff]
      %v1034 = vld [vmem:[%s3 + $0x1140] sm:$0xff]
      %v1035 = vld [vmem:[%s3 + $0x1148] sm:$0xff]
      %v1036 = vld [vmem:[%s3 + $0x1150] sm:$0xff]
      %v1037 = vld [vmem:[%s3 + $0x1158] sm:$0xff]
      %v1038 = vld [vmem:[%s3 + $0x1160] sm:$0xff]
      %v1039 = vld [vmem:[%s3 + $0x1168] sm:$0xff]
      %v1040 = vld [vmem:[%s3 + $0x1170] sm:$0xff]
      %v1041 = vld [vmem:[%s3 + $0x1178] sm:$0xff]
      %v1042 = vld [vmem:[%s3 + $0x1180] sm:$0xff]
      %v1043 = vld [vmem:[%s3 + $0x1188] sm:$0xff]
      %v1044 = vld [vmem:[%s3 + $0x1190] sm:$0xff]
      %v1045 = vld [vmem:[%s3 + $0x1198] sm:$0xff]
      %v1046 = vld [vmem:[%s3 + $0x11a0] sm:$0xff]
      %v1047 = vld [vmem:[%s3 + $0x11a8] sm:$0xff]
      %v1048 = vld [vmem:[%s3 + $0x11b0] sm:$0xff]
      %v1049 = vld [vmem:[%s3 + $0x11b8] sm:$0xff]
      %v1050 = vld [vmem:[%s3 + $0x11c0] sm:$0xff]
      %v1051 = vld [vmem:[%s3 + $0x11c8] sm:$0xff]
      %v1052 = vld [vmem:[%s3 + $0x11d0] sm:$0xff]
      %v1053 = vld [vmem:[%s3 + $0x11d8] sm:$0xff]
      %v1054 = vld [vmem:[%s3 + $0x11e0] sm:$0xff]
      %v1055 = vld [vmem:[%s3 + $0x11e8] sm:$0xff]
      %v1056 = vld [vmem:[%s3 + $0x11f0] sm:$0xff]
      %v1057 = vld [vmem:[%s3 + $0x11f8] sm:$0xff]
      %1058 = vmatprep.subr.mxu0 %v753
      %1059 = vmatpush1.msra.mxu0 %v752
      %1060 = vmatprep.subr.mxu0 %v735
      %1061 = vmatpush1.msra.mxu0 %v734
      %1062 = vmatprep.subr.mxu0 %v717
      %1063 = vmatpush1.msra.mxu0 %v716
      %1064 = vmatprep.subr.mxu0 %v699
      %1065 = vmatpush1.msra.mxu0 %v698
      %1066 = vmatprep.subr.mxu0 %v681
      %1067 = vmatpush1.msra.mxu0 %v680
      %1068 = vmatprep.subr.mxu0 %v663
      %1069 = vmatpush1.msra.mxu0 %v662
      %1070 = vmatprep.subr.mxu0 %v645
      %1071 = vmatpush1.msra.mxu0 %v644
      %1072 = vmatprep.subr.mxu0 %v627
      %1073 = vmatpush1.msra.mxu0 %v626
      %1074 = vmatprep.subr.mxu0 %v609
      %1075 = vmatpush1.msra.mxu0 %v608
      %1076 = vmatprep.subr.mxu0 %v591
      %1077 = vmatpush1.msra.mxu0 %v590
      %1078 = vmatprep.subr.mxu0 %v573
      %1079 = vmatpush1.msra.mxu0 %v572
      %1080 = vmatprep.subr.mxu0 %v555
      %1081 = vmatpush1.msra.mxu0 %v554
      %1082 = vmatprep.subr.mxu0 %v537
      %1083 = vmatpush1.msra.mxu0 %v536
      %1084 = vmatprep.subr.mxu0 %v519
      %1085 = vmatpush1.msra.mxu0 %v518
      %1086 = vmatprep.subr.mxu0 %v501
      %1087 = vmatpush1.msra.mxu0 %v500
      %1088 = vmatprep.subr.mxu0 %v483
      %1089 = vmatpush1.msra.mxu0 %v482
      %1090 = vmatprep.subr.mxu0 %v1041
      %1091 = vmatpush2.msra.mxu0 %v1040
      %1092 = vmatprep.subr.mxu0 %v1023
      %1093 = vmatpush2.msra.mxu0 %v1022
      %1094 = vmatprep.subr.mxu0 %v1005
      %1095 = vmatpush2.msra.mxu0 %v1004
      %1096 = vmatprep.subr.mxu0 %v987
      %1097 = vmatpush2.msra.mxu0 %v986
      %1098 = vmatprep.subr.mxu0 %v969
      %1099 = vmatpush2.msra.mxu0 %v968
      %1100 = vmatprep.subr.mxu0 %v951
      %1101 = vmatpush2.msra.mxu0 %v950
      %1102 = vmatprep.subr.mxu0 %v933
      %1103 = vmatpush2.msra.mxu0 %v932
      %1104 = vmatprep.subr.mxu0 %v915
      %1105 = vmatpush2.msra.mxu0 %v914
      %1106 = vmatprep.subr.mxu0 %v897
      %1107 = vmatpush2.msra.mxu0 %v896
      %1108 = vmatprep.subr.mxu0 %v879
      %1109 = vmatpush2.msra.mxu0 %v878
      %1110 = vmatprep.subr.mxu0 %v861
      %1111 = vmatpush2.msra.mxu0 %v860
      %1112 = vmatprep.subr.mxu0 %v843
      %1113 = vmatpush2.msra.mxu0 %v842
      %1114 = vmatprep.subr.mxu0 %v825
      %1115 = vmatpush2.msra.mxu0 %v824
      %1116 = vmatprep.subr.mxu0 %v807
      %1117 = vmatpush2.msra.mxu0 %v806
      %1118 = vmatprep.subr.mxu0 %v789
      %1119 = vmatpush2.msra.mxu0 %v788
      %1120 = vmatprep.subr.mxu0 %v771
      %1121 = vmatpush2.msra.mxu0 %v770
      %1122 = vmatprep.mubr.f32.mxu0 %v481
      %1123 = vmatmul.mubr.f32.gmra.mxu0 %v480
      %v1124 = vpop.f32.mrf.mxu0
      %v1125 = vadd.f32 0.0, %v1124
      %v1126 = vpop.f32.mrf.mxu0
      %v1127 = vadd.f32 0.0, %v1126
      %1128 = vdwg.mxu0
      %1129 = vmatprep.subr.mxu0 %v755
      %1130 = vmatpush1.msra.mxu0 %v754
      %1131 = vmatprep.subr.mxu0 %v737
      %1132 = vmatpush1.msra.mxu0 %v736
      %1133 = vmatprep.subr.mxu0 %v719
      %1134 = vmatpush1.msra.mxu0 %v718
      %1135 = vmatprep.subr.mxu0 %v701
      %1136 = vmatpush1.msra.mxu0 %v700
      %1137 = vmatprep.subr.mxu0 %v683
      %1138 = vmatpush1.msra.mxu0 %v682
      %1139 = vmatprep.subr.mxu0 %v665
      %1140 = vmatpush1.msra.mxu0 %v664
      %1141 = vmatprep.subr.mxu0 %v647
      %1142 = vmatpush1.msra.mxu0 %v646
      %1143 = vmatprep.subr.mxu0 %v629
      %1144 = vmatpush1.msra.mxu0 %v628
      %1145 = vmatprep.subr.mxu0 %v611
      %1146 = vmatpush1.msra.mxu0 %v610
      %1147 = vmatprep.subr.mxu0 %v593
      %1148 = vmatpush1.msra.mxu0 %v592
      %1149 = vmatprep.subr.mxu0 %v575
      %1150 = vmatpush1.msra.mxu0 %v574
      %1151 = vmatprep.subr.mxu0 %v557
      %1152 = vmatpush1.msra.mxu0 %v556
      %1153 = vmatprep.subr.mxu0 %v539
      %1154 = vmatpush1.msra.mxu0 %v538
      %1155 = vmatprep.subr.mxu0 %v521
      %1156 = vmatpush1.msra.mxu0 %v520
      %1157 = vmatprep.subr.mxu0 %v503
      %1158 = vmatpush1.msra.mxu0 %v502
      %1159 = vmatprep.subr.mxu0 %v485
      %1160 = vmatpush1.msra.mxu0 %v484
      %1161 = vmatprep.subr.mxu0 %v1043
      %1162 = vmatpush2.msra.mxu0 %v1042
      %1163 = vmatprep.subr.mxu0 %v1025
      %1164 = vmatpush2.msra.mxu0 %v1024
      %1165 = vmatprep.subr.mxu0 %v1007
      %1166 = vmatpush2.msra.mxu0 %v1006
      %1167 = vmatprep.subr.mxu0 %v989
      %1168 = vmatpush2.msra.mxu0 %v988
      %1169 = vmatprep.subr.mxu0 %v971
      %1170 = vmatpush2.msra.mxu0 %v970
      %1171 = vmatprep.subr.mxu0 %v953
      %1172 = vmatpush2.msra.mxu0 %v952
      %1173 = vmatprep.subr.mxu0 %v935
      %1174 = vmatpush2.msra.mxu0 %v934
      %1175 = vmatprep.subr.mxu0 %v917
      %1176 = vmatpush2.msra.mxu0 %v916
      %1177 = vmatprep.subr.mxu0 %v899
      %1178 = vmatpush2.msra.mxu0 %v898
      %1179 = vmatprep.subr.mxu0 %v881
      %1180 = vmatpush2.msra.mxu0 %v880
      %1181 = vmatprep.subr.mxu0 %v863
      %1182 = vmatpush2.msra.mxu0 %v862
      %1183 = vmatprep.subr.mxu0 %v845
      %1184 = vmatpush2.msra.mxu0 %v844
      %1185 = vmatprep.subr.mxu0 %v827
      %1186 = vmatpush2.msra.mxu0 %v826
      %1187 = vmatprep.subr.mxu0 %v809
      %1188 = vmatpush2.msra.mxu0 %v808
      %1189 = vmatprep.subr.mxu0 %v791
      %1190 = vmatpush2.msra.mxu0 %v790
      %1191 = vmatprep.subr.mxu0 %v773
      %1192 = vmatpush2.msra.mxu0 %v772
      %1193 = vmatprep.mubr.f32.mxu0 %v481
      %1194 = vmatmul.mubr.f32.gmra.mxu0 %v480
      %v1195 = vpop.f32.mrf.mxu0
      %v1196 = vadd.f32 0.0, %v1195
      %v1197 = vpop.f32.mrf.mxu0
      %v1198 = vadd.f32 0.0, %v1197
      %1199 = vdwg.mxu0
      %1200 = vmatprep.subr.mxu0 %v757
      %1201 = vmatpush1.msra.mxu0 %v756
      %1202 = vmatprep.subr.mxu0 %v739
      %1203 = vmatpush1.msra.mxu0 %v738
      %1204 = vmatprep.subr.mxu0 %v721
      %1205 = vmatpush1.msra.mxu0 %v720
      %1206 = vmatprep.subr.mxu0 %v703
      %1207 = vmatpush1.msra.mxu0 %v702
      %1208 = vmatprep.subr.mxu0 %v685
      %1209 = vmatpush1.msra.mxu0 %v684
      %1210 = vmatprep.subr.mxu0 %v667
      %1211 = vmatpush1.msra.mxu0 %v666
      %1212 = vmatprep.subr.mxu0 %v649
      %1213 = vmatpush1.msra.mxu0 %v648
      %1214 = vmatprep.subr.mxu0 %v631
      %1215 = vmatpush1.msra.mxu0 %v630
      %1216 = vmatprep.subr.mxu0 %v613
      %1217 = vmatpush1.msra.mxu0 %v612
      %1218 = vmatprep.subr.mxu0 %v595
      %1219 = vmatpush1.msra.mxu0 %v594
      %1220 = vmatprep.subr.mxu0 %v577
      %1221 = vmatpush1.msra.mxu0 %v576
      %1222 = vmatprep.subr.mxu0 %v559
      %1223 = vmatpush1.msra.mxu0 %v558
      %1224 = vmatprep.subr.mxu0 %v541
      %1225 = vmatpush1.msra.mxu0 %v540
      %1226 = vmatprep.subr.mxu0 %v523
      %1227 = vmatpush1.msra.mxu0 %v522
      %1228 = vmatprep.subr.mxu0 %v505
      %1229 = vmatpush1.msra.mxu0 %v504
      %1230 = vmatprep.subr.mxu0 %v487
      %1231 = vmatpush1.msra.mxu0 %v486
      %1232 = vmatprep.subr.mxu0 %v1045
      %1233 = vmatpush2.msra.mxu0 %v1044
      %1234 = vmatprep.subr.mxu0 %v1027
      %1235 = vmatpush2.msra.mxu0 %v1026
      %1236 = vmatprep.subr.mxu0 %v1009
      %1237 = vmatpush2.msra.mxu0 %v1008
      %1238 = vmatprep.subr.mxu0 %v991
      %1239 = vmatpush2.msra.mxu0 %v990
      %1240 = vmatprep.subr.mxu0 %v973
      %1241 = vmatpush2.msra.mxu0 %v972
      %1242 = vmatprep.subr.mxu0 %v955
      %1243 = vmatpush2.msra.mxu0 %v954
      %1244 = vmatprep.subr.mxu0 %v937
      %1245 = vmatpush2.msra.mxu0 %v936
      %1246 = vmatprep.subr.mxu0 %v919
      %1247 = vmatpush2.msra.mxu0 %v918
      %1248 = vmatprep.subr.mxu0 %v901
      %1249 = vmatpush2.msra.mxu0 %v900
      %1250 = vmatprep.subr.mxu0 %v883
      %1251 = vmatpush2.msra.mxu0 %v882
      %1252 = vmatprep.subr.mxu0 %v865
      %1253 = vmatpush2.msra.mxu0 %v864
      %1254 = vmatprep.subr.mxu0 %v847
      %1255 = vmatpush2.msra.mxu0 %v846
      %1256 = vmatprep.subr.mxu0 %v829
      %1257 = vmatpush2.msra.mxu0 %v828
      %1258 = vmatprep.subr.mxu0 %v811
      %1259 = vmatpush2.msra.mxu0 %v810
      %1260 = vmatprep.subr.mxu0 %v793
      %1261 = vmatpush2.msra.mxu0 %v792
      %1262 = vmatprep.subr.mxu0 %v775
      %1263 = vmatpush2.msra.mxu0 %v774
      %1264 = vmatprep.mubr.f32.mxu0 %v481
      %1265 = vmatmul.mubr.f32.gmra.mxu0 %v480
      %v1266 = vpop.f32.mrf.mxu0
      %v1267 = vadd.f32 0.0, %v1266
      %v1268 = vpop.f32.mrf.mxu0
      %v1269 = vadd.f32 0.0, %v1268
      %1270 = vdwg.mxu0
      %1271 = vmatprep.subr.mxu0 %v759
      %1272 = vmatpush1.msra.mxu0 %v758
      %1273 = vmatprep.subr.mxu0 %v741
      %1274 = vmatpush1.msra.mxu0 %v740
      %1275 = vmatprep.subr.mxu0 %v723
      %1276 = vmatpush1.msra.mxu0 %v722
      %1277 = vmatprep.subr.mxu0 %v705
      %1278 = vmatpush1.msra.mxu0 %v704
      %1279 = vmatprep.subr.mxu0 %v687
      %1280 = vmatpush1.msra.mxu0 %v686
      %1281 = vmatprep.subr.mxu0 %v669
      %1282 = vmatpush1.msra.mxu0 %v668
      %1283 = vmatprep.subr.mxu0 %v651
      %1284 = vmatpush1.msra.mxu0 %v650
      %1285 = vmatprep.subr.mxu0 %v633
      %1286 = vmatpush1.msra.mxu0 %v632
      %1287 = vmatprep.subr.mxu0 %v615
      %1288 = vmatpush1.msra.mxu0 %v614
      %1289 = vmatprep.subr.mxu0 %v597
      %1290 = vmatpush1.msra.mxu0 %v596
      %1291 = vmatprep.subr.mxu0 %v579
      %1292 = vmatpush1.msra.mxu0 %v578
      %1293 = vmatprep.subr.mxu0 %v561
      %1294 = vmatpush1.msra.mxu0 %v560
      %1295 = vmatprep.subr.mxu0 %v543
      %1296 = vmatpush1.msra.mxu0 %v542
      %1297 = vmatprep.subr.mxu0 %v525
      %1298 = vmatpush1.msra.mxu0 %v524
      %1299 = vmatprep.subr.mxu0 %v507
      %1300 = vmatpush1.msra.mxu0 %v506
      %1301 = vmatprep.subr.mxu0 %v489
      %1302 = vmatpush1.msra.mxu0 %v488
      %1303 = vmatprep.subr.mxu0 %v1047
      %1304 = vmatpush2.msra.mxu0 %v1046
      %1305 = vmatprep.subr.mxu0 %v1029
      %1306 = vmatpush2.msra.mxu0 %v1028
      %1307 = vmatprep.subr.mxu0 %v1011
      %1308 = vmatpush2.msra.mxu0 %v1010
      %1309 = vmatprep.subr.mxu0 %v993
      %1310 = vmatpush2.msra.mxu0 %v992
      %1311 = vmatprep.subr.mxu0 %v975
      %1312 = vmatpush2.msra.mxu0 %v974
      %1313 = vmatprep.subr.mxu0 %v957
      %1314 = vmatpush2.msra.mxu0 %v956
      %1315 = vmatprep.subr.mxu0 %v939
      %1316 = vmatpush2.msra.mxu0 %v938
      %1317 = vmatprep.subr.mxu0 %v921
      %1318 = vmatpush2.msra.mxu0 %v920
      %1319 = vmatprep.subr.mxu0 %v903
      %1320 = vmatpush2.msra.mxu0 %v902
      %1321 = vmatprep.subr.mxu0 %v885
      %1322 = vmatpush2.msra.mxu0 %v884
      %1323 = vmatprep.subr.mxu0 %v867
      %1324 = vmatpush2.msra.mxu0 %v866
      %1325 = vmatprep.subr.mxu0 %v849
      %1326 = vmatpush2.msra.mxu0 %v848
      %1327 = vmatprep.subr.mxu0 %v831
      %1328 = vmatpush2.msra.mxu0 %v830
      %1329 = vmatprep.subr.mxu0 %v813
      %1330 = vmatpush2.msra.mxu0 %v812
      %1331 = vmatprep.subr.mxu0 %v795
      %1332 = vmatpush2.msra.mxu0 %v794
      %1333 = vmatprep.subr.mxu0 %v777
      %1334 = vmatpush2.msra.mxu0 %v776
      %1335 = vmatprep.mubr.f32.mxu0 %v481
      %1336 = vmatmul.mubr.f32.gmra.mxu0 %v480
      %v1337 = vpop.f32.mrf.mxu0
      %v1338 = vadd.f32 0.0, %v1337
      %v1339 = vpop.f32.mrf.mxu0
      %v1340 = vadd.f32 0.0, %v1339
      %1341 = vdwg.mxu0
      %1342 = vmatprep.subr.mxu0 %v761
      %1343 = vmatpush1.msra.mxu0 %v760
      %1344 = vmatprep.subr.mxu0 %v743
      %1345 = vmatpush1.msra.mxu0 %v742
      %1346 = vmatprep.subr.mxu0 %v725
      %1347 = vmatpush1.msra.mxu0 %v724
      %1348 = vmatprep.subr.mxu0 %v707
      %1349 = vmatpush1.msra.mxu0 %v706
      %1350 = vmatprep.subr.mxu0 %v689
      %1351 = vmatpush1.msra.mxu0 %v688
      %1352 = vmatprep.subr.mxu0 %v671
      %1353 = vmatpush1.msra.mxu0 %v670
      %1354 = vmatprep.subr.mxu0 %v653
      %1355 = vmatpush1.msra.mxu0 %v652
      %1356 = vmatprep.subr.mxu0 %v635
      %1357 = vmatpush1.msra.mxu0 %v634
      %1358 = vmatprep.subr.mxu0 %v617
      %1359 = vmatpush1.msra.mxu0 %v616
      %1360 = vmatprep.subr.mxu0 %v599
      %1361 = vmatpush1.msra.mxu0 %v598
      %1362 = vmatprep.subr.mxu0 %v581
      %1363 = vmatpush1.msra.mxu0 %v580
      %1364 = vmatprep.subr.mxu0 %v563
      %1365 = vmatpush1.msra.mxu0 %v562
      %1366 = vmatprep.subr.mxu0 %v545
      %1367 = vmatpush1.msra.mxu0 %v544
      %1368 = vmatprep.subr.mxu0 %v527
      %1369 = vmatpush1.msra.mxu0 %v526
      %1370 = vmatprep.subr.mxu0 %v509
      %1371 = vmatpush1.msra.mxu0 %v508
      %1372 = vmatprep.subr.mxu0 %v491
      %1373 = vmatpush1.msra.mxu0 %v490
      %1374 = vmatprep.subr.mxu0 %v1049
      %1375 = vmatpush2.msra.mxu0 %v1048
      %1376 = vmatprep.subr.mxu0 %v1031
      %1377 = vmatpush2.msra.mxu0 %v1030
      %1378 = vmatprep.subr.mxu0 %v1013
      %1379 = vmatpush2.msra.mxu0 %v1012
      %1380 = vmatprep.subr.mxu0 %v995
      %1381 = vmatpush2.msra.mxu0 %v994
      %1382 = vmatprep.subr.mxu0 %v977
      %1383 = vmatpush2.msra.mxu0 %v976
      %1384 = vmatprep.subr.mxu0 %v959
      %1385 = vmatpush2.msra.mxu0 %v958
      %1386 = vmatprep.subr.mxu0 %v941
      %1387 = vmatpush2.msra.mxu0 %v940
      %1388 = vmatprep.subr.mxu0 %v923
      %1389 = vmatpush2.msra.mxu0 %v922
      %1390 = vmatprep.subr.mxu0 %v905
      %1391 = vmatpush2.msra.mxu0 %v904
      %1392 = vmatprep.subr.mxu0 %v887
      %1393 = vmatpush2.msra.mxu0 %v886
      %1394 = vmatprep.subr.mxu0 %v869
      %1395 = vmatpush2.msra.mxu0 %v868
      %1396 = vmatprep.subr.mxu0 %v851
      %1397 = vmatpush2.msra.mxu0 %v850
      %1398 = vmatprep.subr.mxu0 %v833
      %1399 = vmatpush2.msra.mxu0 %v832
      %1400 = vmatprep.subr.mxu0 %v815
      %1401 = vmatpush2.msra.mxu0 %v814
      %1402 = vmatprep.subr.mxu0 %v797
      %1403 = vmatpush2.msra.mxu0 %v796
      %1404 = vmatprep.subr.mxu0 %v779
      %1405 = vmatpush2.msra.mxu0 %v778
      %1406 = vmatprep.mubr.f32.mxu0 %v481
      %1407 = vmatmul.mubr.f32.gmra.mxu0 %v480
      %v1408 = vpop.f32.mrf.mxu0
      %v1409 = vadd.f32 0.0, %v1408
      %v1410 = vpop.f32.mrf.mxu0
      %v1411 = vadd.f32 0.0, %v1410
      %1412 = vdwg.mxu0
      %1413 = vmatprep.subr.mxu0 %v763
      %1414 = vmatpush1.msra.mxu0 %v762
      %1415 = vmatprep.subr.mxu0 %v745
      %1416 = vmatpush1.msra.mxu0 %v744
      %1417 = vmatprep.subr.mxu0 %v727
      %1418 = vmatpush1.msra.mxu0 %v726
      %1419 = vmatprep.subr.mxu0 %v709
      %1420 = vmatpush1.msra.mxu0 %v708
      %1421 = vmatprep.subr.mxu0 %v691
      %1422 = vmatpush1.msra.mxu0 %v690
      %1423 = vmatprep.subr.mxu0 %v673
      %1424 = vmatpush1.msra.mxu0 %v672
      %1425 = vmatprep.subr.mxu0 %v655
      %1426 = vmatpush1.msra.mxu0 %v654
      %1427 = vmatprep.subr.mxu0 %v637
      %1428 = vmatpush1.msra.mxu0 %v636
      %1429 = vmatprep.subr.mxu0 %v619
      %1430 = vmatpush1.msra.mxu0 %v618
      %1431 = vmatprep.subr.mxu0 %v601
      %1432 = vmatpush1.msra.mxu0 %v600
      %1433 = vmatprep.subr.mxu0 %v583
      %1434 = vmatpush1.msra.mxu0 %v582
      %1435 = vmatprep.subr.mxu0 %v565
      %1436 = vmatpush1.msra.mxu0 %v564
      %1437 = vmatprep.subr.mxu0 %v547
      %1438 = vmatpush1.msra.mxu0 %v546
      %1439 = vmatprep.subr.mxu0 %v529
      %1440 = vmatpush1.msra.mxu0 %v528
      %1441 = vmatprep.subr.mxu0 %v511
      %1442 = vmatpush1.msra.mxu0 %v510
      %1443 = vmatprep.subr.mxu0 %v493
      %1444 = vmatpush1.msra.mxu0 %v492
      %1445 = vmatprep.subr.mxu0 %v1051
      %1446 = vmatpush2.msra.mxu0 %v1050
      %1447 = vmatprep.subr.mxu0 %v1033
      %1448 = vmatpush2.msra.mxu0 %v1032
      %1449 = vmatprep.subr.mxu0 %v1015
      %1450 = vmatpush2.msra.mxu0 %v1014
      %1451 = vmatprep.subr.mxu0 %v997
      %1452 = vmatpush2.msra.mxu0 %v996
      %1453 = vmatprep.subr.mxu0 %v979
      %1454 = vmatpush2.msra.mxu0 %v978
      %1455 = vmatprep.subr.mxu0 %v961
      %1456 = vmatpush2.msra.mxu0 %v960
      %1457 = vmatprep.subr.mxu0 %v943
      %1458 = vmatpush2.msra.mxu0 %v942
      %1459 = vmatprep.subr.mxu0 %v925
      %1460 = vmatpush2.msra.mxu0 %v924
      %1461 = vmatprep.subr.mxu0 %v907
      %1462 = vmatpush2.msra.mxu0 %v906
      %1463 = vmatprep.subr.mxu0 %v889
      %1464 = vmatpush2.msra.mxu0 %v888
      %1465 = vmatprep.subr.mxu0 %v871
      %1466 = vmatpush2.msra.mxu0 %v870
      %1467 = vmatprep.subr.mxu0 %v853
      %1468 = vmatpush2.msra.mxu0 %v852
      %1469 = vmatprep.subr.mxu0 %v835
      %1470 = vmatpush2.msra.mxu0 %v834
      %1471 = vmatprep.subr.mxu0 %v817
      %1472 = vmatpush2.msra.mxu0 %v816
      %1473 = vmatprep.subr.mxu0 %v799
      %1474 = vmatpush2.msra.mxu0 %v798
      %1475 = vmatprep.subr.mxu0 %v781
      %1476 = vmatpush2.msra.mxu0 %v780
      %1477 = vmatprep.mubr.f32.mxu0 %v481
      %1478 = vmatmul.mubr.f32.gmra.mxu0 %v480
      %v1479 = vpop.f32.mrf.mxu0
      %v1480 = vadd.f32 0.0, %v1479
      %v1481 = vpop.f32.mrf.mxu0
      %v1482 = vadd.f32 0.0, %v1481
      %1483 = vdwg.mxu0
      %1484 = vmatprep.subr.mxu0 %v765
      %1485 = vmatpush1.msra.mxu0 %v764
      %1486 = vmatprep.subr.mxu0 %v747
      %1487 = vmatpush1.msra.mxu0 %v746
      %1488 = vmatprep.subr.mxu0 %v729
      %1489 = vmatpush1.msra.mxu0 %v728
      %1490 = vmatprep.subr.mxu0 %v711
      %1491 = vmatpush1.msra.mxu0 %v710
      %1492 = vmatprep.subr.mxu0 %v693
      %1493 = vmatpush1.msra.mxu0 %v692
      %1494 = vmatprep.subr.mxu0 %v675
      %1495 = vmatpush1.msra.mxu0 %v674
      %1496 = vmatprep.subr.mxu0 %v657
      %1497 = vmatpush1.msra.mxu0 %v656
      %1498 = vmatprep.subr.mxu0 %v639
      %1499 = vmatpush1.msra.mxu0 %v638
      %1500 = vmatprep.subr.mxu0 %v621
      %1501 = vmatpush1.msra.mxu0 %v620
      %1502 = vmatprep.subr.mxu0 %v603
      %1503 = vmatpush1.msra.mxu0 %v602
      %1504 = vmatprep.subr.mxu0 %v585
      %1505 = vmatpush1.msra.mxu0 %v584
      %1506 = vmatprep.subr.mxu0 %v567
      %1507 = vmatpush1.msra.mxu0 %v566
      %1508 = vmatprep.subr.mxu0 %v549
      %1509 = vmatpush1.msra.mxu0 %v548
      %1510 = vmatprep.subr.mxu0 %v531
      %1511 = vmatpush1.msra.mxu0 %v530
      %1512 = vmatprep.subr.mxu0 %v513
      %1513 = vmatpush1.msra.mxu0 %v512
      %1514 = vmatprep.subr.mxu0 %v495
      %1515 = vmatpush1.msra.mxu0 %v494
      %1516 = vmatprep.subr.mxu0 %v1053
      %1517 = vmatpush2.msra.mxu0 %v1052
      %1518 = vmatprep.subr.mxu0 %v1035
      %1519 = vmatpush2.msra.mxu0 %v1034
      %1520 = vmatprep.subr.mxu0 %v1017
      %1521 = vmatpush2.msra.mxu0 %v1016
      %1522 = vmatprep.subr.mxu0 %v999
      %1523 = vmatpush2.msra.mxu0 %v998
      %1524 = vmatprep.subr.mxu0 %v981
      %1525 = vmatpush2.msra.mxu0 %v980
      %1526 = vmatprep.subr.mxu0 %v963
      %1527 = vmatpush2.msra.mxu0 %v962
      %1528 = vmatprep.subr.mxu0 %v945
      %1529 = vmatpush2.msra.mxu0 %v944
      %1530 = vmatprep.subr.mxu0 %v927
      %1531 = vmatpush2.msra.mxu0 %v926
      %1532 = vmatprep.subr.mxu0 %v909
      %1533 = vmatpush2.msra.mxu0 %v908
      %1534 = vmatprep.subr.mxu0 %v891
      %1535 = vmatpush2.msra.mxu0 %v890
      %1536 = vmatprep.subr.mxu0 %v873
      %1537 = vmatpush2.msra.mxu0 %v872
      %1538 = vmatprep.subr.mxu0 %v855
      %1539 = vmatpush2.msra.mxu0 %v854
      %1540 = vmatprep.subr.mxu0 %v837
      %1541 = vmatpush2.msra.mxu0 %v836
      %1542 = vmatprep.subr.mxu0 %v819
      %1543 = vmatpush2.msra.mxu0 %v818
      %1544 = vmatprep.subr.mxu0 %v801
      %1545 = vmatpush2.msra.mxu0 %v800
      %1546 = vmatprep.subr.mxu0 %v783
      %1547 = vmatpush2.msra.mxu0 %v782
      %1548 = vmatprep.mubr.f32.mxu0 %v481
      %1549 = vmatmul.mubr.f32.gmra.mxu0 %v480
      %v1550 = vpop.f32.mrf.mxu0
      %v1551 = vadd.f32 0.0, %v1550
      %v1552 = vpop.f32.mrf.mxu0
      %v1553 = vadd.f32 0.0, %v1552
      %1554 = vdwg.mxu0
      %1555 = vmatprep.subr.mxu0 %v767
      %1556 = vmatpush1.msra.mxu0 %v766
      %1557 = vmatprep.subr.mxu0 %v749
      %1558 = vmatpush1.msra.mxu0 %v748
      %1559 = vmatprep.subr.mxu0 %v731
      %1560 = vmatpush1.msra.mxu0 %v730
      %1561 = vmatprep.subr.mxu0 %v713
      %1562 = vmatpush1.msra.mxu0 %v712
      %1563 = vmatprep.subr.mxu0 %v695
      %1564 = vmatpush1.msra.mxu0 %v694
      %1565 = vmatprep.subr.mxu0 %v677
      %1566 = vmatpush1.msra.mxu0 %v676
      %1567 = vmatprep.subr.mxu0 %v659
      %1568 = vmatpush1.msra.mxu0 %v658
      %1569 = vmatprep.subr.mxu0 %v641
      %1570 = vmatpush1.msra.mxu0 %v640
      %1571 = vmatprep.subr.mxu0 %v623
      %1572 = vmatpush1.msra.mxu0 %v622
      %1573 = vmatprep.subr.mxu0 %v605
      %1574 = vmatpush1.msra.mxu0 %v604
      %1575 = vmatprep.subr.mxu0 %v587
      %1576 = vmatpush1.msra.mxu0 %v586
      %1577 = vmatprep.subr.mxu0 %v569
      %1578 = vmatpush1.msra.mxu0 %v568
      %1579 = vmatprep.subr.mxu0 %v551
      %1580 = vmatpush1.msra.mxu0 %v550
      %1581 = vmatprep.subr.mxu0 %v533
      %1582 = vmatpush1.msra.mxu0 %v532
      %1583 = vmatprep.subr.mxu0 %v515
      %1584 = vmatpush1.msra.mxu0 %v514
      %1585 = vmatprep.subr.mxu0 %v497
      %1586 = vmatpush1.msra.mxu0 %v496
      %1587 = vmatprep.subr.mxu0 %v1055
      %1588 = vmatpush2.msra.mxu0 %v1054
      %1589 = vmatprep.subr.mxu0 %v1037
      %1590 = vmatpush2.msra.mxu0 %v1036
      %1591 = vmatprep.subr.mxu0 %v1019
      %1592 = vmatpush2.msra.mxu0 %v1018
      %1593 = vmatprep.subr.mxu0 %v1001
      %1594 = vmatpush2.msra.mxu0 %v1000
      %1595 = vmatprep.subr.mxu0 %v983
      %1596 = vmatpush2.msra.mxu0 %v982
      %1597 = vmatprep.subr.mxu0 %v965
      %1598 = vmatpush2.msra.mxu0 %v964
      %1599 = vmatprep.subr.mxu0 %v947
      %1600 = vmatpush2.msra.mxu0 %v946
      %1601 = vmatprep.subr.mxu0 %v929
      %1602 = vmatpush2.msra.mxu0 %v928
      %1603 = vmatprep.subr.mxu0 %v911
      %1604 = vmatpush2.msra.mxu0 %v910
      %1605 = vmatprep.subr.mxu0 %v893
      %1606 = vmatpush2.msra.mxu0 %v892
      %1607 = vmatprep.subr.mxu0 %v875
      %1608 = vmatpush2.msra.mxu0 %v874
      %1609 = vmatprep.subr.mxu0 %v857
      %1610 = vmatpush2.msra.mxu0 %v856
      %1611 = vmatprep.subr.mxu0 %v839
      %1612 = vmatpush2.msra.mxu0 %v838
      %1613 = vmatprep.subr.mxu0 %v821
      %1614 = vmatpush2.msra.mxu0 %v820
      %1615 = vmatprep.subr.mxu0 %v803
      %1616 = vmatpush2.msra.mxu0 %v802
      %1617 = vmatprep.subr.mxu0 %v785
      %1618 = vmatpush2.msra.mxu0 %v784
      %1619 = vmatprep.mubr.f32.mxu0 %v481
      %1620 = vmatmul.mubr.f32.gmra.mxu0 %v480
      %v1621 = vpop.f32.mrf.mxu0
      %v1622 = vadd.f32 0.0, %v1621
      %v1623 = vpop.f32.mrf.mxu0
      %v1624 = vadd.f32 0.0, %v1623
      %1625 = vdwg.mxu0
      %1626 = vmatprep.subr.mxu0 %v769
      %1627 = vmatpush1.msra.mxu0 %v768
      %1628 = vmatprep.subr.mxu0 %v751
      %1629 = vmatpush1.msra.mxu0 %v750
      %1630 = vmatprep.subr.mxu0 %v733
      %1631 = vmatpush1.msra.mxu0 %v732
      %1632 = vmatprep.subr.mxu0 %v715
      %1633 = vmatpush1.msra.mxu0 %v714
      %1634 = vmatprep.subr.mxu0 %v697
      %1635 = vmatpush1.msra.mxu0 %v696
      %1636 = vmatprep.subr.mxu0 %v679
      %1637 = vmatpush1.msra.mxu0 %v678
      %1638 = vmatprep.subr.mxu0 %v661
      %1639 = vmatpush1.msra.mxu0 %v660
      %1640 = vmatprep.subr.mxu0 %v643
      %1641 = vmatpush1.msra.mxu0 %v642
      %1642 = vmatprep.subr.mxu0 %v625
      %1643 = vmatpush1.msra.mxu0 %v624
      %1644 = vmatprep.subr.mxu0 %v607
      %1645 = vmatpush1.msra.mxu0 %v606
      %1646 = vmatprep.subr.mxu0 %v589
      %1647 = vmatpush1.msra.mxu0 %v588
      %1648 = vmatprep.subr.mxu0 %v571
      %1649 = vmatpush1.msra.mxu0 %v570
      %1650 = vmatprep.subr.mxu0 %v553
      %1651 = vmatpush1.msra.mxu0 %v552
      %1652 = vmatprep.subr.mxu0 %v535
      %1653 = vmatpush1.msra.mxu0 %v534
      %1654 = vmatprep.subr.mxu0 %v517
      %1655 = vmatpush1.msra.mxu0 %v516
      %1656 = vmatprep.subr.mxu0 %v499
      %1657 = vmatpush1.msra.mxu0 %v498
      %1658 = vmatprep.subr.mxu0 %v1057
      %1659 = vmatpush2.msra.mxu0 %v1056
      %1660 = vmatprep.subr.mxu0 %v1039
      %1661 = vmatpush2.msra.mxu0 %v1038
      %1662 = vmatprep.subr.mxu0 %v1021
      %1663 = vmatpush2.msra.mxu0 %v1020
      %1664 = vmatprep.subr.mxu0 %v1003
      %1665 = vmatpush2.msra.mxu0 %v1002
      %1666 = vmatprep.subr.mxu0 %v985
      %1667 = vmatpush2.msra.mxu0 %v984
      %1668 = vmatprep.subr.mxu0 %v967
      %1669 = vmatpush2.msra.mxu0 %v966
      %1670 = vmatprep.subr.mxu0 %v949
      %1671 = vmatpush2.msra.mxu0 %v948
      %1672 = vmatprep.subr.mxu0 %v931
      %1673 = vmatpush2.msra.mxu0 %v930
      %1674 = vmatprep.subr.mxu0 %v913
      %1675 = vmatpush2.msra.mxu0 %v912
      %1676 = vmatprep.subr.mxu0 %v895
      %1677 = vmatpush2.msra.mxu0 %v894
      %1678 = vmatprep.subr.mxu0 %v877
      %1679 = vmatpush2.msra.mxu0 %v876
      %1680 = vmatprep.subr.mxu0 %v859
      %1681 = vmatpush2.msra.mxu0 %v858
      %1682 = vmatprep.subr.mxu0 %v841
      %1683 = vmatpush2.msra.mxu0 %v840
      %1684 = vmatprep.subr.mxu0 %v823
      %1685 = vmatpush2.msra.mxu0 %v822
      %1686 = vmatprep.subr.mxu0 %v805
      %1687 = vmatpush2.msra.mxu0 %v804
      %1688 = vmatprep.subr.mxu0 %v787
      %1689 = vmatpush2.msra.mxu0 %v786
      %1690 = vmatprep.mubr.f32.mxu0 %v481
      %1691 = vmatmul.mubr.f32.gmra.mxu0 %v480
      %v1692 = vpop.f32.mrf.mxu0
      %v1693 = vadd.f32 0.0, %v1692
      %v1694 = vpop.f32.mrf.mxu0
      %v1695 = vadd.f32 0.0, %v1694
      %1696 = vdwg.mxu0
      %v1697 = vld [vmem:[%s2] sm:$0xff]
      %s1698 = scalar_lea.vmem %s2, 8
      %v1699 = vld [vmem:[%s1698] sm:$0xff]
      %vm1700 = vcmask 31744
      %v1702 = vsel %vm1700, %v1699, 0
      %v1705 = vsel %vm389, %v1196, 0
      %v1708 = vsel %vm389, %v1198, 0
      %1710 = vmatprep.subr.mxu0 0.0
      %1711 = vmatpush1.msra.mxu0 0.0
      %1712 = vmatprep.subr.mxu0 0.0
      %1713 = vmatpush1.msra.mxu0 0.0
      %1714 = vmatprep.subr.mxu0 0.0
      %1715 = vmatpush1.msra.mxu0 0.0
      %1716 = vmatprep.subr.mxu0 0.0
      %1717 = vmatpush1.msra.mxu0 0.0
      %1718 = vmatprep.subr.mxu0 0.0
      %1719 = vmatpush1.msra.mxu0 0.0
      %1720 = vmatprep.subr.mxu0 0.0
      %1721 = vmatpush1.msra.mxu0 0.0
      %1722 = vmatprep.subr.mxu0 0.0
      %1723 = vmatpush1.msra.mxu0 0.0
      %1724 = vmatprep.subr.mxu0 0.0
      %1725 = vmatpush1.msra.mxu0 0.0
      %1726 = vmatprep.subr.mxu0 0.0
      %1727 = vmatpush1.msra.mxu0 0.0
      %1728 = vmatprep.subr.mxu0 0.0
      %1729 = vmatpush1.msra.mxu0 0.0
      %1730 = vmatprep.subr.mxu0 0.0
      %1731 = vmatpush1.msra.mxu0 0.0
      %1732 = vmatprep.subr.mxu0 0.0
      %1733 = vmatpush1.msra.mxu0 0.0
      %1734 = vmatprep.subr.mxu0 0.0
      %1735 = vmatpush1.msra.mxu0 0.0
      %1736 = vmatprep.subr.mxu0 0.0
      %1737 = vmatpush1.msra.mxu0 0.0
      %1738 = vmatprep.subr.mxu0 0.0
      %1739 = vmatpush1.msra.mxu0 0.0
      %1740 = vmatprep.subr.mxu0 %v1708
      %1741 = vmatpush1.msra.mxu0 %v1705
      %1742 = vmatprep.subr.mxu0 0.0
      %1743 = vmatpush2.msra.mxu0 0.0
      %1744 = vmatprep.subr.mxu0 0.0
      %1745 = vmatpush2.msra.mxu0 0.0
      %1746 = vmatprep.subr.mxu0 0.0
      %1747 = vmatpush2.msra.mxu0 0.0
      %1748 = vmatprep.subr.mxu0 0.0
      %1749 = vmatpush2.msra.mxu0 0.0
      %1750 = vmatprep.subr.mxu0 0.0
      %1751 = vmatpush2.msra.mxu0 0.0
      %1752 = vmatprep.subr.mxu0 0.0
      %1753 = vmatpush2.msra.mxu0 0.0
      %1754 = vmatprep.subr.mxu0 0.0
      %1755 = vmatpush2.msra.mxu0 0.0
      %1756 = vmatprep.subr.mxu0 0.0
      %1757 = vmatpush2.msra.mxu0 0.0
      %1758 = vmatprep.subr.mxu0 0.0
      %1759 = vmatpush2.msra.mxu0 0.0
      %1760 = vmatprep.subr.mxu0 0.0
      %1761 = vmatpush2.msra.mxu0 0.0
      %1762 = vmatprep.subr.mxu0 0.0
      %1763 = vmatpush2.msra.mxu0 0.0
      %1764 = vmatprep.subr.mxu0 0.0
      %1765 = vmatpush2.msra.mxu0 0.0
      %1766 = vmatprep.subr.mxu0 0.0
      %1767 = vmatpush2.msra.mxu0 0.0
      %1768 = vmatprep.subr.mxu0 0.0
      %1769 = vmatpush2.msra.mxu0 0.0
      %1770 = vmatprep.subr.mxu0 0.0
      %1771 = vmatpush2.msra.mxu0 0.0
      %1772 = vmatprep.subr.mxu0 0.0
      %1773 = vmatpush2.msra.mxu0 0.0
      %1774 = vmatprep.mubr.f32.mxu0 0.0
      %1775 = vmatmul.mubr.f32.gmra.mxu0 %v1702
      %v1776 = vpop.f32.mrf.mxu0
      %v1777 = vadd.f32 0.0, %v1776
      %v1778 = vpop.f32.mrf.mxu0
      %v1779 = vadd.f32 0.0, %v1778
      %1780 = vdwg.mxu0
      %v1782 = vsel %vm1700, %v1697, 0
      %v1785 = vsel %vm389, %v1125, 0
      %v1788 = vsel %vm389, %v1127, 0
      %1790 = vmatprep.subr.mxu0 0.0
      %1791 = vmatpush1.msra.mxu0 0.0
      %1792 = vmatprep.subr.mxu0 0.0
      %1793 = vmatpush1.msra.mxu0 0.0
      %1794 = vmatprep.subr.mxu0 0.0
      %1795 = vmatpush1.msra.mxu0 0.0
      %1796 = vmatprep.subr.mxu0 0.0
      %1797 = vmatpush1.msra.mxu0 0.0
      %1798 = vmatprep.subr.mxu0 0.0
      %1799 = vmatpush1.msra.mxu0 0.0
      %1800 = vmatprep.subr.mxu0 0.0
      %1801 = vmatpush1.msra.mxu0 0.0
      %1802 = vmatprep.subr.mxu0 0.0
      %1803 = vmatpush1.msra.mxu0 0.0
      %1804 = vmatprep.subr.mxu0 0.0
      %1805 = vmatpush1.msra.mxu0 0.0
      %1806 = vmatprep.subr.mxu0 0.0
      %1807 = vmatpush1.msra.mxu0 0.0
      %1808 = vmatprep.subr.mxu0 0.0
      %1809 = vmatpush1.msra.mxu0 0.0
      %1810 = vmatprep.subr.mxu0 0.0
      %1811 = vmatpush1.msra.mxu0 0.0
      %1812 = vmatprep.subr.mxu0 0.0
      %1813 = vmatpush1.msra.mxu0 0.0
      %1814 = vmatprep.subr.mxu0 0.0
      %1815 = vmatpush1.msra.mxu0 0.0
      %1816 = vmatprep.subr.mxu0 0.0
      %1817 = vmatpush1.msra.mxu0 0.0
      %1818 = vmatprep.subr.mxu0 0.0
      %1819 = vmatpush1.msra.mxu0 0.0
      %1820 = vmatprep.subr.mxu0 %v1788
      %1821 = vmatpush1.msra.mxu0 %v1785
      %1822 = vmatprep.subr.mxu0 0.0
      %1823 = vmatpush2.msra.mxu0 0.0
      %1824 = vmatprep.subr.mxu0 0.0
      %1825 = vmatpush2.msra.mxu0 0.0
      %1826 = vmatprep.subr.mxu0 0.0
      %1827 = vmatpush2.msra.mxu0 0.0
      %1828 = vmatprep.subr.mxu0 0.0
      %1829 = vmatpush2.msra.mxu0 0.0
      %1830 = vmatprep.subr.mxu0 0.0
      %1831 = vmatpush2.msra.mxu0 0.0
      %1832 = vmatprep.subr.mxu0 0.0
      %1833 = vmatpush2.msra.mxu0 0.0
      %1834 = vmatprep.subr.mxu0 0.0
      %1835 = vmatpush2.msra.mxu0 0.0
      %1836 = vmatprep.subr.mxu0 0.0
      %1837 = vmatpush2.msra.mxu0 0.0
      %1838 = vmatprep.subr.mxu0 0.0
      %1839 = vmatpush2.msra.mxu0 0.0
      %1840 = vmatprep.subr.mxu0 0.0
      %1841 = vmatpush2.msra.mxu0 0.0
      %1842 = vmatprep.subr.mxu0 0.0
      %1843 = vmatpush2.msra.mxu0 0.0
      %1844 = vmatprep.subr.mxu0 0.0
      %1845 = vmatpush2.msra.mxu0 0.0
      %1846 = vmatprep.subr.mxu0 0.0
      %1847 = vmatpush2.msra.mxu0 0.0
      %1848 = vmatprep.subr.mxu0 0.0
      %1849 = vmatpush2.msra.mxu0 0.0
      %1850 = vmatprep.subr.mxu0 0.0
      %1851 = vmatpush2.msra.mxu0 0.0
      %1852 = vmatprep.subr.mxu0 0.0
      %1853 = vmatpush2.msra.mxu0 0.0
      %1854 = vmatprep.mubr.f32.mxu0 0.0
      %1855 = vmatmul.mubr.f32.gmra.mxu0 %v1782
      %v1856 = vpop.f32.mrf.mxu0
      %v1857 = vadd.f32 %v1777, %v1856
      %v1858 = vpop.f32.mrf.mxu0
      %v1859 = vadd.f32 %v1779, %v1858
      %1860 = vdwg.mxu0
      %s1861 = scalar_lea.vmem %s2, 16
      %v1862 = vld [vmem:[%s1861] sm:$0xff]
      %v1864 = vsel %vm1700, %v1862, 0
      %v1867 = vsel %vm389, %v1267, 0
      %v1870 = vsel %vm389, %v1269, 0
      %1872 = vmatprep.subr.mxu0 0.0
      %1873 = vmatpush1.msra.mxu0 0.0
      %1874 = vmatprep.subr.mxu0 0.0
      %1875 = vmatpush1.msra.mxu0 0.0
      %1876 = vmatprep.subr.mxu0 0.0
      %1877 = vmatpush1.msra.mxu0 0.0
      %1878 = vmatprep.subr.mxu0 0.0
      %1879 = vmatpush1.msra.mxu0 0.0
      %1880 = vmatprep.subr.mxu0 0.0
      %1881 = vmatpush1.msra.mxu0 0.0
      %1882 = vmatprep.subr.mxu0 0.0
      %1883 = vmatpush1.msra.mxu0 0.0
      %1884 = vmatprep.subr.mxu0 0.0
      %1885 = vmatpush1.msra.mxu0 0.0
      %1886 = vmatprep.subr.mxu0 0.0
      %1887 = vmatpush1.msra.mxu0 0.0
      %1888 = vmatprep.subr.mxu0 0.0
      %1889 = vmatpush1.msra.mxu0 0.0
      %1890 = vmatprep.subr.mxu0 0.0
      %1891 = vmatpush1.msra.mxu0 0.0
      %1892 = vmatprep.subr.mxu0 0.0
      %1893 = vmatpush1.msra.mxu0 0.0
      %1894 = vmatprep.subr.mxu0 0.0
      %1895 = vmatpush1.msra.mxu0 0.0
      %1896 = vmatprep.subr.mxu0 0.0
      %1897 = vmatpush1.msra.mxu0 0.0
      %1898 = vmatprep.subr.mxu0 0.0
      %1899 = vmatpush1.msra.mxu0 0.0
      %1900 = vmatprep.subr.mxu0 0.0
      %1901 = vmatpush1.msra.mxu0 0.0
      %1902 = vmatprep.subr.mxu0 %v1870
      %1903 = vmatpush1.msra.mxu0 %v1867
      %1904 = vmatprep.subr.mxu0 0.0
      %1905 = vmatpush2.msra.mxu0 0.0
      %1906 = vmatprep.subr.mxu0 0.0
      %1907 = vmatpush2.msra.mxu0 0.0
      %1908 = vmatprep.subr.mxu0 0.0
      %1909 = vmatpush2.msra.mxu0 0.0
      %1910 = vmatprep.subr.mxu0 0.0
      %1911 = vmatpush2.msra.mxu0 0.0
      %1912 = vmatprep.subr.mxu0 0.0
      %1913 = vmatpush2.msra.mxu0 0.0
      %1914 = vmatprep.subr.mxu0 0.0
      %1915 = vmatpush2.msra.mxu0 0.0
      %1916 = vmatprep.subr.mxu0 0.0
      %1917 = vmatpush2.msra.mxu0 0.0
      %1918 = vmatprep.subr.mxu0 0.0
      %1919 = vmatpush2.msra.mxu0 0.0
      %1920 = vmatprep.subr.mxu0 0.0
      %1921 = vmatpush2.msra.mxu0 0.0
      %1922 = vmatprep.subr.mxu0 0.0
      %1923 = vmatpush2.msra.mxu0 0.0
      %1924 = vmatprep.subr.mxu0 0.0
      %1925 = vmatpush2.msra.mxu0 0.0
      %1926 = vmatprep.subr.mxu0 0.0
      %1927 = vmatpush2.msra.mxu0 0.0
      %1928 = vmatprep.subr.mxu0 0.0
      %1929 = vmatpush2.msra.mxu0 0.0
      %1930 = vmatprep.subr.mxu0 0.0
      %1931 = vmatpush2.msra.mxu0 0.0
      %1932 = vmatprep.subr.mxu0 0.0
      %1933 = vmatpush2.msra.mxu0 0.0
      %1934 = vmatprep.subr.mxu0 0.0
      %1935 = vmatpush2.msra.mxu0 0.0
      %1936 = vmatprep.mubr.f32.mxu0 0.0
      %1937 = vmatmul.mubr.f32.gmra.mxu0 %v1864
      %v1938 = vpop.f32.mrf.mxu0
      %v1939 = vadd.f32 0.0, %v1938
      %v1940 = vpop.f32.mrf.mxu0
      %v1941 = vadd.f32 0.0, %v1940
      %1942 = vdwg.mxu0
      %v1943 = vadd.f32 %v1857, %v1939
      %v1944 = vadd.f32 %v1859, %v1941
      %s1945 = scalar_lea.vmem %s2, 24
      %v1946 = vld [vmem:[%s1945] sm:$0xff]
      %v1948 = vsel %vm1700, %v1946, 0
      %v1951 = vsel %vm389, %v1338, 0
      %v1954 = vsel %vm389, %v1340, 0
      %1956 = vmatprep.subr.mxu0 0.0
      %1957 = vmatpush1.msra.mxu0 0.0
      %1958 = vmatprep.subr.mxu0 0.0
      %1959 = vmatpush1.msra.mxu0 0.0
      %1960 = vmatprep.subr.mxu0 0.0
      %1961 = vmatpush1.msra.mxu0 0.0
      %1962 = vmatprep.subr.mxu0 0.0
      %1963 = vmatpush1.msra.mxu0 0.0
      %1964 = vmatprep.subr.mxu0 0.0
      %1965 = vmatpush1.msra.mxu0 0.0
      %1966 = vmatprep.subr.mxu0 0.0
      %1967 = vmatpush1.msra.mxu0 0.0
      %1968 = vmatprep.subr.mxu0 0.0
      %1969 = vmatpush1.msra.mxu0 0.0
      %1970 = vmatprep.subr.mxu0 0.0
      %1971 = vmatpush1.msra.mxu0 0.0
      %1972 = vmatprep.subr.mxu0 0.0
      %1973 = vmatpush1.msra.mxu0 0.0
      %1974 = vmatprep.subr.mxu0 0.0
      %1975 = vmatpush1.msra.mxu0 0.0
      %1976 = vmatprep.subr.mxu0 0.0
      %1977 = vmatpush1.msra.mxu0 0.0
      %1978 = vmatprep.subr.mxu0 0.0
      %1979 = vmatpush1.msra.mxu0 0.0
      %1980 = vmatprep.subr.mxu0 0.0
      %1981 = vmatpush1.msra.mxu0 0.0
      %1982 = vmatprep.subr.mxu0 0.0
      %1983 = vmatpush1.msra.mxu0 0.0
      %1984 = vmatprep.subr.mxu0 0.0
      %1985 = vmatpush1.msra.mxu0 0.0
      %1986 = vmatprep.subr.mxu0 %v1954
      %1987 = vmatpush1.msra.mxu0 %v1951
      %1988 = vmatprep.subr.mxu0 0.0
      %1989 = vmatpush2.msra.mxu0 0.0
      %1990 = vmatprep.subr.mxu0 0.0
      %1991 = vmatpush2.msra.mxu0 0.0
      %1992 = vmatprep.subr.mxu0 0.0
      %1993 = vmatpush2.msra.mxu0 0.0
      %1994 = vmatprep.subr.mxu0 0.0
      %1995 = vmatpush2.msra.mxu0 0.0
      %1996 = vmatprep.subr.mxu0 0.0
      %1997 = vmatpush2.msra.mxu0 0.0
      %1998 = vmatprep.subr.mxu0 0.0
      %1999 = vmatpush2.msra.mxu0 0.0
      %2000 = vmatprep.subr.mxu0 0.0
      %2001 = vmatpush2.msra.mxu0 0.0
      %2002 = vmatprep.subr.mxu0 0.0
      %2003 = vmatpush2.msra.mxu0 0.0
      %2004 = vmatprep.subr.mxu0 0.0
      %2005 = vmatpush2.msra.mxu0 0.0
      %2006 = vmatprep.subr.mxu0 0.0
      %2007 = vmatpush2.msra.mxu0 0.0
      %2008 = vmatprep.subr.mxu0 0.0
      %2009 = vmatpush2.msra.mxu0 0.0
      %2010 = vmatprep.subr.mxu0 0.0
      %2011 = vmatpush2.msra.mxu0 0.0
      %2012 = vmatprep.subr.mxu0 0.0
      %2013 = vmatpush2.msra.mxu0 0.0
      %2014 = vmatprep.subr.mxu0 0.0
      %2015 = vmatpush2.msra.mxu0 0.0
      %2016 = vmatprep.subr.mxu0 0.0
      %2017 = vmatpush2.msra.mxu0 0.0
      %2018 = vmatprep.subr.mxu0 0.0
      %2019 = vmatpush2.msra.mxu0 0.0
      %2020 = vmatprep.mubr.f32.mxu0 0.0
      %2021 = vmatmul.mubr.f32.gmra.mxu0 %v1948
      %v2022 = vpop.f32.mrf.mxu0
      %v2023 = vadd.f32 0.0, %v2022
      %v2024 = vpop.f32.mrf.mxu0
      %v2025 = vadd.f32 0.0, %v2024
      %2026 = vdwg.mxu0
      %v2027 = vadd.f32 %v1943, %v2023
      %v2028 = vadd.f32 %v1944, %v2025
      %s2029 = scalar_lea.vmem %s2, 32
      %v2030 = vld [vmem:[%s2029] sm:$0xff]
      %v2032 = vsel %vm1700, %v2030, 0
      %v2035 = vsel %vm389, %v1409, 0
      %v2038 = vsel %vm389, %v1411, 0
      %2040 = vmatprep.subr.mxu0 0.0
      %2041 = vmatpush1.msra.mxu0 0.0
      %2042 = vmatprep.subr.mxu0 0.0
      %2043 = vmatpush1.msra.mxu0 0.0
      %2044 = vmatprep.subr.mxu0 0.0
      %2045 = vmatpush1.msra.mxu0 0.0
      %2046 = vmatprep.subr.mxu0 0.0
      %2047 = vmatpush1.msra.mxu0 0.0
      %2048 = vmatprep.subr.mxu0 0.0
      %2049 = vmatpush1.msra.mxu0 0.0
      %2050 = vmatprep.subr.mxu0 0.0
      %2051 = vmatpush1.msra.mxu0 0.0
      %2052 = vmatprep.subr.mxu0 0.0
      %2053 = vmatpush1.msra.mxu0 0.0
      %2054 = vmatprep.subr.mxu0 0.0
      %2055 = vmatpush1.msra.mxu0 0.0
      %2056 = vmatprep.subr.mxu0 0.0
      %2057 = vmatpush1.msra.mxu0 0.0
      %2058 = vmatprep.subr.mxu0 0.0
      %2059 = vmatpush1.msra.mxu0 0.0
      %2060 = vmatprep.subr.mxu0 0.0
      %2061 = vmatpush1.msra.mxu0 0.0
      %2062 = vmatprep.subr.mxu0 0.0
      %2063 = vmatpush1.msra.mxu0 0.0
      %2064 = vmatprep.subr.mxu0 0.0
      %2065 = vmatpush1.msra.mxu0 0.0
      %2066 = vmatprep.subr.mxu0 0.0
      %2067 = vmatpush1.msra.mxu0 0.0
      %2068 = vmatprep.subr.mxu0 0.0
      %2069 = vmatpush1.msra.mxu0 0.0
      %2070 = vmatprep.subr.mxu0 %v2038
      %2071 = vmatpush1.msra.mxu0 %v2035
      %2072 = vmatprep.subr.mxu0 0.0
      %2073 = vmatpush2.msra.mxu0 0.0
      %2074 = vmatprep.subr.mxu0 0.0
      %2075 = vmatpush2.msra.mxu0 0.0
      %2076 = vmatprep.subr.mxu0 0.0
      %2077 = vmatpush2.msra.mxu0 0.0
      %2078 = vmatprep.subr.mxu0 0.0
      %2079 = vmatpush2.msra.mxu0 0.0
      %2080 = vmatprep.subr.mxu0 0.0
      %2081 = vmatpush2.msra.mxu0 0.0
      %2082 = vmatprep.subr.mxu0 0.0
      %2083 = vmatpush2.msra.mxu0 0.0
      %2084 = vmatprep.subr.mxu0 0.0
      %2085 = vmatpush2.msra.mxu0 0.0
      %2086 = vmatprep.subr.mxu0 0.0
      %2087 = vmatpush2.msra.mxu0 0.0
      %2088 = vmatprep.subr.mxu0 0.0
      %2089 = vmatpush2.msra.mxu0 0.0
      %2090 = vmatprep.subr.mxu0 0.0
      %2091 = vmatpush2.msra.mxu0 0.0
      %2092 = vmatprep.subr.mxu0 0.0
      %2093 = vmatpush2.msra.mxu0 0.0
      %2094 = vmatprep.subr.mxu0 0.0
      %2095 = vmatpush2.msra.mxu0 0.0
      %2096 = vmatprep.subr.mxu0 0.0
      %2097 = vmatpush2.msra.mxu0 0.0
      %2098 = vmatprep.subr.mxu0 0.0
      %2099 = vmatpush2.msra.mxu0 0.0
      %2100 = vmatprep.subr.mxu0 0.0
      %2101 = vmatpush2.msra.mxu0 0.0
      %2102 = vmatprep.subr.mxu0 0.0
      %2103 = vmatpush2.msra.mxu0 0.0
      %2104 = vmatprep.mubr.f32.mxu0 0.0
      %2105 = vmatmul.mubr.f32.gmra.mxu0 %v2032
      %v2106 = vpop.f32.mrf.mxu0
      %v2107 = vadd.f32 0.0, %v2106
      %v2108 = vpop.f32.mrf.mxu0
      %v2109 = vadd.f32 0.0, %v2108
      %2110 = vdwg.mxu0
      %v2111 = vadd.f32 %v2027, %v2107
      %v2112 = vadd.f32 %v2028, %v2109
      %s2113 = scalar_lea.vmem %s2, 40
      %v2114 = vld [vmem:[%s2113] sm:$0xff]
      %v2116 = vsel %vm1700, %v2114, 0
      %v2119 = vsel %vm389, %v1480, 0
      %v2122 = vsel %vm389, %v1482, 0
      %2124 = vmatprep.subr.mxu0 0.0
      %2125 = vmatpush1.msra.mxu0 0.0
      %2126 = vmatprep.subr.mxu0 0.0
      %2127 = vmatpush1.msra.mxu0 0.0
      %2128 = vmatprep.subr.mxu0 0.0
      %2129 = vmatpush1.msra.mxu0 0.0
      %2130 = vmatprep.subr.mxu0 0.0
      %2131 = vmatpush1.msra.mxu0 0.0
      %2132 = vmatprep.subr.mxu0 0.0
      %2133 = vmatpush1.msra.mxu0 0.0
      %2134 = vmatprep.subr.mxu0 0.0
      %2135 = vmatpush1.msra.mxu0 0.0
      %2136 = vmatprep.subr.mxu0 0.0
      %2137 = vmatpush1.msra.mxu0 0.0
      %2138 = vmatprep.subr.mxu0 0.0
      %2139 = vmatpush1.msra.mxu0 0.0
      %2140 = vmatprep.subr.mxu0 0.0
      %2141 = vmatpush1.msra.mxu0 0.0
      %2142 = vmatprep.subr.mxu0 0.0
      %2143 = vmatpush1.msra.mxu0 0.0
      %2144 = vmatprep.subr.mxu0 0.0
      %2145 = vmatpush1.msra.mxu0 0.0
      %2146 = vmatprep.subr.mxu0 0.0
      %2147 = vmatpush1.msra.mxu0 0.0
      %2148 = vmatprep.subr.mxu0 0.0
      %2149 = vmatpush1.msra.mxu0 0.0
      %2150 = vmatprep.subr.mxu0 0.0
      %2151 = vmatpush1.msra.mxu0 0.0
      %2152 = vmatprep.subr.mxu0 0.0
      %2153 = vmatpush1.msra.mxu0 0.0
      %2154 = vmatprep.subr.mxu0 %v2122
      %2155 = vmatpush1.msra.mxu0 %v2119
      %2156 = vmatprep.subr.mxu0 0.0
      %2157 = vmatpush2.msra.mxu0 0.0
      %2158 = vmatprep.subr.mxu0 0.0
      %2159 = vmatpush2.msra.mxu0 0.0
      %2160 = vmatprep.subr.mxu0 0.0
      %2161 = vmatpush2.msra.mxu0 0.0
      %2162 = vmatprep.subr.mxu0 0.0
      %2163 = vmatpush2.msra.mxu0 0.0
      %2164 = vmatprep.subr.mxu0 0.0
      %2165 = vmatpush2.msra.mxu0 0.0
      %2166 = vmatprep.subr.mxu0 0.0
      %2167 = vmatpush2.msra.mxu0 0.0
      %2168 = vmatprep.subr.mxu0 0.0
      %2169 = vmatpush2.msra.mxu0 0.0
      %2170 = vmatprep.subr.mxu0 0.0
      %2171 = vmatpush2.msra.mxu0 0.0
      %2172 = vmatprep.subr.mxu0 0.0
      %2173 = vmatpush2.msra.mxu0 0.0
      %2174 = vmatprep.subr.mxu0 0.0
      %2175 = vmatpush2.msra.mxu0 0.0
      %2176 = vmatprep.subr.mxu0 0.0
      %2177 = vmatpush2.msra.mxu0 0.0
      %2178 = vmatprep.subr.mxu0 0.0
      %2179 = vmatpush2.msra.mxu0 0.0
      %2180 = vmatprep.subr.mxu0 0.0
      %2181 = vmatpush2.msra.mxu0 0.0
      %2182 = vmatprep.subr.mxu0 0.0
      %2183 = vmatpush2.msra.mxu0 0.0
      %2184 = vmatprep.subr.mxu0 0.0
      %2185 = vmatpush2.msra.mxu0 0.0
      %2186 = vmatprep.subr.mxu0 0.0
      %2187 = vmatpush2.msra.mxu0 0.0
      %2188 = vmatprep.mubr.f32.mxu0 0.0
      %2189 = vmatmul.mubr.f32.gmra.mxu0 %v2116
      %v2190 = vpop.f32.mrf.mxu0
      %v2191 = vadd.f32 0.0, %v2190
      %v2192 = vpop.f32.mrf.mxu0
      %v2193 = vadd.f32 0.0, %v2192
      %2194 = vdwg.mxu0
      %v2195 = vadd.f32 %v2111, %v2191
      %v2196 = vadd.f32 %v2112, %v2193
      %s2197 = scalar_lea.vmem %s2, 48
      %v2198 = vld [vmem:[%s2197] sm:$0xff]
      %v2200 = vsel %vm1700, %v2198, 0
      %v2203 = vsel %vm389, %v1551, 0
      %v2206 = vsel %vm389, %v1553, 0
      %2208 = vmatprep.subr.mxu0 0.0
      %2209 = vmatpush1.msra.mxu0 0.0
      %2210 = vmatprep.subr.mxu0 0.0
      %2211 = vmatpush1.msra.mxu0 0.0
      %2212 = vmatprep.subr.mxu0 0.0
      %2213 = vmatpush1.msra.mxu0 0.0
      %2214 = vmatprep.subr.mxu0 0.0
      %2215 = vmatpush1.msra.mxu0 0.0
      %2216 = vmatprep.subr.mxu0 0.0
      %2217 = vmatpush1.msra.mxu0 0.0
      %2218 = vmatprep.subr.mxu0 0.0
      %2219 = vmatpush1.msra.mxu0 0.0
      %2220 = vmatprep.subr.mxu0 0.0
      %2221 = vmatpush1.msra.mxu0 0.0
      %2222 = vmatprep.subr.mxu0 0.0
      %2223 = vmatpush1.msra.mxu0 0.0
      %2224 = vmatprep.subr.mxu0 0.0
      %2225 = vmatpush1.msra.mxu0 0.0
      %2226 = vmatprep.subr.mxu0 0.0
      %2227 = vmatpush1.msra.mxu0 0.0
      %2228 = vmatprep.subr.mxu0 0.0
      %2229 = vmatpush1.msra.mxu0 0.0
      %2230 = vmatprep.subr.mxu0 0.0
      %2231 = vmatpush1.msra.mxu0 0.0
      %2232 = vmatprep.subr.mxu0 0.0
      %2233 = vmatpush1.msra.mxu0 0.0
      %2234 = vmatprep.subr.mxu0 0.0
      %2235 = vmatpush1.msra.mxu0 0.0
      %2236 = vmatprep.subr.mxu0 0.0
      %2237 = vmatpush1.msra.mxu0 0.0
      %2238 = vmatprep.subr.mxu0 %v2206
      %2239 = vmatpush1.msra.mxu0 %v2203
      %2240 = vmatprep.subr.mxu0 0.0
      %2241 = vmatpush2.msra.mxu0 0.0
      %2242 = vmatprep.subr.mxu0 0.0
      %2243 = vmatpush2.msra.mxu0 0.0
      %2244 = vmatprep.subr.mxu0 0.0
      %2245 = vmatpush2.msra.mxu0 0.0
      %2246 = vmatprep.subr.mxu0 0.0
      %2247 = vmatpush2.msra.mxu0 0.0
      %2248 = vmatprep.subr.mxu0 0.0
      %2249 = vmatpush2.msra.mxu0 0.0
      %2250 = vmatprep.subr.mxu0 0.0
      %2251 = vmatpush2.msra.mxu0 0.0
      %2252 = vmatprep.subr.mxu0 0.0
      %2253 = vmatpush2.msra.mxu0 0.0
      %2254 = vmatprep.subr.mxu0 0.0
      %2255 = vmatpush2.msra.mxu0 0.0
      %2256 = vmatprep.subr.mxu0 0.0
      %2257 = vmatpush2.msra.mxu0 0.0
      %2258 = vmatprep.subr.mxu0 0.0
      %2259 = vmatpush2.msra.mxu0 0.0
      %2260 = vmatprep.subr.mxu0 0.0
      %2261 = vmatpush2.msra.mxu0 0.0
      %2262 = vmatprep.subr.mxu0 0.0
      %2263 = vmatpush2.msra.mxu0 0.0
      %2264 = vmatprep.subr.mxu0 0.0
      %2265 = vmatpush2.msra.mxu0 0.0
      %2266 = vmatprep.subr.mxu0 0.0
      %2267 = vmatpush2.msra.mxu0 0.0
      %2268 = vmatprep.subr.mxu0 0.0
      %2269 = vmatpush2.msra.mxu0 0.0
      %2270 = vmatprep.subr.mxu0 0.0
      %2271 = vmatpush2.msra.mxu0 0.0
      %2272 = vmatprep.mubr.f32.mxu0 0.0
      %2273 = vmatmul.mubr.f32.gmra.mxu0 %v2200
      %v2274 = vpop.f32.mrf.mxu0
      %v2275 = vadd.f32 0.0, %v2274
      %v2276 = vpop.f32.mrf.mxu0
      %v2277 = vadd.f32 0.0, %v2276
      %2278 = vdwg.mxu0
      %v2279 = vadd.f32 %v2195, %v2275
      %v2280 = vadd.f32 %v2196, %v2277
      %s2281 = scalar_lea.vmem %s2, 56
      %v2282 = vld [vmem:[%s2281] sm:$0xff]
      %v2284 = vsel %vm1700, %v2282, 0
      %v2287 = vsel %vm389, %v1622, 0
      %v2290 = vsel %vm389, %v1624, 0
      %2292 = vmatprep.subr.mxu0 0.0
      %2293 = vmatpush1.msra.mxu0 0.0
      %2294 = vmatprep.subr.mxu0 0.0
      %2295 = vmatpush1.msra.mxu0 0.0
      %2296 = vmatprep.subr.mxu0 0.0
      %2297 = vmatpush1.msra.mxu0 0.0
      %2298 = vmatprep.subr.mxu0 0.0
      %2299 = vmatpush1.msra.mxu0 0.0
      %2300 = vmatprep.subr.mxu0 0.0
      %2301 = vmatpush1.msra.mxu0 0.0
      %2302 = vmatprep.subr.mxu0 0.0
      %2303 = vmatpush1.msra.mxu0 0.0
      %2304 = vmatprep.subr.mxu0 0.0
      %2305 = vmatpush1.msra.mxu0 0.0
      %2306 = vmatprep.subr.mxu0 0.0
      %2307 = vmatpush1.msra.mxu0 0.0
      %2308 = vmatprep.subr.mxu0 0.0
      %2309 = vmatpush1.msra.mxu0 0.0
      %2310 = vmatprep.subr.mxu0 0.0
      %2311 = vmatpush1.msra.mxu0 0.0
      %2312 = vmatprep.subr.mxu0 0.0
      %2313 = vmatpush1.msra.mxu0 0.0
      %2314 = vmatprep.subr.mxu0 0.0
      %2315 = vmatpush1.msra.mxu0 0.0
      %2316 = vmatprep.subr.mxu0 0.0
      %2317 = vmatpush1.msra.mxu0 0.0
      %2318 = vmatprep.subr.mxu0 0.0
      %2319 = vmatpush1.msra.mxu0 0.0
      %2320 = vmatprep.subr.mxu0 0.0
      %2321 = vmatpush1.msra.mxu0 0.0
      %2322 = vmatprep.subr.mxu0 %v2290
      %2323 = vmatpush1.msra.mxu0 %v2287
      %2324 = vmatprep.subr.mxu0 0.0
      %2325 = vmatpush2.msra.mxu0 0.0
      %2326 = vmatprep.subr.mxu0 0.0
      %2327 = vmatpush2.msra.mxu0 0.0
      %2328 = vmatprep.subr.mxu0 0.0
      %2329 = vmatpush2.msra.mxu0 0.0
      %2330 = vmatprep.subr.mxu0 0.0
      %2331 = vmatpush2.msra.mxu0 0.0
      %2332 = vmatprep.subr.mxu0 0.0
      %2333 = vmatpush2.msra.mxu0 0.0
      %2334 = vmatprep.subr.mxu0 0.0
      %2335 = vmatpush2.msra.mxu0 0.0
      %2336 = vmatprep.subr.mxu0 0.0
      %2337 = vmatpush2.msra.mxu0 0.0
      %2338 = vmatprep.subr.mxu0 0.0
      %2339 = vmatpush2.msra.mxu0 0.0
      %2340 = vmatprep.subr.mxu0 0.0
      %2341 = vmatpush2.msra.mxu0 0.0
      %2342 = vmatprep.subr.mxu0 0.0
      %2343 = vmatpush2.msra.mxu0 0.0
      %2344 = vmatprep.subr.mxu0 0.0
      %2345 = vmatpush2.msra.mxu0 0.0
      %2346 = vmatprep.subr.mxu0 0.0
      %2347 = vmatpush2.msra.mxu0 0.0
      %2348 = vmatprep.subr.mxu0 0.0
      %2349 = vmatpush2.msra.mxu0 0.0
      %2350 = vmatprep.subr.mxu0 0.0
      %2351 = vmatpush2.msra.mxu0 0.0
      %2352 = vmatprep.subr.mxu0 0.0
      %2353 = vmatpush2.msra.mxu0 0.0
      %2354 = vmatprep.subr.mxu0 0.0
      %2355 = vmatpush2.msra.mxu0 0.0
      %2356 = vmatprep.mubr.f32.mxu0 0.0
      %2357 = vmatmul.mubr.f32.gmra.mxu0 %v2284
      %v2358 = vpop.f32.mrf.mxu0
      %v2359 = vadd.f32 0.0, %v2358
      %v2360 = vpop.f32.mrf.mxu0
      %v2361 = vadd.f32 0.0, %v2360
      %2362 = vdwg.mxu0
      %v2363 = vadd.f32 %v2279, %v2359
      %v2364 = vadd.f32 %v2280, %v2361
      %s2365 = scalar_lea.vmem %s2, 64
      %v2366 = vld [vmem:[%s2365] sm:$0xff]
      %v2368 = vsel %vm1700, %v2366, 0
      %v2371 = vsel %vm389, %v1693, 0
      %v2374 = vsel %vm389, %v1695, 0
      %2376 = vmatprep.subr.mxu0 0.0
      %2377 = vmatpush1.msra.mxu0 0.0
      %2378 = vmatprep.subr.mxu0 0.0
      %2379 = vmatpush1.msra.mxu0 0.0
      %2380 = vmatprep.subr.mxu0 0.0
      %2381 = vmatpush1.msra.mxu0 0.0
      %2382 = vmatprep.subr.mxu0 0.0
      %2383 = vmatpush1.msra.mxu0 0.0
      %2384 = vmatprep.subr.mxu0 0.0
      %2385 = vmatpush1.msra.mxu0 0.0
      %2386 = vmatprep.subr.mxu0 0.0
      %2387 = vmatpush1.msra.mxu0 0.0
      %2388 = vmatprep.subr.mxu0 0.0
      %2389 = vmatpush1.msra.mxu0 0.0
      %2390 = vmatprep.subr.mxu0 0.0
      %2391 = vmatpush1.msra.mxu0 0.0
      %2392 = vmatprep.subr.mxu0 0.0
      %2393 = vmatpush1.msra.mxu0 0.0
      %2394 = vmatprep.subr.mxu0 0.0
      %2395 = vmatpush1.msra.mxu0 0.0
      %2396 = vmatprep.subr.mxu0 0.0
      %2397 = vmatpush1.msra.mxu0 0.0
      %2398 = vmatprep.subr.mxu0 0.0
      %2399 = vmatpush1.msra.mxu0 0.0
      %2400 = vmatprep.subr.mxu0 0.0
      %2401 = vmatpush1.msra.mxu0 0.0
      %2402 = vmatprep.subr.mxu0 0.0
      %2403 = vmatpush1.msra.mxu0 0.0
      %2404 = vmatprep.subr.mxu0 0.0
      %2405 = vmatpush1.msra.mxu0 0.0
      %2406 = vmatprep.subr.mxu0 %v2374
      %2407 = vmatpush1.msra.mxu0 %v2371
      %2408 = vmatprep.subr.mxu0 0.0
      %2409 = vmatpush2.msra.mxu0 0.0
      %2410 = vmatprep.subr.mxu0 0.0
      %2411 = vmatpush2.msra.mxu0 0.0
      %2412 = vmatprep.subr.mxu0 0.0
      %2413 = vmatpush2.msra.mxu0 0.0
      %2414 = vmatprep.subr.mxu0 0.0
      %2415 = vmatpush2.msra.mxu0 0.0
      %2416 = vmatprep.subr.mxu0 0.0
      %2417 = vmatpush2.msra.mxu0 0.0
      %2418 = vmatprep.subr.mxu0 0.0
      %2419 = vmatpush2.msra.mxu0 0.0
      %2420 = vmatprep.subr.mxu0 0.0
      %2421 = vmatpush2.msra.mxu0 0.0
      %2422 = vmatprep.subr.mxu0 0.0
      %2423 = vmatpush2.msra.mxu0 0.0
      %2424 = vmatprep.subr.mxu0 0.0
      %2425 = vmatpush2.msra.mxu0 0.0
      %2426 = vmatprep.subr.mxu0 0.0
      %2427 = vmatpush2.msra.mxu0 0.0
      %2428 = vmatprep.subr.mxu0 0.0
      %2429 = vmatpush2.msra.mxu0 0.0
      %2430 = vmatprep.subr.mxu0 0.0
      %2431 = vmatpush2.msra.mxu0 0.0
      %2432 = vmatprep.subr.mxu0 0.0
      %2433 = vmatpush2.msra.mxu0 0.0
      %2434 = vmatprep.subr.mxu0 0.0
      %2435 = vmatpush2.msra.mxu0 0.0
      %2436 = vmatprep.subr.mxu0 0.0
      %2437 = vmatpush2.msra.mxu0 0.0
      %2438 = vmatprep.subr.mxu0 0.0
      %2439 = vmatpush2.msra.mxu0 0.0
      %2440 = vmatprep.mubr.f32.mxu0 0.0
      %2441 = vmatmul.mubr.f32.gmra.mxu0 %v2368
      %v2442 = vpop.f32.mrf.mxu0
      %v2443 = vadd.f32 0.0, %v2442
      %v2444 = vpop.f32.mrf.mxu0
      %v2445 = vadd.f32 0.0, %v2444
      %2446 = vdwg.mxu0
      %v2447 = vadd.f32 %v2363, %v2443
      %v2448 = vadd.f32 %v2364, %v2445
      %v2449 = vld [vmem:[%s374] sm:$0xff]
      %v2450 = vld [vmem:[%s378] sm:$0xff]
      %vm2451 = vcmask 523264
      %v2452 = vsel %vm2451, %v2449, 0.0
      %2453 = vadd.xlane.f32.xlu0 %v2452
      %v2454 = vpop.xlane.xlu0 %2453
      %v2455 = vrcp.pop 64.0
      %v2456 = vmul.f32 %v2454, %v2455
      %v2457 = vsub.f32 %v2449, %v2456
      %v2458 = vmul.f32 %v2457, %v2457
      %v2459 = vsel %vm2451, %v2458, 0.0
      %2460 = vadd.xlane.f32.xlu0 %v2459
      %v2461 = vpop.xlane.xlu0 %2460
      %v2462 = vmul.f32 %v2461, %v2455
      %v2463 = vadd.f32 %v2462, 1e-05
      %v2464 = vrsqrt.pop %v2463
      %v2465 = vmul.f32 %v2457, %v2464
      %v2466 = vrot.slane %v2456, 4
      %v2467 = vadd.f32 %v2456, %v2466
      %v2468 = vrot.slane %v2467, 2
      %v2469 = vadd.f32 %v2467, %v2468
      %v2470 = vrot.slane %v2469, 1
      %v2471 = vadd.f32 %v2469, %v2470
      %v2472 = vrcp.pop 8.0
      %v2473 = vmul.f32 %v2471, %v2472
      %v2474 = vsub.f32 %v2456, %v2473
      %v2475 = vmul.f32 %v2474, %v2474
      %v2476 = vrot.slane %v2475, 4
      %v2477 = vadd.f32 %v2475, %v2476
      %v2478 = vrot.slane %v2477, 2
      %v2479 = vadd.f32 %v2477, %v2478
      %v2480 = vrot.slane %v2479, 1
      %v2481 = vadd.f32 %v2479, %v2480
      %v2482 = vrcp.pop 7.0
      %v2483 = vmul.f32 %v2481, %v2482
      %v2484 = vadd.f32 %v2483, 1e-05
      %v2485 = vrsqrt.pop %v2484
      %v2486 = vmul.f32 %v2474, %v2485
      %v2487 = vmul.f32 %v2486, %v2450
      %2489 = vset.pattern.permute.xlu0 1
      %2490 = vperm.xlu0 %2489, %v2487
      %v2491 = vpop.permute.xlu0 %2490
      %v2493 = vadd.f32 %v2465, %v2491
      %2495 = vset.pattern.permute.xlu0 0
      %2496 = vperm.xlu0 %2495, %v2450
      %v2497 = vpop.permute.xlu0 %2496
      %v2499 = vmul.f32 %v2497, %v2493
      %2500 = vset.pattern.permute.xlu0 2
      %2501 = vperm.xlu0 %2500, %v2450
      %v2502 = vpop.permute.xlu0 %2501
      %v2504 = vadd.f32 %v2499, %v2502
      %v2505 = vld [vmem:[%s7] sm:$0xff]
      %v2506 = vld [vmem:[%s7 + $0x8] sm:$0xff]
      %v2507 = vld [vmem:[%s7 + $0x10] sm:$0xff]
      %v2508 = vld [vmem:[%s7 + $0x18] sm:$0xff]
      %v2509 = vld [vmem:[%s7 + $0x20] sm:$0xff]
      %v2510 = vld [vmem:[%s7 + $0x28] sm:$0xff]
      %v2511 = vld [vmem:[%s7 + $0x30] sm:$0xff]
      %v2512 = vld [vmem:[%s7 + $0x38] sm:$0xff]
      %v2513 = vld [vmem:[%s7 + $0x40] sm:$0xff]
      %v2514 = vld [vmem:[%s7 + $0x48] sm:$0xff]
      %v2515 = vld [vmem:[%s7 + $0x50] sm:$0xff]
      %v2516 = vld [vmem:[%s7 + $0x58] sm:$0xff]
      %v2517 = vld [vmem:[%s7 + $0x60] sm:$0xff]
      %v2518 = vld [vmem:[%s7 + $0x68] sm:$0xff]
      %v2519 = vld [vmem:[%s7 + $0x70] sm:$0xff]
      %v2520 = vld [vmem:[%s7 + $0x78] sm:$0xff]
      %v2521 = vld [vmem:[%s7 + $0x80] sm:$0xff]
      %v2522 = vld [vmem:[%s7 + $0x88] sm:$0xff]
      %v2523 = vld [vmem:[%s7 + $0x90] sm:$0xff]
      %v2524 = vld [vmem:[%s7 + $0x98] sm:$0xff]
      %v2525 = vld [vmem:[%s7 + $0xa0] sm:$0xff]
      %v2526 = vld [vmem:[%s7 + $0xa8] sm:$0xff]
      %v2527 = vld [vmem:[%s7 + $0xb0] sm:$0xff]
      %v2528 = vld [vmem:[%s7 + $0xb8] sm:$0xff]
      %v2529 = vld [vmem:[%s7 + $0xc0] sm:$0xff]
      %v2530 = vld [vmem:[%s7 + $0xc8] sm:$0xff]
      %v2531 = vld [vmem:[%s7 + $0xd0] sm:$0xff]
      %v2532 = vld [vmem:[%s7 + $0xd8] sm:$0xff]
      %v2533 = vld [vmem:[%s7 + $0xe0] sm:$0xff]
      %v2534 = vld [vmem:[%s7 + $0xe8] sm:$0xff]
      %v2535 = vld [vmem:[%s7 + $0xf0] sm:$0xff]
      %v2536 = vld [vmem:[%s7 + $0xf8] sm:$0xff]
      %v2537 = vld [vmem:[%s7 + $0x100] sm:$0xff]
      %v2538 = vld [vmem:[%s7 + $0x108] sm:$0xff]
      %v2539 = vld [vmem:[%s7 + $0x110] sm:$0xff]
      %v2540 = vld [vmem:[%s7 + $0x118] sm:$0xff]
      %v2541 = vld [vmem:[%s7 + $0x120] sm:$0xff]
      %v2542 = vld [vmem:[%s7 + $0x128] sm:$0xff]
      %v2543 = vld [vmem:[%s7 + $0x130] sm:$0xff]
      %v2544 = vld [vmem:[%s7 + $0x138] sm:$0xff]
      %v2545 = vld [vmem:[%s7 + $0x140] sm:$0xff]
      %v2546 = vld [vmem:[%s7 + $0x148] sm:$0xff]
      %v2547 = vld [vmem:[%s7 + $0x150] sm:$0xff]
      %v2548 = vld [vmem:[%s7 + $0x158] sm:$0xff]
      %v2549 = vld [vmem:[%s7 + $0x160] sm:$0xff]
      %v2550 = vld [vmem:[%s7 + $0x168] sm:$0xff]
      %v2551 = vld [vmem:[%s7 + $0x170] sm:$0xff]
      %v2552 = vld [vmem:[%s7 + $0x178] sm:$0xff]
      %v2553 = vld [vmem:[%s7 + $0x180] sm:$0xff]
      %v2554 = vld [vmem:[%s7 + $0x188] sm:$0xff]
      %v2555 = vld [vmem:[%s7 + $0x190] sm:$0xff]
      %v2556 = vld [vmem:[%s7 + $0x198] sm:$0xff]
      %v2557 = vld [vmem:[%s7 + $0x1a0] sm:$0xff]
      %v2558 = vld [vmem:[%s7 + $0x1a8] sm:$0xff]
      %v2559 = vld [vmem:[%s7 + $0x1b0] sm:$0xff]
      %v2560 = vld [vmem:[%s7 + $0x1b8] sm:$0xff]
      %v2561 = vld [vmem:[%s7 + $0x1c0] sm:$0xff]
      %v2562 = vld [vmem:[%s7 + $0x1c8] sm:$0xff]
      %v2563 = vld [vmem:[%s7 + $0x1d0] sm:$0xff]
      %v2564 = vld [vmem:[%s7 + $0x1d8] sm:$0xff]
      %v2565 = vld [vmem:[%s7 + $0x1e0] sm:$0xff]
      %v2566 = vld [vmem:[%s7 + $0x1e8] sm:$0xff]
      %v2567 = vld [vmem:[%s7 + $0x1f0] sm:$0xff]
      %v2568 = vld [vmem:[%s7 + $0x1f8] sm:$0xff]
      %v2569 = vld [vmem:[%s7 + $0x200] sm:$0xff]
      %v2570 = vld [vmem:[%s7 + $0x208] sm:$0xff]
      %v2571 = vld [vmem:[%s7 + $0x210] sm:$0xff]
      %v2572 = vld [vmem:[%s7 + $0x218] sm:$0xff]
      %v2573 = vld [vmem:[%s7 + $0x220] sm:$0xff]
      %v2574 = vld [vmem:[%s7 + $0x228] sm:$0xff]
      %v2575 = vld [vmem:[%s7 + $0x230] sm:$0xff]
      %v2576 = vld [vmem:[%s7 + $0x238] sm:$0xff]
      %v2577 = vld [vmem:[%s7 + $0x240] sm:$0xff]
      %v2578 = vld [vmem:[%s7 + $0x248] sm:$0xff]
      %v2579 = vld [vmem:[%s7 + $0x250] sm:$0xff]
      %v2580 = vld [vmem:[%s7 + $0x258] sm:$0xff]
      %v2581 = vld [vmem:[%s7 + $0x260] sm:$0xff]
      %v2582 = vld [vmem:[%s7 + $0x268] sm:$0xff]
      %v2583 = vld [vmem:[%s7 + $0x270] sm:$0xff]
      %v2584 = vld [vmem:[%s7 + $0x278] sm:$0xff]
      %v2585 = vld [vmem:[%s7 + $0x280] sm:$0xff]
      %v2586 = vld [vmem:[%s7 + $0x288] sm:$0xff]
      %v2587 = vld [vmem:[%s7 + $0x290] sm:$0xff]
      %v2588 = vld [vmem:[%s7 + $0x298] sm:$0xff]
      %v2589 = vld [vmem:[%s7 + $0x2a0] sm:$0xff]
      %v2590 = vld [vmem:[%s7 + $0x2a8] sm:$0xff]
      %v2591 = vld [vmem:[%s7 + $0x2b0] sm:$0xff]
      %v2592 = vld [vmem:[%s7 + $0x2b8] sm:$0xff]
      %v2593 = vld [vmem:[%s7 + $0x2c0] sm:$0xff]
      %v2594 = vld [vmem:[%s7 + $0x2c8] sm:$0xff]
      %v2595 = vld [vmem:[%s7 + $0x2d0] sm:$0xff]
      %v2596 = vld [vmem:[%s7 + $0x2d8] sm:$0xff]
      %v2597 = vld [vmem:[%s7 + $0x2e0] sm:$0xff]
      %v2598 = vld [vmem:[%s7 + $0x2e8] sm:$0xff]
      %v2599 = vld [vmem:[%s7 + $0x2f0] sm:$0xff]
      %v2600 = vld [vmem:[%s7 + $0x2f8] sm:$0xff]
      %v2601 = vld [vmem:[%s7 + $0x300] sm:$0xff]
      %v2602 = vld [vmem:[%s7 + $0x308] sm:$0xff]
      %v2603 = vld [vmem:[%s7 + $0x310] sm:$0xff]
      %v2604 = vld [vmem:[%s7 + $0x318] sm:$0xff]
      %v2605 = vld [vmem:[%s7 + $0x320] sm:$0xff]
      %v2606 = vld [vmem:[%s7 + $0x328] sm:$0xff]
      %v2607 = vld [vmem:[%s7 + $0x330] sm:$0xff]
      %v2608 = vld [vmem:[%s7 + $0x338] sm:$0xff]
      %v2609 = vld [vmem:[%s7 + $0x340] sm:$0xff]
      %v2610 = vld [vmem:[%s7 + $0x348] sm:$0xff]
      %v2611 = vld [vmem:[%s7 + $0x350] sm:$0xff]
      %v2612 = vld [vmem:[%s7 + $0x358] sm:$0xff]
      %v2613 = vld [vmem:[%s7 + $0x360] sm:$0xff]
      %v2614 = vld [vmem:[%s7 + $0x368] sm:$0xff]
      %v2615 = vld [vmem:[%s7 + $0x370] sm:$0xff]
      %v2616 = vld [vmem:[%s7 + $0x378] sm:$0xff]
      %v2617 = vld [vmem:[%s7 + $0x380] sm:$0xff]
      %v2618 = vld [vmem:[%s7 + $0x388] sm:$0xff]
      %v2619 = vld [vmem:[%s7 + $0x390] sm:$0xff]
      %v2620 = vld [vmem:[%s7 + $0x398] sm:$0xff]
      %v2621 = vld [vmem:[%s7 + $0x3a0] sm:$0xff]
      %v2622 = vld [vmem:[%s7 + $0x3a8] sm:$0xff]
      %v2623 = vld [vmem:[%s7 + $0x3b0] sm:$0xff]
      %v2624 = vld [vmem:[%s7 + $0x3b8] sm:$0xff]
      %v2625 = vld [vmem:[%s7 + $0x3c0] sm:$0xff]
      %v2626 = vld [vmem:[%s7 + $0x3c8] sm:$0xff]
      %v2627 = vld [vmem:[%s7 + $0x3d0] sm:$0xff]
      %v2628 = vld [vmem:[%s7 + $0x3d8] sm:$0xff]
      %v2629 = vld [vmem:[%s7 + $0x3e0] sm:$0xff]
      %v2630 = vld [vmem:[%s7 + $0x3e8] sm:$0xff]
      %v2631 = vld [vmem:[%s7 + $0x3f0] sm:$0xff]
      %v2632 = vld [vmem:[%s7 + $0x3f8] sm:$0xff]
      %v2633 = vld [vmem:[%s7 + $0x400] sm:$0xff]
      %v2634 = vld [vmem:[%s7 + $0x408] sm:$0xff]
      %v2635 = vld [vmem:[%s7 + $0x410] sm:$0xff]
      %v2636 = vld [vmem:[%s7 + $0x418] sm:$0xff]
      %v2637 = vld [vmem:[%s7 + $0x420] sm:$0xff]
      %v2638 = vld [vmem:[%s7 + $0x428] sm:$0xff]
      %v2639 = vld [vmem:[%s7 + $0x430] sm:$0xff]
      %v2640 = vld [vmem:[%s7 + $0x438] sm:$0xff]
      %v2641 = vld [vmem:[%s7 + $0x440] sm:$0xff]
      %v2642 = vld [vmem:[%s7 + $0x448] sm:$0xff]
      %v2643 = vld [vmem:[%s7 + $0x450] sm:$0xff]
      %v2644 = vld [vmem:[%s7 + $0x458] sm:$0xff]
      %v2645 = vld [vmem:[%s7 + $0x460] sm:$0xff]
      %v2646 = vld [vmem:[%s7 + $0x468] sm:$0xff]
      %v2647 = vld [vmem:[%s7 + $0x470] sm:$0xff]
      %v2648 = vld [vmem:[%s7 + $0x478] sm:$0xff]
      %v2650 = vsel %vm2451, %v2504, 0
      %2652 = vmatprep.subr.mxu0 0.0
      %2653 = vmatpush1.msra.mxu0 0.0
      %2654 = vmatprep.subr.mxu0 0.0
      %2655 = vmatpush1.msra.mxu0 0.0
      %2656 = vmatprep.subr.mxu0 0.0
      %2657 = vmatpush1.msra.mxu0 0.0
      %2658 = vmatprep.subr.mxu0 0.0
      %2659 = vmatpush1.msra.mxu0 0.0
      %2660 = vmatprep.subr.mxu0 0.0
      %2661 = vmatpush1.msra.mxu0 0.0
      %2662 = vmatprep.subr.mxu0 0.0
      %2663 = vmatpush1.msra.mxu0 0.0
      %2664 = vmatprep.subr.mxu0 0.0
      %2665 = vmatpush1.msra.mxu0 0.0
      %2666 = vmatprep.subr.mxu0 0.0
      %2667 = vmatpush1.msra.mxu0 0.0
      %2668 = vmatprep.subr.mxu0 %v2632
      %2669 = vmatpush1.msra.mxu0 %v2631
      %2670 = vmatprep.subr.mxu0 %v2614
      %2671 = vmatpush1.msra.mxu0 %v2613
      %2672 = vmatprep.subr.mxu0 %v2596
      %2673 = vmatpush1.msra.mxu0 %v2595
      %2674 = vmatprep.subr.mxu0 %v2578
      %2675 = vmatpush1.msra.mxu0 %v2577
      %2676 = vmatprep.subr.mxu0 %v2560
      %2677 = vmatpush1.msra.mxu0 %v2559
      %2678 = vmatprep.subr.mxu0 %v2542
      %2679 = vmatpush1.msra.mxu0 %v2541
      %2680 = vmatprep.subr.mxu0 %v2524
      %2681 = vmatpush1.msra.mxu0 %v2523
      %2682 = vmatprep.subr.mxu0 %v2506
      %2683 = vmatpush1.msra.mxu0 %v2505
      %2684 = vmatprep.subr.mxu0 0.0
      %2685 = vmatpush2.msra.mxu0 0.0
      %2686 = vmatprep.subr.mxu0 0.0
      %2687 = vmatpush2.msra.mxu0 0.0
      %2688 = vmatprep.subr.mxu0 0.0
      %2689 = vmatpush2.msra.mxu0 0.0
      %2690 = vmatprep.subr.mxu0 0.0
      %2691 = vmatpush2.msra.mxu0 0.0
      %2692 = vmatprep.subr.mxu0 0.0
      %2693 = vmatpush2.msra.mxu0 0.0
      %2694 = vmatprep.subr.mxu0 0.0
      %2695 = vmatpush2.msra.mxu0 0.0
      %2696 = vmatprep.subr.mxu0 0.0
      %2697 = vmatpush2.msra.mxu0 0.0
      %2698 = vmatprep.subr.mxu0 0.0
      %2699 = vmatpush2.msra.mxu0 0.0
      %2700 = vmatprep.subr.mxu0 0.0
      %2701 = vmatpush2.msra.mxu0 0.0
      %2702 = vmatprep.subr.mxu0 0.0
      %2703 = vmatpush2.msra.mxu0 0.0
      %2704 = vmatprep.subr.mxu0 0.0
      %2705 = vmatpush2.msra.mxu0 0.0
      %2706 = vmatprep.subr.mxu0 0.0
      %2707 = vmatpush2.msra.mxu0 0.0
      %2708 = vmatprep.subr.mxu0 0.0
      %2709 = vmatpush2.msra.mxu0 0.0
      %2710 = vmatprep.subr.mxu0 0.0
      %2711 = vmatpush2.msra.mxu0 0.0
      %2712 = vmatprep.subr.mxu0 0.0
      %2713 = vmatpush2.msra.mxu0 0.0
      %2714 = vmatprep.subr.mxu0 0.0
      %2715 = vmatpush2.msra.mxu0 0.0
      %2716 = vmatprep.mubr.f32.mxu0 0.0
      %2717 = vmatmul.mubr.f32.gmra.mxu0 %v2650
      %v2718 = vpop.f32.mrf.mxu0
      %v2719 = vadd.f32 0.0, %v2718
      %v2720 = vpop.f32.mrf.mxu0
      %v2721 = vadd.f32 0.0, %v2720
      %2722 = vdwg.mxu0
      %2723 = vmatprep.subr.mxu0 0.0
      %2724 = vmatpush1.msra.mxu0 0.0
      %2725 = vmatprep.subr.mxu0 0.0
      %2726 = vmatpush1.msra.mxu0 0.0
      %2727 = vmatprep.subr.mxu0 0.0
      %2728 = vmatpush1.msra.mxu0 0.0
      %2729 = vmatprep.subr.mxu0 0.0
      %2730 = vmatpush1.msra.mxu0 0.0
      %2731 = vmatprep.subr.mxu0 0.0
      %2732 = vmatpush1.msra.mxu0 0.0
      %2733 = vmatprep.subr.mxu0 0.0
      %2734 = vmatpush1.msra.mxu0 0.0
      %2735 = vmatprep.subr.mxu0 0.0
      %2736 = vmatpush1.msra.mxu0 0.0
      %2737 = vmatprep.subr.mxu0 0.0
      %2738 = vmatpush1.msra.mxu0 0.0
      %2739 = vmatprep.subr.mxu0 %v2634
      %2740 = vmatpush1.msra.mxu0 %v2633
      %2741 = vmatprep.subr.mxu0 %v2616
      %2742 = vmatpush1.msra.mxu0 %v2615
      %2743 = vmatprep.subr.mxu0 %v2598
      %2744 = vmatpush1.msra.mxu0 %v2597
      %2745 = vmatprep.subr.mxu0 %v2580
      %2746 = vmatpush1.msra.mxu0 %v2579
      %2747 = vmatprep.subr.mxu0 %v2562
      %2748 = vmatpush1.msra.mxu0 %v2561
      %2749 = vmatprep.subr.mxu0 %v2544
      %2750 = vmatpush1.msra.mxu0 %v2543
      %2751 = vmatprep.subr.mxu0 %v2526
      %2752 = vmatpush1.msra.mxu0 %v2525
      %2753 = vmatprep.subr.mxu0 %v2508
      %2754 = vmatpush1.msra.mxu0 %v2507
      %2755 = vmatprep.subr.mxu0 0.0
      %2756 = vmatpush2.msra.mxu0 0.0
      %2757 = vmatprep.subr.mxu0 0.0
      %2758 = vmatpush2.msra.mxu0 0.0
      %2759 = vmatprep.subr.mxu0 0.0
      %2760 = vmatpush2.msra.mxu0 0.0
      %2761 = vmatprep.subr.mxu0 0.0
      %2762 = vmatpush2.msra.mxu0 0.0
      %2763 = vmatprep.subr.mxu0 0.0
      %2764 = vmatpush2.msra.mxu0 0.0
      %2765 = vmatprep.subr.mxu0 0.0
      %2766 = vmatpush2.msra.mxu0 0.0
      %2767 = vmatprep.subr.mxu0 0.0
      %2768 = vmatpush2.msra.mxu0 0.0
      %2769 = vmatprep.subr.mxu0 0.0
      %2770 = vmatpush2.msra.mxu0 0.0
      %2771 = vmatprep.subr.mxu0 0.0
      %2772 = vmatpush2.msra.mxu0 0.0
      %2773 = vmatprep.subr.mxu0 0.0
      %2774 = vmatpush2.msra.mxu0 0.0
      %2775 = vmatprep.subr.mxu0 0.0
      %2776 = vmatpush2.msra.mxu0 0.0
      %2777 = vmatprep.subr.mxu0 0.0
      %2778 = vmatpush2.msra.mxu0 0.0
      %2779 = vmatprep.subr.mxu0 0.0
      %2780 = vmatpush2.msra.mxu0 0.0
      %2781 = vmatprep.subr.mxu0 0.0
      %2782 = vmatpush2.msra.mxu0 0.0
      %2783 = vmatprep.subr.mxu0 0.0
      %2784 = vmatpush2.msra.mxu0 0.0
      %2785 = vmatprep.subr.mxu0 0.0
      %2786 = vmatpush2.msra.mxu0 0.0
      %2787 = vmatprep.mubr.f32.mxu0 0.0
      %2788 = vmatmul.mubr.f32.gmra.mxu0 %v2650
      %v2789 = vpop.f32.mrf.mxu0
      %v2790 = vadd.f32 0.0, %v2789
      %v2791 = vpop.f32.mrf.mxu0
      %v2792 = vadd.f32 0.0, %v2791
      %2793 = vdwg.mxu0
      %2794 = vmatprep.subr.mxu0 0.0
      %2795 = vmatpush1.msra.mxu0 0.0
      %2796 = vmatprep.subr.mxu0 0.0
      %2797 = vmatpush1.msra.mxu0 0.0
      %2798 = vmatprep.subr.mxu0 0.0
      %2799 = vmatpush1.msra.mxu0 0.0
      %2800 = vmatprep.subr.mxu0 0.0
      %2801 = vmatpush1.msra.mxu0 0.0
      %2802 = vmatprep.subr.mxu0 0.0
      %2803 = vmatpush1.msra.mxu0 0.0
      %2804 = vmatprep.subr.mxu0 0.0
      %2805 = vmatpush1.msra.mxu0 0.0
      %2806 = vmatprep.subr.mxu0 0.0
      %2807 = vmatpush1.msra.mxu0 0.0
      %2808 = vmatprep.subr.mxu0 0.0
      %2809 = vmatpush1.msra.mxu0 0.0
      %2810 = vmatprep.subr.mxu0 %v2636
      %2811 = vmatpush1.msra.mxu0 %v2635
      %2812 = vmatprep.subr.mxu0 %v2618
      %2813 = vmatpush1.msra.mxu0 %v2617
      %2814 = vmatprep.subr.mxu0 %v2600
      %2815 = vmatpush1.msra.mxu0 %v2599
      %2816 = vmatprep.subr.mxu0 %v2582
      %2817 = vmatpush1.msra.mxu0 %v2581
      %2818 = vmatprep.subr.mxu0 %v2564
      %2819 = vmatpush1.msra.mxu0 %v2563
      %2820 = vmatprep.subr.mxu0 %v2546
      %2821 = vmatpush1.msra.mxu0 %v2545
      %2822 = vmatprep.subr.mxu0 %v2528
      %2823 = vmatpush1.msra.mxu0 %v2527
      %2824 = vmatprep.subr.mxu0 %v2510
      %2825 = vmatpush1.msra.mxu0 %v2509
      %2826 = vmatprep.subr.mxu0 0.0
      %2827 = vmatpush2.msra.mxu0 0.0
      %2828 = vmatprep.subr.mxu0 0.0
      %2829 = vmatpush2.msra.mxu0 0.0
      %2830 = vmatprep.subr.mxu0 0.0
      %2831 = vmatpush2.msra.mxu0 0.0
      %2832 = vmatprep.subr.mxu0 0.0
      %2833 = vmatpush2.msra.mxu0 0.0
      %2834 = vmatprep.subr.mxu0 0.0
      %2835 = vmatpush2.msra.mxu0 0.0
      %2836 = vmatprep.subr.mxu0 0.0
      %2837 = vmatpush2.msra.mxu0 0.0
      %2838 = vmatprep.subr.mxu0 0.0
      %2839 = vmatpush2.msra.mxu0 0.0
      %2840 = vmatprep.subr.mxu0 0.0
      %2841 = vmatpush2.msra.mxu0 0.0
      %2842 = vmatprep.subr.mxu0 0.0
      %2843 = vmatpush2.msra.mxu0 0.0
      %2844 = vmatprep.subr.mxu0 0.0
      %2845 = vmatpush2.msra.mxu0 0.0
      %2846 = vmatprep.subr.mxu0 0.0
      %2847 = vmatpush2.msra.mxu0 0.0
      %2848 = vmatprep.subr.mxu0 0.0
      %2849 = vmatpush2.msra.mxu0 0.0
      %2850 = vmatprep.subr.mxu0 0.0
      %2851 = vmatpush2.msra.mxu0 0.0
      %2852 = vmatprep.subr.mxu0 0.0
      %2853 = vmatpush2.msra.mxu0 0.0
      %2854 = vmatprep.subr.mxu0 0.0
      %2855 = vmatpush2.msra.mxu0 0.0
      %2856 = vmatprep.subr.mxu0 0.0
      %2857 = vmatpush2.msra.mxu0 0.0
      %2858 = vmatprep.mubr.f32.mxu0 0.0
      %2859 = vmatmul.mubr.f32.gmra.mxu0 %v2650
      %v2860 = vpop.f32.mrf.mxu0
      %v2861 = vadd.f32 0.0, %v2860
      %v2862 = vpop.f32.mrf.mxu0
      %v2863 = vadd.f32 0.0, %v2862
      %2864 = vdwg.mxu0
      %2865 = vmatprep.subr.mxu0 0.0
      %2866 = vmatpush1.msra.mxu0 0.0
      %2867 = vmatprep.subr.mxu0 0.0
      %2868 = vmatpush1.msra.mxu0 0.0
      %2869 = vmatprep.subr.mxu0 0.0
      %2870 = vmatpush1.msra.mxu0 0.0
      %2871 = vmatprep.subr.mxu0 0.0
      %2872 = vmatpush1.msra.mxu0 0.0
      %2873 = vmatprep.subr.mxu0 0.0
      %2874 = vmatpush1.msra.mxu0 0.0
      %2875 = vmatprep.subr.mxu0 0.0
      %2876 = vmatpush1.msra.mxu0 0.0
      %2877 = vmatprep.subr.mxu0 0.0
      %2878 = vmatpush1.msra.mxu0 0.0
      %2879 = vmatprep.subr.mxu0 0.0
      %2880 = vmatpush1.msra.mxu0 0.0
      %2881 = vmatprep.subr.mxu0 %v2638
      %2882 = vmatpush1.msra.mxu0 %v2637
      %2883 = vmatprep.subr.mxu0 %v2620
      %2884 = vmatpush1.msra.mxu0 %v2619
      %2885 = vmatprep.subr.mxu0 %v2602
      %2886 = vmatpush1.msra.mxu0 %v2601
      %2887 = vmatprep.subr.mxu0 %v2584
      %2888 = vmatpush1.msra.mxu0 %v2583
      %2889 = vmatprep.subr.mxu0 %v2566
      %2890 = vmatpush1.msra.mxu0 %v2565
      %2891 = vmatprep.subr.mxu0 %v2548
      %2892 = vmatpush1.msra.mxu0 %v2547
      %2893 = vmatprep.subr.mxu0 %v2530
      %2894 = vmatpush1.msra.mxu0 %v2529
      %2895 = vmatprep.subr.mxu0 %v2512
      %2896 = vmatpush1.msra.mxu0 %v2511
      %2897 = vmatprep.subr.mxu0 0.0
      %2898 = vmatpush2.msra.mxu0 0.0
      %2899 = vmatprep.subr.mxu0 0.0
      %2900 = vmatpush2.msra.mxu0 0.0
      %2901 = vmatprep.subr.mxu0 0.0
      %2902 = vmatpush2.msra.mxu0 0.0
      %2903 = vmatprep.subr.mxu0 0.0
      %2904 = vmatpush2.msra.mxu0 0.0
      %2905 = vmatprep.subr.mxu0 0.0
      %2906 = vmatpush2.msra.mxu0 0.0
      %2907 = vmatprep.subr.mxu0 0.0
      %2908 = vmatpush2.msra.mxu0 0.0
      %2909 = vmatprep.subr.mxu0 0.0
      %2910 = vmatpush2.msra.mxu0 0.0
      %2911 = vmatprep.subr.mxu0 0.0
      %2912 = vmatpush2.msra.mxu0 0.0
      %2913 = vmatprep.subr.mxu0 0.0
      %2914 = vmatpush2.msra.mxu0 0.0
      %2915 = vmatprep.subr.mxu0 0.0
      %2916 = vmatpush2.msra.mxu0 0.0
      %2917 = vmatprep.subr.mxu0 0.0
      %2918 = vmatpush2.msra.mxu0 0.0
      %2919 = vmatprep.subr.mxu0 0.0
      %2920 = vmatpush2.msra.mxu0 0.0
      %2921 = vmatprep.subr.mxu0 0.0
      %2922 = vmatpush2.msra.mxu0 0.0
      %2923 = vmatprep.subr.mxu0 0.0
      %2924 = vmatpush2.msra.mxu0 0.0
      %2925 = vmatprep.subr.mxu0 0.0
      %2926 = vmatpush2.msra.mxu0 0.0
      %2927 = vmatprep.subr.mxu0 0.0
      %2928 = vmatpush2.msra.mxu0 0.0
      %2929 = vmatprep.mubr.f32.mxu0 0.0
      %2930 = vmatmul.mubr.f32.gmra.mxu0 %v2650
      %v2931 = vpop.f32.mrf.mxu0
      %v2932 = vadd.f32 0.0, %v2931
      %v2933 = vpop.f32.mrf.mxu0
      %v2934 = vadd.f32 0.0, %v2933
      %2935 = vdwg.mxu0
      %2936 = vmatprep.subr.mxu0 0.0
      %2937 = vmatpush1.msra.mxu0 0.0
      %2938 = vmatprep.subr.mxu0 0.0
      %2939 = vmatpush1.msra.mxu0 0.0
      %2940 = vmatprep.subr.mxu0 0.0
      %2941 = vmatpush1.msra.mxu0 0.0
      %2942 = vmatprep.subr.mxu0 0.0
      %2943 = vmatpush1.msra.mxu0 0.0
      %2944 = vmatprep.subr.mxu0 0.0
      %2945 = vmatpush1.msra.mxu0 0.0
      %2946 = vmatprep.subr.mxu0 0.0
      %2947 = vmatpush1.msra.mxu0 0.0
      %2948 = vmatprep.subr.mxu0 0.0
      %2949 = vmatpush1.msra.mxu0 0.0
      %2950 = vmatprep.subr.mxu0 0.0
      %2951 = vmatpush1.msra.mxu0 0.0
      %2952 = vmatprep.subr.mxu0 %v2640
      %2953 = vmatpush1.msra.mxu0 %v2639
      %2954 = vmatprep.subr.mxu0 %v2622
      %2955 = vmatpush1.msra.mxu0 %v2621
      %2956 = vmatprep.subr.mxu0 %v2604
      %2957 = vmatpush1.msra.mxu0 %v2603
      %2958 = vmatprep.subr.mxu0 %v2586
      %2959 = vmatpush1.msra.mxu0 %v2585
      %2960 = vmatprep.subr.mxu0 %v2568
      %2961 = vmatpush1.msra.mxu0 %v2567
      %2962 = vmatprep.subr.mxu0 %v2550
      %2963 = vmatpush1.msra.mxu0 %v2549
      %2964 = vmatprep.subr.mxu0 %v2532
      %2965 = vmatpush1.msra.mxu0 %v2531
      %2966 = vmatprep.subr.mxu0 %v2514
      %2967 = vmatpush1.msra.mxu0 %v2513
      %2968 = vmatprep.subr.mxu0 0.0
      %2969 = vmatpush2.msra.mxu0 0.0
      %2970 = vmatprep.subr.mxu0 0.0
      %2971 = vmatpush2.msra.mxu0 0.0
      %2972 = vmatprep.subr.mxu0 0.0
      %2973 = vmatpush2.msra.mxu0 0.0
      %2974 = vmatprep.subr.mxu0 0.0
      %2975 = vmatpush2.msra.mxu0 0.0
      %2976 = vmatprep.subr.mxu0 0.0
      %2977 = vmatpush2.msra.mxu0 0.0
      %2978 = vmatprep.subr.mxu0 0.0
      %2979 = vmatpush2.msra.mxu0 0.0
      %2980 = vmatprep.subr.mxu0 0.0
      %2981 = vmatpush2.msra.mxu0 0.0
      %2982 = vmatprep.subr.mxu0 0.0
      %2983 = vmatpush2.msra.mxu0 0.0
      %2984 = vmatprep.subr.mxu0 0.0
      %2985 = vmatpush2.msra.mxu0 0.0
      %2986 = vmatprep.subr.mxu0 0.0
      %2987 = vmatpush2.msra.mxu0 0.0
      %2988 = vmatprep.subr.mxu0 0.0
      %2989 = vmatpush2.msra.mxu0 0.0
      %2990 = vmatprep.subr.mxu0 0.0
      %2991 = vmatpush2.msra.mxu0 0.0
      %2992 = vmatprep.subr.mxu0 0.0
      %2993 = vmatpush2.msra.mxu0 0.0
      %2994 = vmatprep.subr.mxu0 0.0
      %2995 = vmatpush2.msra.mxu0 0.0
      %2996 = vmatprep.subr.mxu0 0.0
      %2997 = vmatpush2.msra.mxu0 0.0
      %2998 = vmatprep.subr.mxu0 0.0
      %2999 = vmatpush2.msra.mxu0 0.0
      %3000 = vmatprep.mubr.f32.mxu0 0.0
      %3001 = vmatmul.mubr.f32.gmra.mxu0 %v2650
      %v3002 = vpop.f32.mrf.mxu0
      %v3003 = vadd.f32 0.0, %v3002
      %v3004 = vpop.f32.mrf.mxu0
      %v3005 = vadd.f32 0.0, %v3004
      %3006 = vdwg.mxu0
      %3007 = vmatprep.subr.mxu0 0.0
      %3008 = vmatpush1.msra.mxu0 0.0
      %3009 = vmatprep.subr.mxu0 0.0
      %3010 = vmatpush1.msra.mxu0 0.0
      %3011 = vmatprep.subr.mxu0 0.0
      %3012 = vmatpush1.msra.mxu0 0.0
      %3013 = vmatprep.subr.mxu0 0.0
      %3014 = vmatpush1.msra.mxu0 0.0
      %3015 = vmatprep.subr.mxu0 0.0
      %3016 = vmatpush1.msra.mxu0 0.0
      %3017 = vmatprep.subr.mxu0 0.0
      %3018 = vmatpush1.msra.mxu0 0.0
      %3019 = vmatprep.subr.mxu0 0.0
      %3020 = vmatpush1.msra.mxu0 0.0
      %3021 = vmatprep.subr.mxu0 0.0
      %3022 = vmatpush1.msra.mxu0 0.0
      %3023 = vmatprep.subr.mxu0 %v2642
      %3024 = vmatpush1.msra.mxu0 %v2641
      %3025 = vmatprep.subr.mxu0 %v2624
      %3026 = vmatpush1.msra.mxu0 %v2623
      %3027 = vmatprep.subr.mxu0 %v2606
      %3028 = vmatpush1.msra.mxu0 %v2605
      %3029 = vmatprep.subr.mxu0 %v2588
      %3030 = vmatpush1.msra.mxu0 %v2587
      %3031 = vmatprep.subr.mxu0 %v2570
      %3032 = vmatpush1.msra.mxu0 %v2569
      %3033 = vmatprep.subr.mxu0 %v2552
      %3034 = vmatpush1.msra.mxu0 %v2551
      %3035 = vmatprep.subr.mxu0 %v2534
      %3036 = vmatpush1.msra.mxu0 %v2533
      %3037 = vmatprep.subr.mxu0 %v2516
      %3038 = vmatpush1.msra.mxu0 %v2515
      %3039 = vmatprep.subr.mxu0 0.0
      %3040 = vmatpush2.msra.mxu0 0.0
      %3041 = vmatprep.subr.mxu0 0.0
      %3042 = vmatpush2.msra.mxu0 0.0
      %3043 = vmatprep.subr.mxu0 0.0
      %3044 = vmatpush2.msra.mxu0 0.0
      %3045 = vmatprep.subr.mxu0 0.0
      %3046 = vmatpush2.msra.mxu0 0.0
      %3047 = vmatprep.subr.mxu0 0.0
      %3048 = vmatpush2.msra.mxu0 0.0
      %3049 = vmatprep.subr.mxu0 0.0
      %3050 = vmatpush2.msra.mxu0 0.0
      %3051 = vmatprep.subr.mxu0 0.0
      %3052 = vmatpush2.msra.mxu0 0.0
      %3053 = vmatprep.subr.mxu0 0.0
      %3054 = vmatpush2.msra.mxu0 0.0
      %3055 = vmatprep.subr.mxu0 0.0
      %3056 = vmatpush2.msra.mxu0 0.0
      %3057 = vmatprep.subr.mxu0 0.0
      %3058 = vmatpush2.msra.mxu0 0.0
      %3059 = vmatprep.subr.mxu0 0.0
      %3060 = vmatpush2.msra.mxu0 0.0
      %3061 = vmatprep.subr.mxu0 0.0
      %3062 = vmatpush2.msra.mxu0 0.0
      %3063 = vmatprep.subr.mxu0 0.0
      %3064 = vmatpush2.msra.mxu0 0.0
      %3065 = vmatprep.subr.mxu0 0.0
      %3066 = vmatpush2.msra.mxu0 0.0
      %3067 = vmatprep.subr.mxu0 0.0
      %3068 = vmatpush2.msra.mxu0 0.0
      %3069 = vmatprep.subr.mxu0 0.0
      %3070 = vmatpush2.msra.mxu0 0.0
      %3071 = vmatprep.mubr.f32.mxu0 0.0
      %3072 = vmatmul.mubr.f32.gmra.mxu0 %v2650
      %v3073 = vpop.f32.mrf.mxu0
      %v3074 = vadd.f32 0.0, %v3073
      %v3075 = vpop.f32.mrf.mxu0
      %v3076 = vadd.f32 0.0, %v3075
      %3077 = vdwg.mxu0
      %3078 = vmatprep.subr.mxu0 0.0
      %3079 = vmatpush1.msra.mxu0 0.0
      %3080 = vmatprep.subr.mxu0 0.0
      %3081 = vmatpush1.msra.mxu0 0.0
      %3082 = vmatprep.subr.mxu0 0.0
      %3083 = vmatpush1.msra.mxu0 0.0
      %3084 = vmatprep.subr.mxu0 0.0
      %3085 = vmatpush1.msra.mxu0 0.0
      %3086 = vmatprep.subr.mxu0 0.0
      %3087 = vmatpush1.msra.mxu0 0.0
      %3088 = vmatprep.subr.mxu0 0.0
      %3089 = vmatpush1.msra.mxu0 0.0
      %3090 = vmatprep.subr.mxu0 0.0
      %3091 = vmatpush1.msra.mxu0 0.0
      %3092 = vmatprep.subr.mxu0 0.0
      %3093 = vmatpush1.msra.mxu0 0.0
      %3094 = vmatprep.subr.mxu0 %v2644
      %3095 = vmatpush1.msra.mxu0 %v2643
      %3096 = vmatprep.subr.mxu0 %v2626
      %3097 = vmatpush1.msra.mxu0 %v2625
      %3098 = vmatprep.subr.mxu0 %v2608
      %3099 = vmatpush1.msra.mxu0 %v2607
      %3100 = vmatprep.subr.mxu0 %v2590
      %3101 = vmatpush1.msra.mxu0 %v2589
      %3102 = vmatprep.subr.mxu0 %v2572
      %3103 = vmatpush1.msra.mxu0 %v2571
      %3104 = vmatprep.subr.mxu0 %v2554
      %3105 = vmatpush1.msra.mxu0 %v2553
      %3106 = vmatprep.subr.mxu0 %v2536
      %3107 = vmatpush1.msra.mxu0 %v2535
      %3108 = vmatprep.subr.mxu0 %v2518
      %3109 = vmatpush1.msra.mxu0 %v2517
      %3110 = vmatprep.subr.mxu0 0.0
      %3111 = vmatpush2.msra.mxu0 0.0
      %3112 = vmatprep.subr.mxu0 0.0
      %3113 = vmatpush2.msra.mxu0 0.0
      %3114 = vmatprep.subr.mxu0 0.0
      %3115 = vmatpush2.msra.mxu0 0.0
      %3116 = vmatprep.subr.mxu0 0.0
      %3117 = vmatpush2.msra.mxu0 0.0
      %3118 = vmatprep.subr.mxu0 0.0
      %3119 = vmatpush2.msra.mxu0 0.0
      %3120 = vmatprep.subr.mxu0 0.0
      %3121 = vmatpush2.msra.mxu0 0.0
      %3122 = vmatprep.subr.mxu0 0.0
      %3123 = vmatpush2.msra.mxu0 0.0
      %3124 = vmatprep.subr.mxu0 0.0
      %3125 = vmatpush2.msra.mxu0 0.0
      %3126 = vmatprep.subr.mxu0 0.0
      %3127 = vmatpush2.msra.mxu0 0.0
      %3128 = vmatprep.subr.mxu0 0.0
      %3129 = vmatpush2.msra.mxu0 0.0
      %3130 = vmatprep.subr.mxu0 0.0
      %3131 = vmatpush2.msra.mxu0 0.0
      %3132 = vmatprep.subr.mxu0 0.0
      %3133 = vmatpush2.msra.mxu0 0.0
      %3134 = vmatprep.subr.mxu0 0.0
      %3135 = vmatpush2.msra.mxu0 0.0
      %3136 = vmatprep.subr.mxu0 0.0
      %3137 = vmatpush2.msra.mxu0 0.0
      %3138 = vmatprep.subr.mxu0 0.0
      %3139 = vmatpush2.msra.mxu0 0.0
      %3140 = vmatprep.subr.mxu0 0.0
      %3141 = vmatpush2.msra.mxu0 0.0
      %3142 = vmatprep.mubr.f32.mxu0 0.0
      %3143 = vmatmul.mubr.f32.gmra.mxu0 %v2650
      %v3144 = vpop.f32.mrf.mxu0
      %v3145 = vadd.f32 0.0, %v3144
      %v3146 = vpop.f32.mrf.mxu0
      %v3147 = vadd.f32 0.0, %v3146
      %3148 = vdwg.mxu0
      %3149 = vmatprep.subr.mxu0 0.0
      %3150 = vmatpush1.msra.mxu0 0.0
      %3151 = vmatprep.subr.mxu0 0.0
      %3152 = vmatpush1.msra.mxu0 0.0
      %3153 = vmatprep.subr.mxu0 0.0
      %3154 = vmatpush1.msra.mxu0 0.0
      %3155 = vmatprep.subr.mxu0 0.0
      %3156 = vmatpush1.msra.mxu0 0.0
      %3157 = vmatprep.subr.mxu0 0.0
      %3158 = vmatpush1.msra.mxu0 0.0
      %3159 = vmatprep.subr.mxu0 0.0
      %3160 = vmatpush1.msra.mxu0 0.0
      %3161 = vmatprep.subr.mxu0 0.0
      %3162 = vmatpush1.msra.mxu0 0.0
      %3163 = vmatprep.subr.mxu0 0.0
      %3164 = vmatpush1.msra.mxu0 0.0
      %3165 = vmatprep.subr.mxu0 %v2646
      %3166 = vmatpush1.msra.mxu0 %v2645
      %3167 = vmatprep.subr.mxu0 %v2628
      %3168 = vmatpush1.msra.mxu0 %v2627
      %3169 = vmatprep.subr.mxu0 %v2610
      %3170 = vmatpush1.msra.mxu0 %v2609
      %3171 = vmatprep.subr.mxu0 %v2592
      %3172 = vmatpush1.msra.mxu0 %v2591
      %3173 = vmatprep.subr.mxu0 %v2574
      %3174 = vmatpush1.msra.mxu0 %v2573
      %3175 = vmatprep.subr.mxu0 %v2556
      %3176 = vmatpush1.msra.mxu0 %v2555
      %3177 = vmatprep.subr.mxu0 %v2538
      %3178 = vmatpush1.msra.mxu0 %v2537
      %3179 = vmatprep.subr.mxu0 %v2520
      %3180 = vmatpush1.msra.mxu0 %v2519
      %3181 = vmatprep.subr.mxu0 0.0
      %3182 = vmatpush2.msra.mxu0 0.0
      %3183 = vmatprep.subr.mxu0 0.0
      %3184 = vmatpush2.msra.mxu0 0.0
      %3185 = vmatprep.subr.mxu0 0.0
      %3186 = vmatpush2.msra.mxu0 0.0
      %3187 = vmatprep.subr.mxu0 0.0
      %3188 = vmatpush2.msra.mxu0 0.0
      %3189 = vmatprep.subr.mxu0 0.0
      %3190 = vmatpush2.msra.mxu0 0.0
      %3191 = vmatprep.subr.mxu0 0.0
      %3192 = vmatpush2.msra.mxu0 0.0
      %3193 = vmatprep.subr.mxu0 0.0
      %3194 = vmatpush2.msra.mxu0 0.0
      %3195 = vmatprep.subr.mxu0 0.0
      %3196 = vmatpush2.msra.mxu0 0.0
      %3197 = vmatprep.subr.mxu0 0.0
      %3198 = vmatpush2.msra.mxu0 0.0
      %3199 = vmatprep.subr.mxu0 0.0
      %3200 = vmatpush2.msra.mxu0 0.0
      %3201 = vmatprep.subr.mxu0 0.0
      %3202 = vmatpush2.msra.mxu0 0.0
      %3203 = vmatprep.subr.mxu0 0.0
      %3204 = vmatpush2.msra.mxu0 0.0
      %3205 = vmatprep.subr.mxu0 0.0
      %3206 = vmatpush2.msra.mxu0 0.0
      %3207 = vmatprep.subr.mxu0 0.0
      %3208 = vmatpush2.msra.mxu0 0.0
      %3209 = vmatprep.subr.mxu0 0.0
      %3210 = vmatpush2.msra.mxu0 0.0
      %3211 = vmatprep.subr.mxu0 0.0
      %3212 = vmatpush2.msra.mxu0 0.0
      %3213 = vmatprep.mubr.f32.mxu0 0.0
      %3214 = vmatmul.mubr.f32.gmra.mxu0 %v2650
      %v3215 = vpop.f32.mrf.mxu0
      %v3216 = vadd.f32 0.0, %v3215
      %v3217 = vpop.f32.mrf.mxu0
      %v3218 = vadd.f32 0.0, %v3217
      %3219 = vdwg.mxu0
      %3220 = vmatprep.subr.mxu0 0.0
      %3221 = vmatpush1.msra.mxu0 0.0
      %3222 = vmatprep.subr.mxu0 0.0
      %3223 = vmatpush1.msra.mxu0 0.0
      %3224 = vmatprep.subr.mxu0 0.0
      %3225 = vmatpush1.msra.mxu0 0.0
      %3226 = vmatprep.subr.mxu0 0.0
      %3227 = vmatpush1.msra.mxu0 0.0
      %3228 = vmatprep.subr.mxu0 0.0
      %3229 = vmatpush1.msra.mxu0 0.0
      %3230 = vmatprep.subr.mxu0 0.0
      %3231 = vmatpush1.msra.mxu0 0.0
      %3232 = vmatprep.subr.mxu0 0.0
      %3233 = vmatpush1.msra.mxu0 0.0
      %3234 = vmatprep.subr.mxu0 0.0
      %3235 = vmatpush1.msra.mxu0 0.0
      %3236 = vmatprep.subr.mxu0 %v2648
      %3237 = vmatpush1.msra.mxu0 %v2647
      %3238 = vmatprep.subr.mxu0 %v2630
      %3239 = vmatpush1.msra.mxu0 %v2629
      %3240 = vmatprep.subr.mxu0 %v2612
      %3241 = vmatpush1.msra.mxu0 %v2611
      %3242 = vmatprep.subr.mxu0 %v2594
      %3243 = vmatpush1.msra.mxu0 %v2593
      %3244 = vmatprep.subr.mxu0 %v2576
      %3245 = vmatpush1.msra.mxu0 %v2575
      %3246 = vmatprep.subr.mxu0 %v2558
      %3247 = vmatpush1.msra.mxu0 %v2557
      %3248 = vmatprep.subr.mxu0 %v2540
      %3249 = vmatpush1.msra.mxu0 %v2539
      %3250 = vmatprep.subr.mxu0 %v2522
      %3251 = vmatpush1.msra.mxu0 %v2521
      %3252 = vmatprep.subr.mxu0 0.0
      %3253 = vmatpush2.msra.mxu0 0.0
      %3254 = vmatprep.subr.mxu0 0.0
      %3255 = vmatpush2.msra.mxu0 0.0
      %3256 = vmatprep.subr.mxu0 0.0
      %3257 = vmatpush2.msra.mxu0 0.0
      %3258 = vmatprep.subr.mxu0 0.0
      %3259 = vmatpush2.msra.mxu0 0.0
      %3260 = vmatprep.subr.mxu0 0.0
      %3261 = vmatpush2.msra.mxu0 0.0
      %3262 = vmatprep.subr.mxu0 0.0
      %3263 = vmatpush2.msra.mxu0 0.0
      %3264 = vmatprep.subr.mxu0 0.0
      %3265 = vmatpush2.msra.mxu0 0.0
      %3266 = vmatprep.subr.mxu0 0.0
      %3267 = vmatpush2.msra.mxu0 0.0
      %3268 = vmatprep.subr.mxu0 0.0
      %3269 = vmatpush2.msra.mxu0 0.0
      %3270 = vmatprep.subr.mxu0 0.0
      %3271 = vmatpush2.msra.mxu0 0.0
      %3272 = vmatprep.subr.mxu0 0.0
      %3273 = vmatpush2.msra.mxu0 0.0
      %3274 = vmatprep.subr.mxu0 0.0
      %3275 = vmatpush2.msra.mxu0 0.0
      %3276 = vmatprep.subr.mxu0 0.0
      %3277 = vmatpush2.msra.mxu0 0.0
      %3278 = vmatprep.subr.mxu0 0.0
      %3279 = vmatpush2.msra.mxu0 0.0
      %3280 = vmatprep.subr.mxu0 0.0
      %3281 = vmatpush2.msra.mxu0 0.0
      %3282 = vmatprep.subr.mxu0 0.0
      %3283 = vmatpush2.msra.mxu0 0.0
      %3284 = vmatprep.mubr.f32.mxu0 0.0
      %3285 = vmatmul.mubr.f32.gmra.mxu0 %v2650
      %v3286 = vpop.f32.mrf.mxu0
      %v3287 = vadd.f32 0.0, %v3286
      %v3288 = vpop.f32.mrf.mxu0
      %v3289 = vadd.f32 0.0, %v3288
      %3290 = vdwg.mxu0
      %v3291 = vld [vmem:[%s6] sm:$0xff]
      %vm3292 = vcmask 64512
      %v3294 = vsel %vm3292, %v3291, 0
      %3296 = vmatprep.subr.mxu0 0.0
      %3297 = vmatpush1.msra.mxu0 0.0
      %3298 = vmatprep.subr.mxu0 0.0
      %3299 = vmatpush1.msra.mxu0 0.0
      %3300 = vmatprep.subr.mxu0 0.0
      %3301 = vmatpush1.msra.mxu0 0.0
      %3302 = vmatprep.subr.mxu0 0.0
      %3303 = vmatpush1.msra.mxu0 0.0
      %3304 = vmatprep.subr.mxu0 0.0
      %3305 = vmatpush1.msra.mxu0 0.0
      %3306 = vmatprep.subr.mxu0 0.0
      %3307 = vmatpush1.msra.mxu0 0.0
      %3308 = vmatprep.subr.mxu0 0.0
      %3309 = vmatpush1.msra.mxu0 0.0
      %3310 = vmatprep.subr.mxu0 0.0
      %3311 = vmatpush1.msra.mxu0 0.0
      %3312 = vmatprep.subr.mxu0 0.0
      %3313 = vmatpush1.msra.mxu0 0.0
      %3314 = vmatprep.subr.mxu0 0.0
      %3315 = vmatpush1.msra.mxu0 0.0
      %3316 = vmatprep.subr.mxu0 0.0
      %3317 = vmatpush1.msra.mxu0 0.0
      %3318 = vmatprep.subr.mxu0 0.0
      %3319 = vmatpush1.msra.mxu0 0.0
      %3320 = vmatprep.subr.mxu0 0.0
      %3321 = vmatpush1.msra.mxu0 0.0
      %3322 = vmatprep.subr.mxu0 0.0
      %3323 = vmatpush1.msra.mxu0 0.0
      %3324 = vmatprep.subr.mxu0 0.0
      %3325 = vmatpush1.msra.mxu0 0.0
      %3326 = vmatprep.subr.mxu0 %v2721
      %3327 = vmatpush1.msra.mxu0 %v2719
      %3328 = vmatprep.subr.mxu0 0.0
      %3329 = vmatpush2.msra.mxu0 0.0
      %3330 = vmatprep.subr.mxu0 0.0
      %3331 = vmatpush2.msra.mxu0 0.0
      %3332 = vmatprep.subr.mxu0 0.0
      %3333 = vmatpush2.msra.mxu0 0.0
      %3334 = vmatprep.subr.mxu0 0.0
      %3335 = vmatpush2.msra.mxu0 0.0
      %3336 = vmatprep.subr.mxu0 0.0
      %3337 = vmatpush2.msra.mxu0 0.0
      %3338 = vmatprep.subr.mxu0 0.0
      %3339 = vmatpush2.msra.mxu0 0.0
      %3340 = vmatprep.subr.mxu0 0.0
      %3341 = vmatpush2.msra.mxu0 0.0
      %3342 = vmatprep.subr.mxu0 0.0
      %3343 = vmatpush2.msra.mxu0 0.0
      %3344 = vmatprep.subr.mxu0 0.0
      %3345 = vmatpush2.msra.mxu0 0.0
      %3346 = vmatprep.subr.mxu0 0.0
      %3347 = vmatpush2.msra.mxu0 0.0
      %3348 = vmatprep.subr.mxu0 0.0
      %3349 = vmatpush2.msra.mxu0 0.0
      %3350 = vmatprep.subr.mxu0 0.0
      %3351 = vmatpush2.msra.mxu0 0.0
      %3352 = vmatprep.subr.mxu0 0.0
      %3353 = vmatpush2.msra.mxu0 0.0
      %3354 = vmatprep.subr.mxu0 0.0
      %3355 = vmatpush2.msra.mxu0 0.0
      %3356 = vmatprep.subr.mxu0 0.0
      %3357 = vmatpush2.msra.mxu0 0.0
      %3358 = vmatprep.subr.mxu0 0.0
      %3359 = vmatpush2.msra.mxu0 0.0
      %3360 = vmatprep.mubr.f32.mxu0 0.0
      %3361 = vmatmul.mubr.f32.gmra.mxu0 %v3294
      %v3362 = vpop.f32.mrf.mxu0
      %v3363 = vadd.f32 0.0, %v3362
      %v3364 = vpop.f32.mrf.mxu0
      %v3365 = vadd.f32 0.0, %v3364
      %3366 = vdwg.mxu0
      %v3367 = vadd.f32 %v2447, %v3363
      %v3368 = vadd.f32 %v2448, %v3365
      %s3369 = scalar_lea.vmem %s6, 8
      %v3370 = vld [vmem:[%s3369] sm:$0xff]
      %v3372 = vsel %vm3292, %v3370, 0
      %3374 = vmatprep.subr.mxu0 0.0
      %3375 = vmatpush1.msra.mxu0 0.0
      %3376 = vmatprep.subr.mxu0 0.0
      %3377 = vmatpush1.msra.mxu0 0.0
      %3378 = vmatprep.subr.mxu0 0.0
      %3379 = vmatpush1.msra.mxu0 0.0
      %3380 = vmatprep.subr.mxu0 0.0
      %3381 = vmatpush1.msra.mxu0 0.0
      %3382 = vmatprep.subr.mxu0 0.0
      %3383 = vmatpush1.msra.mxu0 0.0
      %3384 = vmatprep.subr.mxu0 0.0
      %3385 = vmatpush1.msra.mxu0 0.0
      %3386 = vmatprep.subr.mxu0 0.0
      %3387 = vmatpush1.msra.mxu0 0.0
      %3388 = vmatprep.subr.mxu0 0.0
      %3389 = vmatpush1.msra.mxu0 0.0
      %3390 = vmatprep.subr.mxu0 0.0
      %3391 = vmatpush1.msra.mxu0 0.0
      %3392 = vmatprep.subr.mxu0 0.0
      %3393 = vmatpush1.msra.mxu0 0.0
      %3394 = vmatprep.subr.mxu0 0.0
      %3395 = vmatpush1.msra.mxu0 0.0
      %3396 = vmatprep.subr.mxu0 0.0
      %3397 = vmatpush1.msra.mxu0 0.0
      %3398 = vmatprep.subr.mxu0 0.0
      %3399 = vmatpush1.msra.mxu0 0.0
      %3400 = vmatprep.subr.mxu0 0.0
      %3401 = vmatpush1.msra.mxu0 0.0
      %3402 = vmatprep.subr.mxu0 0.0
      %3403 = vmatpush1.msra.mxu0 0.0
      %3404 = vmatprep.subr.mxu0 %v2792
      %3405 = vmatpush1.msra.mxu0 %v2790
      %3406 = vmatprep.subr.mxu0 0.0
      %3407 = vmatpush2.msra.mxu0 0.0
      %3408 = vmatprep.subr.mxu0 0.0
      %3409 = vmatpush2.msra.mxu0 0.0
      %3410 = vmatprep.subr.mxu0 0.0
      %3411 = vmatpush2.msra.mxu0 0.0
      %3412 = vmatprep.subr.mxu0 0.0
      %3413 = vmatpush2.msra.mxu0 0.0
      %3414 = vmatprep.subr.mxu0 0.0
      %3415 = vmatpush2.msra.mxu0 0.0
      %3416 = vmatprep.subr.mxu0 0.0
      %3417 = vmatpush2.msra.mxu0 0.0
      %3418 = vmatprep.subr.mxu0 0.0
      %3419 = vmatpush2.msra.mxu0 0.0
      %3420 = vmatprep.subr.mxu0 0.0
      %3421 = vmatpush2.msra.mxu0 0.0
      %3422 = vmatprep.subr.mxu0 0.0
      %3423 = vmatpush2.msra.mxu0 0.0
      %3424 = vmatprep.subr.mxu0 0.0
      %3425 = vmatpush2.msra.mxu0 0.0
      %3426 = vmatprep.subr.mxu0 0.0
      %3427 = vmatpush2.msra.mxu0 0.0
      %3428 = vmatprep.subr.mxu0 0.0
      %3429 = vmatpush2.msra.mxu0 0.0
      %3430 = vmatprep.subr.mxu0 0.0
      %3431 = vmatpush2.msra.mxu0 0.0
      %3432 = vmatprep.subr.mxu0 0.0
      %3433 = vmatpush2.msra.mxu0 0.0
      %3434 = vmatprep.subr.mxu0 0.0
      %3435 = vmatpush2.msra.mxu0 0.0
      %3436 = vmatprep.subr.mxu0 0.0
      %3437 = vmatpush2.msra.mxu0 0.0
      %3438 = vmatprep.mubr.f32.mxu0 0.0
      %3439 = vmatmul.mubr.f32.gmra.mxu0 %v3372
      %v3440 = vpop.f32.mrf.mxu0
      %v3441 = vadd.f32 0.0, %v3440
      %v3442 = vpop.f32.mrf.mxu0
      %v3443 = vadd.f32 0.0, %v3442
      %3444 = vdwg.mxu0
      %v3445 = vadd.f32 %v3367, %v3441
      %v3446 = vadd.f32 %v3368, %v3443
      %s3447 = scalar_lea.vmem %s6, 16
      %v3448 = vld [vmem:[%s3447] sm:$0xff]
      %v3450 = vsel %vm3292, %v3448, 0
      %3452 = vmatprep.subr.mxu0 0.0
      %3453 = vmatpush1.msra.mxu0 0.0
      %3454 = vmatprep.subr.mxu0 0.0
      %3455 = vmatpush1.msra.mxu0 0.0
      %3456 = vmatprep.subr.mxu0 0.0
      %3457 = vmatpush1.msra.mxu0 0.0
      %3458 = vmatprep.subr.mxu0 0.0
      %3459 = vmatpush1.msra.mxu0 0.0
      %3460 = vmatprep.subr.mxu0 0.0
      %3461 = vmatpush1.msra.mxu0 0.0
      %3462 = vmatprep.subr.mxu0 0.0
      %3463 = vmatpush1.msra.mxu0 0.0
      %3464 = vmatprep.subr.mxu0 0.0
      %3465 = vmatpush1.msra.mxu0 0.0
      %3466 = vmatprep.subr.mxu0 0.0
      %3467 = vmatpush1.msra.mxu0 0.0
      %3468 = vmatprep.subr.mxu0 0.0
      %3469 = vmatpush1.msra.mxu0 0.0
      %3470 = vmatprep.subr.mxu0 0.0
      %3471 = vmatpush1.msra.mxu0 0.0
      %3472 = vmatprep.subr.mxu0 0.0
      %3473 = vmatpush1.msra.mxu0 0.0
      %3474 = vmatprep.subr.mxu0 0.0
      %3475 = vmatpush1.msra.mxu0 0.0
      %3476 = vmatprep.subr.mxu0 0.0
      %3477 = vmatpush1.msra.mxu0 0.0
      %3478 = vmatprep.subr.mxu0 0.0
      %3479 = vmatpush1.msra.mxu0 0.0
      %3480 = vmatprep.subr.mxu0 0.0
      %3481 = vmatpush1.msra.mxu0 0.0
      %3482 = vmatprep.subr.mxu0 %v2863
      %3483 = vmatpush1.msra.mxu0 %v2861
      %3484 = vmatprep.subr.mxu0 0.0
      %3485 = vmatpush2.msra.mxu0 0.0
      %3486 = vmatprep.subr.mxu0 0.0
      %3487 = vmatpush2.msra.mxu0 0.0
      %3488 = vmatprep.subr.mxu0 0.0
      %3489 = vmatpush2.msra.mxu0 0.0
      %3490 = vmatprep.subr.mxu0 0.0
      %3491 = vmatpush2.msra.mxu0 0.0
      %3492 = vmatprep.subr.mxu0 0.0
      %3493 = vmatpush2.msra.mxu0 0.0
      %3494 = vmatprep.subr.mxu0 0.0
      %3495 = vmatpush2.msra.mxu0 0.0
      %3496 = vmatprep.subr.mxu0 0.0
      %3497 = vmatpush2.msra.mxu0 0.0
      %3498 = vmatprep.subr.mxu0 0.0
      %3499 = vmatpush2.msra.mxu0 0.0
      %3500 = vmatprep.subr.mxu0 0.0
      %3501 = vmatpush2.msra.mxu0 0.0
      %3502 = vmatprep.subr.mxu0 0.0
      %3503 = vmatpush2.msra.mxu0 0.0
      %3504 = vmatprep.subr.mxu0 0.0
      %3505 = vmatpush2.msra.mxu0 0.0
      %3506 = vmatprep.subr.mxu0 0.0
      %3507 = vmatpush2.msra.mxu0 0.0
      %3508 = vmatprep.subr.mxu0 0.0
      %3509 = vmatpush2.msra.mxu0 0.0
      %3510 = vmatprep.subr.mxu0 0.0
      %3511 = vmatpush2.msra.mxu0 0.0
      %3512 = vmatprep.subr.mxu0 0.0
      %3513 = vmatpush2.msra.mxu0 0.0
      %3514 = vmatprep.subr.mxu0 0.0
      %3515 = vmatpush2.msra.mxu0 0.0
      %3516 = vmatprep.mubr.f32.mxu0 0.0
      %3517 = vmatmul.mubr.f32.gmra.mxu0 %v3450
      %v3518 = vpop.f32.mrf.mxu0
      %v3519 = vadd.f32 0.0, %v3518
      %v3520 = vpop.f32.mrf.mxu0
      %v3521 = vadd.f32 0.0, %v3520
      %3522 = vdwg.mxu0
      %v3523 = vadd.f32 %v3445, %v3519
      %v3524 = vadd.f32 %v3446, %v3521
      %s3525 = scalar_lea.vmem %s6, 24
      %v3526 = vld [vmem:[%s3525] sm:$0xff]
      %v3528 = vsel %vm3292, %v3526, 0
      %3530 = vmatprep.subr.mxu0 0.0
      %3531 = vmatpush1.msra.mxu0 0.0
      %3532 = vmatprep.subr.mxu0 0.0
      %3533 = vmatpush1.msra.mxu0 0.0
      %3534 = vmatprep.subr.mxu0 0.0
      %3535 = vmatpush1.msra.mxu0 0.0
      %3536 = vmatprep.subr.mxu0 0.0
      %3537 = vmatpush1.msra.mxu0 0.0
      %3538 = vmatprep.subr.mxu0 0.0
      %3539 = vmatpush1.msra.mxu0 0.0
      %3540 = vmatprep.subr.mxu0 0.0
      %3541 = vmatpush1.msra.mxu0 0.0
      %3542 = vmatprep.subr.mxu0 0.0
      %3543 = vmatpush1.msra.mxu0 0.0
      %3544 = vmatprep.subr.mxu0 0.0
      %3545 = vmatpush1.msra.mxu0 0.0
      %3546 = vmatprep.subr.mxu0 0.0
      %3547 = vmatpush1.msra.mxu0 0.0
      %3548 = vmatprep.subr.mxu0 0.0
      %3549 = vmatpush1.msra.mxu0 0.0
      %3550 = vmatprep.subr.mxu0 0.0
      %3551 = vmatpush1.msra.mxu0 0.0
      %3552 = vmatprep.subr.mxu0 0.0
      %3553 = vmatpush1.msra.mxu0 0.0
      %3554 = vmatprep.subr.mxu0 0.0
      %3555 = vmatpush1.msra.mxu0 0.0
      %3556 = vmatprep.subr.mxu0 0.0
      %3557 = vmatpush1.msra.mxu0 0.0
      %3558 = vmatprep.subr.mxu0 0.0
      %3559 = vmatpush1.msra.mxu0 0.0
      %3560 = vmatprep.subr.mxu0 %v2934
      %3561 = vmatpush1.msra.mxu0 %v2932
      %3562 = vmatprep.subr.mxu0 0.0
      %3563 = vmatpush2.msra.mxu0 0.0
      %3564 = vmatprep.subr.mxu0 0.0
      %3565 = vmatpush2.msra.mxu0 0.0
      %3566 = vmatprep.subr.mxu0 0.0
      %3567 = vmatpush2.msra.mxu0 0.0
      %3568 = vmatprep.subr.mxu0 0.0
      %3569 = vmatpush2.msra.mxu0 0.0
      %3570 = vmatprep.subr.mxu0 0.0
      %3571 = vmatpush2.msra.mxu0 0.0
      %3572 = vmatprep.subr.mxu0 0.0
      %3573 = vmatpush2.msra.mxu0 0.0
      %3574 = vmatprep.subr.mxu0 0.0
      %3575 = vmatpush2.msra.mxu0 0.0
      %3576 = vmatprep.subr.mxu0 0.0
      %3577 = vmatpush2.msra.mxu0 0.0
      %3578 = vmatprep.subr.mxu0 0.0
      %3579 = vmatpush2.msra.mxu0 0.0
      %3580 = vmatprep.subr.mxu0 0.0
      %3581 = vmatpush2.msra.mxu0 0.0
      %3582 = vmatprep.subr.mxu0 0.0
      %3583 = vmatpush2.msra.mxu0 0.0
      %3584 = vmatprep.subr.mxu0 0.0
      %3585 = vmatpush2.msra.mxu0 0.0
      %3586 = vmatprep.subr.mxu0 0.0
      %3587 = vmatpush2.msra.mxu0 0.0
      %3588 = vmatprep.subr.mxu0 0.0
      %3589 = vmatpush2.msra.mxu0 0.0
      %3590 = vmatprep.subr.mxu0 0.0
      %3591 = vmatpush2.msra.mxu0 0.0
      %3592 = vmatprep.subr.mxu0 0.0
      %3593 = vmatpush2.msra.mxu0 0.0
      %3594 = vmatprep.mubr.f32.mxu0 0.0
      %3595 = vmatmul.mubr.f32.gmra.mxu0 %v3528
      %v3596 = vpop.f32.mrf.mxu0
      %v3597 = vadd.f32 0.0, %v3596
      %v3598 = vpop.f32.mrf.mxu0
      %v3599 = vadd.f32 0.0, %v3598
      %3600 = vdwg.mxu0
      %v3601 = vadd.f32 %v3523, %v3597
      %v3602 = vadd.f32 %v3524, %v3599
      %s3603 = scalar_lea.vmem %s6, 32
      %v3604 = vld [vmem:[%s3603] sm:$0xff]
      %v3606 = vsel %vm3292, %v3604, 0
      %3608 = vmatprep.subr.mxu0 0.0
      %3609 = vmatpush1.msra.mxu0 0.0
      %3610 = vmatprep.subr.mxu0 0.0
      %3611 = vmatpush1.msra.mxu0 0.0
      %3612 = vmatprep.subr.mxu0 0.0
      %3613 = vmatpush1.msra.mxu0 0.0
      %3614 = vmatprep.subr.mxu0 0.0
      %3615 = vmatpush1.msra.mxu0 0.0
      %3616 = vmatprep.subr.mxu0 0.0
      %3617 = vmatpush1.msra.mxu0 0.0
      %3618 = vmatprep.subr.mxu0 0.0
      %3619 = vmatpush1.msra.mxu0 0.0
      %3620 = vmatprep.subr.mxu0 0.0
      %3621 = vmatpush1.msra.mxu0 0.0
      %3622 = vmatprep.subr.mxu0 0.0
      %3623 = vmatpush1.msra.mxu0 0.0
      %3624 = vmatprep.subr.mxu0 0.0
      %3625 = vmatpush1.msra.mxu0 0.0
      %3626 = vmatprep.subr.mxu0 0.0
      %3627 = vmatpush1.msra.mxu0 0.0
      %3628 = vmatprep.subr.mxu0 0.0
      %3629 = vmatpush1.msra.mxu0 0.0
      %3630 = vmatprep.subr.mxu0 0.0
      %3631 = vmatpush1.msra.mxu0 0.0
      %3632 = vmatprep.subr.mxu0 0.0
      %3633 = vmatpush1.msra.mxu0 0.0
      %3634 = vmatprep.subr.mxu0 0.0
      %3635 = vmatpush1.msra.mxu0 0.0
      %3636 = vmatprep.subr.mxu0 0.0
      %3637 = vmatpush1.msra.mxu0 0.0
      %3638 = vmatprep.subr.mxu0 %v3005
      %3639 = vmatpush1.msra.mxu0 %v3003
      %3640 = vmatprep.subr.mxu0 0.0
      %3641 = vmatpush2.msra.mxu0 0.0
      %3642 = vmatprep.subr.mxu0 0.0
      %3643 = vmatpush2.msra.mxu0 0.0
      %3644 = vmatprep.subr.mxu0 0.0
      %3645 = vmatpush2.msra.mxu0 0.0
      %3646 = vmatprep.subr.mxu0 0.0
      %3647 = vmatpush2.msra.mxu0 0.0
      %3648 = vmatprep.subr.mxu0 0.0
      %3649 = vmatpush2.msra.mxu0 0.0
      %3650 = vmatprep.subr.mxu0 0.0
      %3651 = vmatpush2.msra.mxu0 0.0
      %3652 = vmatprep.subr.mxu0 0.0
      %3653 = vmatpush2.msra.mxu0 0.0
      %3654 = vmatprep.subr.mxu0 0.0
      %3655 = vmatpush2.msra.mxu0 0.0
      %3656 = vmatprep.subr.mxu0 0.0
      %3657 = vmatpush2.msra.mxu0 0.0
      %3658 = vmatprep.subr.mxu0 0.0
      %3659 = vmatpush2.msra.mxu0 0.0
      %3660 = vmatprep.subr.mxu0 0.0
      %3661 = vmatpush2.msra.mxu0 0.0
      %3662 = vmatprep.subr.mxu0 0.0
      %3663 = vmatpush2.msra.mxu0 0.0
      %3664 = vmatprep.subr.mxu0 0.0
      %3665 = vmatpush2.msra.mxu0 0.0
      %3666 = vmatprep.subr.mxu0 0.0
      %3667 = vmatpush2.msra.mxu0 0.0
      %3668 = vmatprep.subr.mxu0 0.0
      %3669 = vmatpush2.msra.mxu0 0.0
      %3670 = vmatprep.subr.mxu0 0.0
      %3671 = vmatpush2.msra.mxu0 0.0
      %3672 = vmatprep.mubr.f32.mxu0 0.0
      %3673 = vmatmul.mubr.f32.gmra.mxu0 %v3606
      %v3674 = vpop.f32.mrf.mxu0
      %v3675 = vadd.f32 0.0, %v3674
      %v3676 = vpop.f32.mrf.mxu0
      %v3677 = vadd.f32 0.0, %v3676
      %3678 = vdwg.mxu0
      %v3679 = vadd.f32 %v3601, %v3675
      %v3680 = vadd.f32 %v3602, %v3677
      %s3681 = scalar_lea.vmem %s6, 40
      %v3682 = vld [vmem:[%s3681] sm:$0xff]
      %v3684 = vsel %vm3292, %v3682, 0
      %3686 = vmatprep.subr.mxu0 0.0
      %3687 = vmatpush1.msra.mxu0 0.0
      %3688 = vmatprep.subr.mxu0 0.0
      %3689 = vmatpush1.msra.mxu0 0.0
      %3690 = vmatprep.subr.mxu0 0.0
      %3691 = vmatpush1.msra.mxu0 0.0
      %3692 = vmatprep.subr.mxu0 0.0
      %3693 = vmatpush1.msra.mxu0 0.0
      %3694 = vmatprep.subr.mxu0 0.0
      %3695 = vmatpush1.msra.mxu0 0.0
      %3696 = vmatprep.subr.mxu0 0.0
      %3697 = vmatpush1.msra.mxu0 0.0
      %3698 = vmatprep.subr.mxu0 0.0
      %3699 = vmatpush1.msra.mxu0 0.0
      %3700 = vmatprep.subr.mxu0 0.0
      %3701 = vmatpush1.msra.mxu0 0.0
      %3702 = vmatprep.subr.mxu0 0.0
      %3703 = vmatpush1.msra.mxu0 0.0
      %3704 = vmatprep.subr.mxu0 0.0
      %3705 = vmatpush1.msra.mxu0 0.0
      %3706 = vmatprep.subr.mxu0 0.0
      %3707 = vmatpush1.msra.mxu0 0.0
      %3708 = vmatprep.subr.mxu0 0.0
      %3709 = vmatpush1.msra.mxu0 0.0
      %3710 = vmatprep.subr.mxu0 0.0
      %3711 = vmatpush1.msra.mxu0 0.0
      %3712 = vmatprep.subr.mxu0 0.0
      %3713 = vmatpush1.msra.mxu0 0.0
      %3714 = vmatprep.subr.mxu0 0.0
      %3715 = vmatpush1.msra.mxu0 0.0
      %3716 = vmatprep.subr.mxu0 %v3076
      %3717 = vmatpush1.msra.mxu0 %v3074
      %3718 = vmatprep.subr.mxu0 0.0
      %3719 = vmatpush2.msra.mxu0 0.0
      %3720 = vmatprep.subr.mxu0 0.0
      %3721 = vmatpush2.msra.mxu0 0.0
      %3722 = vmatprep.subr.mxu0 0.0
      %3723 = vmatpush2.msra.mxu0 0.0
      %3724 = vmatprep.subr.mxu0 0.0
      %3725 = vmatpush2.msra.mxu0 0.0
      %3726 = vmatprep.subr.mxu0 0.0
      %3727 = vmatpush2.msra.mxu0 0.0
      %3728 = vmatprep.subr.mxu0 0.0
      %3729 = vmatpush2.msra.mxu0 0.0
      %3730 = vmatprep.subr.mxu0 0.0
      %3731 = vmatpush2.msra.mxu0 0.0
      %3732 = vmatprep.subr.mxu0 0.0
      %3733 = vmatpush2.msra.mxu0 0.0
      %3734 = vmatprep.subr.mxu0 0.0
      %3735 = vmatpush2.msra.mxu0 0.0
      %3736 = vmatprep.subr.mxu0 0.0
      %3737 = vmatpush2.msra.mxu0 0.0
      %3738 = vmatprep.subr.mxu0 0.0
      %3739 = vmatpush2.msra.mxu0 0.0
      %3740 = vmatprep.subr.mxu0 0.0
      %3741 = vmatpush2.msra.mxu0 0.0
      %3742 = vmatprep.subr.mxu0 0.0
      %3743 = vmatpush2.msra.mxu0 0.0
      %3744 = vmatprep.subr.mxu0 0.0
      %3745 = vmatpush2.msra.mxu0 0.0
      %3746 = vmatprep.subr.mxu0 0.0
      %3747 = vmatpush2.msra.mxu0 0.0
      %3748 = vmatprep.subr.mxu0 0.0
      %3749 = vmatpush2.msra.mxu0 0.0
      %3750 = vmatprep.mubr.f32.mxu0 0.0
      %3751 = vmatmul.mubr.f32.gmra.mxu0 %v3684
      %v3752 = vpop.f32.mrf.mxu0
      %v3753 = vadd.f32 0.0, %v3752
      %v3754 = vpop.f32.mrf.mxu0
      %v3755 = vadd.f32 0.0, %v3754
      %3756 = vdwg.mxu0
      %v3757 = vadd.f32 %v3679, %v3753
      %v3758 = vadd.f32 %v3680, %v3755
      %s3759 = scalar_lea.vmem %s6, 48
      %v3760 = vld [vmem:[%s3759] sm:$0xff]
      %v3762 = vsel %vm3292, %v3760, 0
      %3764 = vmatprep.subr.mxu0 0.0
      %3765 = vmatpush1.msra.mxu0 0.0
      %3766 = vmatprep.subr.mxu0 0.0
      %3767 = vmatpush1.msra.mxu0 0.0
      %3768 = vmatprep.subr.mxu0 0.0
      %3769 = vmatpush1.msra.mxu0 0.0
      %3770 = vmatprep.subr.mxu0 0.0
      %3771 = vmatpush1.msra.mxu0 0.0
      %3772 = vmatprep.subr.mxu0 0.0
      %3773 = vmatpush1.msra.mxu0 0.0
      %3774 = vmatprep.subr.mxu0 0.0
      %3775 = vmatpush1.msra.mxu0 0.0
      %3776 = vmatprep.subr.mxu0 0.0
      %3777 = vmatpush1.msra.mxu0 0.0
      %3778 = vmatprep.subr.mxu0 0.0
      %3779 = vmatpush1.msra.mxu0 0.0
      %3780 = vmatprep.subr.mxu0 0.0
      %3781 = vmatpush1.msra.mxu0 0.0
      %3782 = vmatprep.subr.mxu0 0.0
      %3783 = vmatpush1.msra.mxu0 0.0
      %3784 = vmatprep.subr.mxu0 0.0
      %3785 = vmatpush1.msra.mxu0 0.0
      %3786 = vmatprep.subr.mxu0 0.0
      %3787 = vmatpush1.msra.mxu0 0.0
      %3788 = vmatprep.subr.mxu0 0.0
      %3789 = vmatpush1.msra.mxu0 0.0
      %3790 = vmatprep.subr.mxu0 0.0
      %3791 = vmatpush1.msra.mxu0 0.0
      %3792 = vmatprep.subr.mxu0 0.0
      %3793 = vmatpush1.msra.mxu0 0.0
      %3794 = vmatprep.subr.mxu0 %v3147
      %3795 = vmatpush1.msra.mxu0 %v3145
      %3796 = vmatprep.subr.mxu0 0.0
      %3797 = vmatpush2.msra.mxu0 0.0
      %3798 = vmatprep.subr.mxu0 0.0
      %3799 = vmatpush2.msra.mxu0 0.0
      %3800 = vmatprep.subr.mxu0 0.0
      %3801 = vmatpush2.msra.mxu0 0.0
      %3802 = vmatprep.subr.mxu0 0.0
      %3803 = vmatpush2.msra.mxu0 0.0
      %3804 = vmatprep.subr.mxu0 0.0
      %3805 = vmatpush2.msra.mxu0 0.0
      %3806 = vmatprep.subr.mxu0 0.0
      %3807 = vmatpush2.msra.mxu0 0.0
      %3808 = vmatprep.subr.mxu0 0.0
      %3809 = vmatpush2.msra.mxu0 0.0
      %3810 = vmatprep.subr.mxu0 0.0
      %3811 = vmatpush2.msra.mxu0 0.0
      %3812 = vmatprep.subr.mxu0 0.0
      %3813 = vmatpush2.msra.mxu0 0.0
      %3814 = vmatprep.subr.mxu0 0.0
      %3815 = vmatpush2.msra.mxu0 0.0
      %3816 = vmatprep.subr.mxu0 0.0
      %3817 = vmatpush2.msra.mxu0 0.0
      %3818 = vmatprep.subr.mxu0 0.0
      %3819 = vmatpush2.msra.mxu0 0.0
      %3820 = vmatprep.subr.mxu0 0.0
      %3821 = vmatpush2.msra.mxu0 0.0
      %3822 = vmatprep.subr.mxu0 0.0
      %3823 = vmatpush2.msra.mxu0 0.0
      %3824 = vmatprep.subr.mxu0 0.0
      %3825 = vmatpush2.msra.mxu0 0.0
      %3826 = vmatprep.subr.mxu0 0.0
      %3827 = vmatpush2.msra.mxu0 0.0
      %3828 = vmatprep.mubr.f32.mxu0 0.0
      %3829 = vmatmul.mubr.f32.gmra.mxu0 %v3762
      %v3830 = vpop.f32.mrf.mxu0
      %v3831 = vadd.f32 0.0, %v3830
      %v3832 = vpop.f32.mrf.mxu0
      %v3833 = vadd.f32 0.0, %v3832
      %3834 = vdwg.mxu0
      %v3835 = vadd.f32 %v3757, %v3831
      %v3836 = vadd.f32 %v3758, %v3833
      %s3837 = scalar_lea.vmem %s6, 56
      %v3838 = vld [vmem:[%s3837] sm:$0xff]
      %v3840 = vsel %vm3292, %v3838, 0
      %3842 = vmatprep.subr.mxu0 0.0
      %3843 = vmatpush1.msra.mxu0 0.0
      %3844 = vmatprep.subr.mxu0 0.0
      %3845 = vmatpush1.msra.mxu0 0.0
      %3846 = vmatprep.subr.mxu0 0.0
      %3847 = vmatpush1.msra.mxu0 0.0
      %3848 = vmatprep.subr.mxu0 0.0
      %3849 = vmatpush1.msra.mxu0 0.0
      %3850 = vmatprep.subr.mxu0 0.0
      %3851 = vmatpush1.msra.mxu0 0.0
      %3852 = vmatprep.subr.mxu0 0.0
      %3853 = vmatpush1.msra.mxu0 0.0
      %3854 = vmatprep.subr.mxu0 0.0
      %3855 = vmatpush1.msra.mxu0 0.0
      %3856 = vmatprep.subr.mxu0 0.0
      %3857 = vmatpush1.msra.mxu0 0.0
      %3858 = vmatprep.subr.mxu0 0.0
      %3859 = vmatpush1.msra.mxu0 0.0
      %3860 = vmatprep.subr.mxu0 0.0
      %3861 = vmatpush1.msra.mxu0 0.0
      %3862 = vmatprep.subr.mxu0 0.0
      %3863 = vmatpush1.msra.mxu0 0.0
      %3864 = vmatprep.subr.mxu0 0.0
      %3865 = vmatpush1.msra.mxu0 0.0
      %3866 = vmatprep.subr.mxu0 0.0
      %3867 = vmatpush1.msra.mxu0 0.0
      %3868 = vmatprep.subr.mxu0 0.0
      %3869 = vmatpush1.msra.mxu0 0.0
      %3870 = vmatprep.subr.mxu0 0.0
      %3871 = vmatpush1.msra.mxu0 0.0
      %3872 = vmatprep.subr.mxu0 %v3218
      %3873 = vmatpush1.msra.mxu0 %v3216
      %3874 = vmatprep.subr.mxu0 0.0
      %3875 = vmatpush2.msra.mxu0 0.0
      %3876 = vmatprep.subr.mxu0 0.0
      %3877 = vmatpush2.msra.mxu0 0.0
      %3878 = vmatprep.subr.mxu0 0.0
      %3879 = vmatpush2.msra.mxu0 0.0
      %3880 = vmatprep.subr.mxu0 0.0
      %3881 = vmatpush2.msra.mxu0 0.0
      %3882 = vmatprep.subr.mxu0 0.0
      %3883 = vmatpush2.msra.mxu0 0.0
      %3884 = vmatprep.subr.mxu0 0.0
      %3885 = vmatpush2.msra.mxu0 0.0
      %3886 = vmatprep.subr.mxu0 0.0
      %3887 = vmatpush2.msra.mxu0 0.0
      %3888 = vmatprep.subr.mxu0 0.0
      %3889 = vmatpush2.msra.mxu0 0.0
      %3890 = vmatprep.subr.mxu0 0.0
      %3891 = vmatpush2.msra.mxu0 0.0
      %3892 = vmatprep.subr.mxu0 0.0
      %3893 = vmatpush2.msra.mxu0 0.0
      %3894 = vmatprep.subr.mxu0 0.0
      %3895 = vmatpush2.msra.mxu0 0.0
      %3896 = vmatprep.subr.mxu0 0.0
      %3897 = vmatpush2.msra.mxu0 0.0
      %3898 = vmatprep.subr.mxu0 0.0
      %3899 = vmatpush2.msra.mxu0 0.0
      %3900 = vmatprep.subr.mxu0 0.0
      %3901 = vmatpush2.msra.mxu0 0.0
      %3902 = vmatprep.subr.mxu0 0.0
      %3903 = vmatpush2.msra.mxu0 0.0
      %3904 = vmatprep.subr.mxu0 0.0
      %3905 = vmatpush2.msra.mxu0 0.0
      %3906 = vmatprep.mubr.f32.mxu0 0.0
      %3907 = vmatmul.mubr.f32.gmra.mxu0 %v3840
      %v3908 = vpop.f32.mrf.mxu0
      %v3909 = vadd.f32 0.0, %v3908
      %v3910 = vpop.f32.mrf.mxu0
      %v3911 = vadd.f32 0.0, %v3910
      %3912 = vdwg.mxu0
      %v3913 = vadd.f32 %v3835, %v3909
      %v3914 = vadd.f32 %v3836, %v3911
      %s3915 = scalar_lea.vmem %s6, 64
      %v3916 = vld [vmem:[%s3915] sm:$0xff]
      %v3918 = vsel %vm3292, %v3916, 0
      %3920 = vmatprep.subr.mxu0 0.0
      %3921 = vmatpush1.msra.mxu0 0.0
      %3922 = vmatprep.subr.mxu0 0.0
      %3923 = vmatpush1.msra.mxu0 0.0
      %3924 = vmatprep.subr.mxu0 0.0
      %3925 = vmatpush1.msra.mxu0 0.0
      %3926 = vmatprep.subr.mxu0 0.0
      %3927 = vmatpush1.msra.mxu0 0.0
      %3928 = vmatprep.subr.mxu0 0.0
      %3929 = vmatpush1.msra.mxu0 0.0
      %3930 = vmatprep.subr.mxu0 0.0
      %3931 = vmatpush1.msra.mxu0 0.0
      %3932 = vmatprep.subr.mxu0 0.0
      %3933 = vmatpush1.msra.mxu0 0.0
      %3934 = vmatprep.subr.mxu0 0.0
      %3935 = vmatpush1.msra.mxu0 0.0
      %3936 = vmatprep.subr.mxu0 0.0
      %3937 = vmatpush1.msra.mxu0 0.0
      %3938 = vmatprep.subr.mxu0 0.0
      %3939 = vmatpush1.msra.mxu0 0.0
      %3940 = vmatprep.subr.mxu0 0.0
      %3941 = vmatpush1.msra.mxu0 0.0
      %3942 = vmatprep.subr.mxu0 0.0
      %3943 = vmatpush1.msra.mxu0 0.0
      %3944 = vmatprep.subr.mxu0 0.0
      %3945 = vmatpush1.msra.mxu0 0.0
      %3946 = vmatprep.subr.mxu0 0.0
      %3947 = vmatpush1.msra.mxu0 0.0
      %3948 = vmatprep.subr.mxu0 0.0
      %3949 = vmatpush1.msra.mxu0 0.0
      %3950 = vmatprep.subr.mxu0 %v3289
      %3951 = vmatpush1.msra.mxu0 %v3287
      %3952 = vmatprep.subr.mxu0 0.0
      %3953 = vmatpush2.msra.mxu0 0.0
      %3954 = vmatprep.subr.mxu0 0.0
      %3955 = vmatpush2.msra.mxu0 0.0
      %3956 = vmatprep.subr.mxu0 0.0
      %3957 = vmatpush2.msra.mxu0 0.0
      %3958 = vmatprep.subr.mxu0 0.0
      %3959 = vmatpush2.msra.mxu0 0.0
      %3960 = vmatprep.subr.mxu0 0.0
      %3961 = vmatpush2.msra.mxu0 0.0
      %3962 = vmatprep.subr.mxu0 0.0
      %3963 = vmatpush2.msra.mxu0 0.0
      %3964 = vmatprep.subr.mxu0 0.0
      %3965 = vmatpush2.msra.mxu0 0.0
      %3966 = vmatprep.subr.mxu0 0.0
      %3967 = vmatpush2.msra.mxu0 0.0
      %3968 = vmatprep.subr.mxu0 0.0
      %3969 = vmatpush2.msra.mxu0 0.0
      %3970 = vmatprep.subr.mxu0 0.0
      %3971 = vmatpush2.msra.mxu0 0.0
      %3972 = vmatprep.subr.mxu0 0.0
      %3973 = vmatpush2.msra.mxu0 0.0
      %3974 = vmatprep.subr.mxu0 0.0
      %3975 = vmatpush2.msra.mxu0 0.0
      %3976 = vmatprep.subr.mxu0 0.0
      %3977 = vmatpush2.msra.mxu0 0.0
      %3978 = vmatprep.subr.mxu0 0.0
      %3979 = vmatpush2.msra.mxu0 0.0
      %3980 = vmatprep.subr.mxu0 0.0
      %3981 = vmatpush2.msra.mxu0 0.0
      %3982 = vmatprep.subr.mxu0 0.0
      %3983 = vmatpush2.msra.mxu0 0.0
      %3984 = vmatprep.mubr.f32.mxu0 0.0
      %3985 = vmatmul.mubr.f32.gmra.mxu0 %v3918
      %v3986 = vpop.f32.mrf.mxu0
      %v3987 = vadd.f32 0.0, %v3986
      %v3988 = vpop.f32.mrf.mxu0
      %v3989 = vadd.f32 0.0, %v3988
      %3990 = vdwg.mxu0
      %v3991 = vadd.f32 %v3913, %v3987
      %v3992 = vadd.f32 %v3914, %v3989
      %v3993 = vld [vmem:[%s8] sm:$0xff]
      %3995 = vset.pattern.permute.xlu0 0
      %3996 = vperm.xlu0 %3995, %v3993
      %v3997 = vpop.permute.xlu0 %3996
      %v3999 = vadd.f32 %v3991, %v3997
      %v4000 = vadd.f32 %v3992, %v3997
      %4001 = vst [vmem:[%s383] sm:$0xff] %v3999
      %4002 = vst [vmem:[%s383 + $0x8] sm:$0xff] %v4000
      %p4003 = scmp.lt.s32.totalorder %s20, 1
      %s4004 = scalar_select %p4003, %s20, 1
      %s4005 = smul.addr %s4004, 2
      %s4006 = smul.addr %s4005, 8
      %s4007 = scalar_lea.vmem %s9, %s4006
      // Predicated region
      $region57: #{cond_msf_block.1} parent=55 // pred_check
        %p4008 = pneg %p247
      $region58: #{cond_msf_block.1} parent=55 // pred_check_branch
        %4010 = sbr.rel (%p4008) target = $region60
      $region59: #{cond_msf_block.1} parent=55 // pred_region
        _
      $region60: #{cond_msf_block.1} parent=55 // pred_fallthru
        _
    $region56: #{cond_msf_block.1} parent=5 // pred_fallthru
      _
    %p4011 = scmp.le.s32.totalorder 2, %s15
    // Predicated region
    $region61: #{cond_msf_block.1} parent=5 // pred_check
      %p4012 = pneg %p4011
    $region62: #{cond_msf_block.1} parent=5 // pred_check_branch
      %4014 = sbr.rel (%p4012) target = $region64
    $region63: #{cond_msf_block.1} parent=5 // pred_region
      %s4015 = ssub.s32 %s15, 2
      // Predicated region
      $region65: #{cond_msf_block.1} parent=63 // pred_check
        %p4016 = pneg %p253
      $region66: #{cond_msf_block.1} parent=63 // pred_check_branch
        %4018 = sbr.rel (%p4016) target = $region68
      $region67: #{cond_msf_block.1} parent=63 // pred_region
        %p4019 = scmp.lt.s32.totalorder %s21, 1
        %s4020 = scalar_select %p4019, %s21, 1
        %s4021 = smul.addr %s4020, 2
        %s4022 = smul.addr %s4021, 8
        %s4023 = scalar_lea.vmem %s9, %s4022
      $region68: #{cond_msf_block.1} parent=63 // pred_fallthru
        _
    $region64: #{cond_msf_block.1} parent=5 // pred_fallthru
      _
  $region6: #{cond_msf_block.1} parent=0 // loop_footer
    %s19 = sadd.s32 1, %s15
  $region7: #{cond_msf_block.1} parent=0 // loop_footer_branch
    %14 = sbr.rel target = $region3
  $region8: #{cond_msf_block.1} parent=0 // loop_exit
    _

</llo_original>
